<compile_context>
chip_gen: v6e
topology: v6e:2x2x1
jax: 0.10.0
libtpu: 0.0.40
codegen_flags: <defaults>
</compile_context>

<pallas_src>
import functools

import jax
import jax.numpy as jnp
from jax.experimental import pallas as pl
from jax.experimental.pallas import tpu as pltpu


def _dehaze_block_kernel(x_ref,             # (1, C, HW)   input image plane
                         c1w_ref, c1b_ref,  # (k*k, C, C), (C, 1)   conv1
                         c2w_ref, c2b_ref,  # (k*k, C, C), (C, 1)   conv2
                         w1c_ref, b1c_ref,  # (C8, C), (C8, 1)      CA squeeze
                         w2c_ref, b2c_ref,  # (C, C8), (C, 1)       CA excite
                         w1p_ref, b1p_ref,  # (C8, C), (C8, 1)      PA squeeze
                         w2p_ref,           # (C8, 1)               PA project
                         b2p_ref,           # (1, 1) scalar, SMEM
                         o_ref,             # (1, C, HW)   output plane
                         pad_ref,           # VMEM scratch (C, HW + 2*PAD)
                         *, H, W, k, PAD):
    HW = H * W
    r = k // 2
    f32 = jnp.float32

    x = x_ref[0].astype(f32)                                   # (C, HW)

    # w-coordinate of each flattened pixel.  Horizontal out-of-image taps wrap
    # into the neighbouring row of the flat layout, so they are masked; the
    # vertical halo is handled by the zero padding of the scratch buffer.
    ww = jax.lax.broadcasted_iota(jnp.int32, (1, HW), 1) % W
    col_mask = {dw: (ww + dw >= 0) & (ww + dw < W)
                for dw in range(-r, r + 1) if dw != 0}

    # Zero only the halo, once per grid step; conv_kxk rewrites the centre.
    if PAD:
        pad_ref[:, :PAD] = jnp.zeros((pad_ref.shape[0], PAD), f32)
        pad_ref[:, PAD + HW:] = jnp.zeros((pad_ref.shape[0], PAD), f32)

    def conv_kxk(inp, taps_ref, bias_ref):
        """'same' k x k conv of inp (Cin, HW) -> (Cout, HW) in flat pixel layout."""
        if PAD:
            pad_ref[:, PAD:PAD + HW] = inp                     # lane-aligned store
        acc = jnp.zeros((taps_ref.shape[1], HW), f32)
        for t in range(k * k):
            dh, dw = t // k - r, t % k - r
            if dh == 0 and dw == 0:
                shifted = inp                                  # centre tap: no copy
            else:
                s = PAD + dh * W + dw                          # static offset
                shifted = pad_ref[:, s:s + HW]                 # (Cin, HW)
                if dw != 0:
                    shifted = jnp.where(col_mask[dw], shifted, 0.0)
            acc = acc + jnp.dot(taps_ref[t], shifted,
                                preferred_element_type=f32)    # MXU, N = HW (lane-dense)
        return acc + bias_ref[...]

    # conv1 -> ReLU -> + x   (residual equals the conv input: no extra HBM read)
    r2 = jnp.maximum(conv_kxk(x, c1w_ref, c1b_ref), 0.0) + x
    # conv2
    r3 = conv_kxk(r2, c2w_ref, c2b_ref)

    # ---- CALayer: global average pool + tiny per-image MLP (once per block) --
    pooled = jnp.sum(r3, axis=1, keepdims=True) * (1.0 / HW)   # (C, 1)
    a = jnp.maximum(
        jnp.dot(w1c_ref[...], pooled, preferred_element_type=f32) + b1c_ref[...],
        0.0)                                                   # (C8, 1)
    y_ca = jax.nn.sigmoid(
        jnp.dot(w2c_ref[...], a, preferred_element_type=f32) + b2c_ref[...])
    r4 = r3 * y_ca                                             # (C, HW)

    # ---- PALayer: per-pixel attention ----------------------------------------
    h = jnp.maximum(
        jnp.dot(w1p_ref[...], r4, preferred_element_type=f32) + b1p_ref[...],
        0.0)                                                   # (C8, HW)
    # Output-width-1 1x1 conv: VPU multiply + sublane reduce (no degenerate MXU).
    y_pa = jax.nn.sigmoid(
        jnp.sum(h * w2p_ref[...], axis=0, keepdims=True) + b2p_ref[0, 0])  # (1, HW)

    o_ref[0] = (r4 * y_pa + x).astype(o_ref.dtype)


def dehaze_block(x, conv1_w, conv1_b, conv2_w, conv2_b,
                 ca_w1, ca_b1, ca_w2, ca_b2,
                 pa_w1, pa_b1, pa_w2, pa_b2):
    """DehazeBlock forward.

    x: (N, C, H, W).  conv*_w: (C, C, k, k) torch OIHW layout, conv*_b: (C,).
    ca_w1: (C//8, C), ca_b1: (C//8,), ca_w2: (C, C//8), ca_b2: (C,).
    pa_w1: (C//8, C), pa_b1: (C//8,), pa_w2: (C//8,), pa_b2: (1,).
    """
    N, C, H, W = x.shape
    k = conv1_w.shape[-1]
    r = k // 2
    C8 = ca_w1.shape[0]
    HW = H * W
    # Halo for the flattened-pixel conv; 128-aligned so the scratch store of
    # the image centre stays lane-aligned.
    PAD = 0 if r == 0 else -(-(r * (W + 1)) // 128) * 128

    f32 = jnp.float32
    # (Cout, Cin, kh, kw) -> per-tap (k*k, Cout, Cin) matrices, tap t = kh*k + kw.
    taps1 = jnp.transpose(conv1_w, (2, 3, 0, 1)).reshape(k * k, C, C).astype(f32)
    taps2 = jnp.transpose(conv2_w, (2, 3, 0, 1)).reshape(k * k, C, C).astype(f32)

    x_flat = x.reshape(N, C, HW)          # NCHW -> (N, C, H*W): free reshape

    kernel = functools.partial(_dehaze_block_kernel, H=H, W=W, k=k, PAD=PAD)
    full2d = lambda n: (0, 0)

    out = pl.pallas_call(
        kernel,
        out_shape=jax.ShapeDtypeStruct((N, C, HW), x.dtype),
        grid_spec=pltpu.PrefetchScalarGridSpec(
            num_scalar_prefetch=0,
            grid=(N,),                                         # >= 2 parallel blocks
            in_specs=[
                pl.BlockSpec((1, C, HW), lambda n: (n, 0, 0)),      # x plane
                pl.BlockSpec((k * k, C, C), lambda n: (0, 0, 0)),   # conv1 taps
                pl.BlockSpec((C, 1), full2d),                       # conv1 bias
                pl.BlockSpec((k * k, C, C), lambda n: (0, 0, 0)),   # conv2 taps
                pl.BlockSpec((C, 1), full2d),                       # conv2 bias
                pl.BlockSpec((C8, C), full2d),                      # CA w1
                pl.BlockSpec((C8, 1), full2d),                      # CA b1
                pl.BlockSpec((C, C8), full2d),                      # CA w2
                pl.BlockSpec((C, 1), full2d),                       # CA b2
                pl.BlockSpec((C8, C), full2d),                      # PA w1
                pl.BlockSpec((C8, 1), full2d),                      # PA b1
                pl.BlockSpec((C8, 1), full2d),                      # PA w2
                pl.BlockSpec(memory_space=pltpu.MemorySpace.SMEM),  # PA b2 scalar
            ],
            out_specs=pl.BlockSpec((1, C, HW), lambda n: (n, 0, 0)),
            scratch_shapes=[pltpu.VMEM((C, HW + 2 * PAD), jnp.float32)],
        ),
        compiler_params=pltpu.CompilerParams(
            dimension_semantics=("parallel",)),
    )(x_flat,
      taps1, conv1_b.reshape(C, 1).astype(f32),
      taps2, conv2_b.reshape(C, 1).astype(f32),
      ca_w1.astype(f32), ca_b1.reshape(C8, 1).astype(f32),
      ca_w2.astype(f32), ca_b2.reshape(C, 1).astype(f32),
      pa_w1.astype(f32), pa_b1.reshape(C8, 1).astype(f32),
      pa_w2.reshape(C8, 1).astype(f32),
      pa_b2.reshape(1, 1).astype(f32))

    return out.reshape(N, C, H, W)


if __name__ == "__main__":
    N, C, H, W = 2, 16, 16, 16
    k = 3
    C8 = C // 8

    key = jax.random.PRNGKey(0)
    ks = jax.random.split(key, 13)
    sc = 0.08
    x       = jax.random.normal(ks[0], (N, C, H, W), dtype=jnp.float32)
    conv1_w = jax.random.normal(ks[1], (C, C, k, k), jnp.float32) * sc
    conv1_b = jax.random.normal(ks[2], (C,), jnp.float32) * sc
    conv2_w = jax.random.normal(ks[3], (C, C, k, k), jnp.float32) * sc
    conv2_b = jax.random.normal(ks[4], (C,), jnp.float32) * sc
    ca_w1   = jax.random.normal(ks[5], (C8, C), jnp.float32) * sc
    ca_b1   = jax.random.normal(ks[6], (C8,), jnp.float32) * sc
    ca_w2   = jax.random.normal(ks[7], (C, C8), jnp.float32) * sc
    ca_b2   = jax.random.normal(ks[8], (C,), jnp.float32) * sc
    pa_w1   = jax.random.normal(ks[9], (C8, C), jnp.float32) * sc
    pa_b1   = jax.random.normal(ks[10], (C8,), jnp.float32) * sc
    pa_w2   = jax.random.normal(ks[11], (C8,), jnp.float32) * sc
    pa_b2   = jax.random.normal(ks[12], (1,), jnp.float32) * sc

    out = dehaze_block(x, conv1_w, conv1_b, conv2_w, conv2_b,
                       ca_w1, ca_b1, ca_w2, ca_b2,
                       pa_w1, pa_b1, pa_w2, pa_b2)
    out = jax.block_until_ready(out)

    # ---- pure-JAX reference of the PyTorch forward ---------------------------
    P = jax.lax.Precision.HIGHEST

    def conv2d(z, w, b):
        y = jax.lax.conv_general_dilated(
            z, w, window_strides=(1, 1),
            padding=[(k // 2, k // 2)] * 2,
            dimension_numbers=("NCHW", "OIHW", "NCHW"),
            precision=P)
        return y + b.reshape(1, -1, 1, 1)

    r2 = jnp.maximum(conv2d(x, conv1_w, conv1_b), 0.0) + x
    r3 = conv2d(r2, conv2_w, conv2_b)
    pooled = jnp.mean(r3, axis=(2, 3))                                      # (N, C)
    a = jnp.maximum(jnp.einsum("nc,dc->nd", pooled, ca_w1, precision=P) + ca_b1, 0.0)
    y_ca = jax.nn.sigmoid(jnp.einsum("nd,cd->nc", a, ca_w2, precision=P) + ca_b2)
    r4 = r3 * y_ca[:, :, None, None]
    hp = jnp.maximum(jnp.einsum("nchw,dc->ndhw", r4, pa_w1, precision=P)
                     + pa_b1[None, :, None, None], 0.0)
    y_pa = jax.nn.sigmoid(jnp.einsum("ndhw,d->nhw", hp, pa_w2, precision=P) + pa_b2[0])
    ref = r4 * y_pa[:, None, :, :] + x

    err = float(jnp.max(jnp.abs(out - ref)))
    # Tolerance covers MXU f32 multi-pass rounding differences vs. XLA's conv.
    assert jnp.allclose(out, ref, atol=5e-3, rtol=5e-3), (
        f"mismatch vs reference (max abs err {err})")
    print("KERNEL_OK")
</pallas_src>

<mosaic_0001>
module attributes {stable_mosaic.version = 11 : i64} {
  func.func @_dehaze_block_kernel(%arg0: i32, %arg1: memref<1x16x256xf32, #tpu.memory_space<vmem>>, %arg2: memref<9x16x16xf32, #tpu.memory_space<vmem>>, %arg3: memref<16x1xf32, #tpu.memory_space<vmem>>, %arg4: memref<9x16x16xf32, #tpu.memory_space<vmem>>, %arg5: memref<16x1xf32, #tpu.memory_space<vmem>>, %arg6: memref<2x16xf32, #tpu.memory_space<vmem>>, %arg7: memref<2x1xf32, #tpu.memory_space<vmem>>, %arg8: memref<16x2xf32, #tpu.memory_space<vmem>>, %arg9: memref<16x1xf32, #tpu.memory_space<vmem>>, %arg10: memref<2x16xf32, #tpu.memory_space<vmem>>, %arg11: memref<2x1xf32, #tpu.memory_space<vmem>>, %arg12: memref<2x1xf32, #tpu.memory_space<vmem>>, %arg13: memref<1x1xf32, #tpu.memory_space<smem>>, %arg14: memref<1x16x256xf32, #tpu.memory_space<vmem>>, %arg15: memref<16x512xf32, #tpu.memory_space<vmem>>) attributes {dimension_semantics = [#tpu.dimension_semantics<parallel>], iteration_bounds = array<i64: 2>, scalar_prefetch = 0 : i64, scratch_operands = 1 : i64, tpu.core_type = #tpu.core_type<tc>, window_params = [{transform_indices = @transform_0, window_bounds = array<i64: 1, 16, 256>}, {pipeline_mode = #tpu.pipeline_mode<synchronous>, transform_indices = @transform_1, window_bounds = array<i64: 9, 16, 16>}, {pipeline_mode = #tpu.pipeline_mode<synchronous>, transform_indices = @transform_2, window_bounds = array<i64: 16, 1>}, {pipeline_mode = #tpu.pipeline_mode<synchronous>, transform_indices = @transform_3, window_bounds = array<i64: 9, 16, 16>}, {pipeline_mode = #tpu.pipeline_mode<synchronous>, transform_indices = @transform_4, window_bounds = array<i64: 16, 1>}, {pipeline_mode = #tpu.pipeline_mode<synchronous>, transform_indices = @transform_5, window_bounds = array<i64: 2, 16>}, {pipeline_mode = #tpu.pipeline_mode<synchronous>, transform_indices = @transform_6, window_bounds = array<i64: 2, 1>}, {pipeline_mode = #tpu.pipeline_mode<synchronous>, transform_indices = @transform_7, window_bounds = array<i64: 16, 2>}, {pipeline_mode = #tpu.pipeline_mode<synchronous>, transform_indices = @transform_8, window_bounds = array<i64: 16, 1>}, {pipeline_mode = #tpu.pipeline_mode<synchronous>, transform_indices = @transform_9, window_bounds = array<i64: 2, 16>}, {pipeline_mode = #tpu.pipeline_mode<synchronous>, transform_indices = @transform_10, window_bounds = array<i64: 2, 1>}, {pipeline_mode = #tpu.pipeline_mode<synchronous>, transform_indices = @transform_11, window_bounds = array<i64: 2, 1>}, {transform_indices = @transform_12, window_bounds = array<i64: 1, 1>}, {transform_indices = @transform_13, window_bounds = array<i64: 1, 16, 256>}]} {
    %c0 = arith.constant 0 : index
    %c0_0 = arith.constant 0 : index
    %c0_1 = arith.constant 0 : index
    %0 = vector.load %arg1[%c0, %c0_0, %c0_1] : memref<1x16x256xf32, #tpu.memory_space<vmem>>, vector<1x16x256xf32>
    %1 = vector.shape_cast %0 : vector<1x16x256xf32> to vector<16x256xf32>
    %2 = tpu.iota {dimensions = array<i32: 1>} : vector<1x256xi32>
    %c16_i32 = arith.constant 16 : i32
    %c0_i32 = arith.constant 0 : i32
    %3 = arith.cmpi eq, %c16_i32, %c0_i32 : i32
    %c1_i32 = arith.constant 1 : i32
    %4 = arith.select %3, %c1_i32, %c16_i32 : i32
    %5 = vector.broadcast %4 : i32 to vector<1x256xi32>
    %6 = arith.remsi %2, %5 : vector<1x256xi32>
    %c0_i32_2 = arith.constant 0 : i32
    %7 = vector.broadcast %c0_i32_2 : i32 to vector<1x256xi32>
    %8 = arith.cmpi ne, %6, %7 : vector<1x256xi32>
    %c0_i32_3 = arith.constant 0 : i32
    %9 = vector.broadcast %c0_i32_3 : i32 to vector<1x256xi32>
    %10 = arith.cmpi slt, %6, %9 : vector<1x256xi32>
    %c0_i32_4 = arith.constant 0 : i32
    %11 = arith.cmpi slt, %4, %c0_i32_4 : i32
    %12 = vector.broadcast %11 : i1 to vector<1x256xi1>
    %13 = vector.broadcast %12 : vector<1x256xi1> to vector<1x256xi1>
    %14 = arith.xori %10, %13 : vector<1x256xi1>
    %15 = arith.andi %14, %8 : vector<1x256xi1>
    %16 = vector.broadcast %4 : i32 to vector<1x256xi32>
    %17 = arith.addi %6, %16 : vector<1x256xi32>
    %18 = arith.select %15, %17, %6 : vector<1x256xi1>, vector<1x256xi32>
    %c-1_i32 = arith.constant -1 : i32
    %19 = vector.broadcast %c-1_i32 : i32 to vector<1x256xi32>
    %20 = arith.addi %18, %19 : vector<1x256xi32>
    %c0_i32_5 = arith.constant 0 : i32
    %21 = vector.broadcast %c0_i32_5 : i32 to vector<1x256xi32>
    %22 = arith.cmpi sge, %20, %21 : vector<1x256xi32>
    %c-1_i32_6 = arith.constant -1 : i32
    %23 = vector.broadcast %c-1_i32_6 : i32 to vector<1x256xi32>
    %24 = arith.addi %18, %23 : vector<1x256xi32>
    %c16_i32_7 = arith.constant 16 : i32
    %25 = vector.broadcast %c16_i32_7 : i32 to vector<1x256xi32>
    %26 = arith.cmpi slt, %24, %25 : vector<1x256xi32>
    %27 = arith.andi %22, %26 : vector<1x256xi1>
    %c1_i32_8 = arith.constant 1 : i32
    %28 = vector.broadcast %c1_i32_8 : i32 to vector<1x256xi32>
    %29 = arith.addi %18, %28 : vector<1x256xi32>
    %c0_i32_9 = arith.constant 0 : i32
    %30 = vector.broadcast %c0_i32_9 : i32 to vector<1x256xi32>
    %31 = arith.cmpi sge, %29, %30 : vector<1x256xi32>
    %c1_i32_10 = arith.constant 1 : i32
    %32 = vector.broadcast %c1_i32_10 : i32 to vector<1x256xi32>
    %33 = arith.addi %18, %32 : vector<1x256xi32>
    %c16_i32_11 = arith.constant 16 : i32
    %34 = vector.broadcast %c16_i32_11 : i32 to vector<1x256xi32>
    %35 = arith.cmpi slt, %33, %34 : vector<1x256xi32>
    %36 = arith.andi %31, %35 : vector<1x256xi1>
    %cst = arith.constant 0.000000e+00 : f32
    %37 = vector.broadcast %cst : f32 to vector<16x128xf32>
    %c0_12 = arith.constant 0 : index
    %c0_13 = arith.constant 0 : index
    %38 = vector.load %arg15[%c0_12, %c0_13] : memref<16x512xf32, #tpu.memory_space<vmem>>, vector<16x128xf32>
    tpu.vector_store %arg15[%c0_12, %c0_13], %37 {strides = array<i32>} : memref<16x512xf32, #tpu.memory_space<vmem>>, vector<16x128xf32>,
    %cst_14 = arith.constant 0.000000e+00 : f32
    %39 = vector.broadcast %cst_14 : f32 to vector<16x128xf32>
    %c0_15 = arith.constant 0 : index
    %c384 = arith.constant 384 : index
    %40 = vector.load %arg15[%c0_15, %c384] : memref<16x512xf32, #tpu.memory_space<vmem>>, vector<16x128xf32>
    tpu.vector_store %arg15[%c0_15, %c384], %39 {strides = array<i32>} : memref<16x512xf32, #tpu.memory_space<vmem>>, vector<16x128xf32>,
    %c0_16 = arith.constant 0 : index
    %c128 = arith.constant 128 : index
    %41 = vector.load %arg15[%c0_16, %c128] : memref<16x512xf32, #tpu.memory_space<vmem>>, vector<16x256xf32>
    tpu.vector_store %arg15[%c0_16, %c128], %1 {strides = array<i32>} : memref<16x512xf32, #tpu.memory_space<vmem>>, vector<16x256xf32>,
    %cst_17 = arith.constant 0.000000e+00 : f32
    %42 = vector.broadcast %cst_17 : f32 to vector<16x256xf32>
    %c0_18 = arith.constant 0 : index
    %c111 = arith.constant 111 : index
    %43 = vector.load %arg15[%c0_18, %c111] : memref<16x512xf32, #tpu.memory_space<vmem>>, vector<16x256xf32>
    %cst_19 = arith.constant 0.000000e+00 : f32
    %44 = vector.shape_cast %27 : vector<1x256xi1> to vector<1x256xi1>
    %45 = vector.broadcast %44 : vector<1x256xi1> to vector<16x256xi1>
    %46 = vector.broadcast %cst_19 : f32 to vector<16x256xf32>
    %47 = arith.select %45, %43, %46 : vector<16x256xi1>, vector<16x256xf32>
    %c0_20 = arith.constant 0 : index
    %c0_21 = arith.constant 0 : index
    %c0_22 = arith.constant 0 : index
    %48 = vector.load %arg2[%c0_20, %c0_21, %c0_22] : memref<9x16x16xf32, #tpu.memory_space<vmem>>, vector<1x16x16xf32>
    %49 = vector.shape_cast %48 : vector<1x16x16xf32> to vector<16x16xf32>
    %cst_23 = arith.constant dense<0.000000e+00> : vector<16x256xf32>
    %50 = tpu.matmul %49, %47, %cst_23 {dimension_numbers = #tpu.dot_dimension_numbers<[1], [0], [0], [1], [0, 0, 1, 1], [], []>} : vector<16x16xf32>, vector<16x256xf32>, vector<16x256xf32> -> vector<16x256xf32>
    %51 = arith.addf %42, %50 : vector<16x256xf32>
    %c0_24 = arith.constant 0 : index
    %c112 = arith.constant 112 : index
    %52 = vector.load %arg15[%c0_24, %c112] : memref<16x512xf32, #tpu.memory_space<vmem>>, vector<16x256xf32>
    %c1 = arith.constant 1 : index
    %c0_25 = arith.constant 0 : index
    %c0_26 = arith.constant 0 : index
    %53 = vector.load %arg2[%c1, %c0_25, %c0_26] : memref<9x16x16xf32, #tpu.memory_space<vmem>>, vector<1x16x16xf32>
    %54 = vector.shape_cast %53 : vector<1x16x16xf32> to vector<16x16xf32>
    %cst_27 = arith.constant dense<0.000000e+00> : vector<16x256xf32>
    %55 = tpu.matmul %54, %52, %cst_27 {dimension_numbers = #tpu.dot_dimension_numbers<[1], [0], [0], [1], [0, 0, 1, 1], [], []>} : vector<16x16xf32>, vector<16x256xf32>, vector<16x256xf32> -> vector<16x256xf32>
    %56 = arith.addf %51, %55 : vector<16x256xf32>
    %c0_28 = arith.constant 0 : index
    %c113 = arith.constant 113 : index
    %57 = vector.load %arg15[%c0_28, %c113] : memref<16x512xf32, #tpu.memory_space<vmem>>, vector<16x256xf32>
    %cst_29 = arith.constant 0.000000e+00 : f32
    %58 = vector.shape_cast %36 : vector<1x256xi1> to vector<1x256xi1>
    %59 = vector.broadcast %58 : vector<1x256xi1> to vector<16x256xi1>
    %60 = vector.broadcast %cst_29 : f32 to vector<16x256xf32>
    %61 = arith.select %59, %57, %60 : vector<16x256xi1>, vector<16x256xf32>
    %c2 = arith.constant 2 : index
    %c0_30 = arith.constant 0 : index
    %c0_31 = arith.constant 0 : index
    %62 = vector.load %arg2[%c2, %c0_30, %c0_31] : memref<9x16x16xf32, #tpu.memory_space<vmem>>, vector<1x16x16xf32>
    %63 = vector.shape_cast %62 : vector<1x16x16xf32> to vector<16x16xf32>
    %cst_32 = arith.constant dense<0.000000e+00> : vector<16x256xf32>
    %64 = tpu.matmul %63, %61, %cst_32 {dimension_numbers = #tpu.dot_dimension_numbers<[1], [0], [0], [1], [0, 0, 1, 1], [], []>} : vector<16x16xf32>, vector<16x256xf32>, vector<16x256xf32> -> vector<16x256xf32>
    %65 = arith.addf %56, %64 : vector<16x256xf32>
    %c0_33 = arith.constant 0 : index
    %c127 = arith.constant 127 : index
    %66 = vector.load %arg15[%c0_33, %c127] : memref<16x512xf32, #tpu.memory_space<vmem>>, vector<16x256xf32>
    %cst_34 = arith.constant 0.000000e+00 : f32
    %67 = vector.shape_cast %27 : vector<1x256xi1> to vector<1x256xi1>
    %68 = vector.broadcast %67 : vector<1x256xi1> to vector<16x256xi1>
    %69 = vector.broadcast %cst_34 : f32 to vector<16x256xf32>
    %70 = arith.select %68, %66, %69 : vector<16x256xi1>, vector<16x256xf32>
    %c3 = arith.constant 3 : index
    %c0_35 = arith.constant 0 : index
    %c0_36 = arith.constant 0 : index
    %71 = vector.load %arg2[%c3, %c0_35, %c0_36] : memref<9x16x16xf32, #tpu.memory_space<vmem>>, vector<1x16x16xf32>
    %72 = vector.shape_cast %71 : vector<1x16x16xf32> to vector<16x16xf32>
    %cst_37 = arith.constant dense<0.000000e+00> : vector<16x256xf32>
    %73 = tpu.matmul %72, %70, %cst_37 {dimension_numbers = #tpu.dot_dimension_numbers<[1], [0], [0], [1], [0, 0, 1, 1], [], []>} : vector<16x16xf32>, vector<16x256xf32>, vector<16x256xf32> -> vector<16x256xf32>
    %74 = arith.addf %65, %73 : vector<16x256xf32>
    %c4 = arith.constant 4 : index
    %c0_38 = arith.constant 0 : index
    %c0_39 = arith.constant 0 : index
    %75 = vector.load %arg2[%c4, %c0_38, %c0_39] : memref<9x16x16xf32, #tpu.memory_space<vmem>>, vector<1x16x16xf32>
    %76 = vector.shape_cast %75 : vector<1x16x16xf32> to vector<16x16xf32>
    %cst_40 = arith.constant dense<0.000000e+00> : vector<16x256xf32>
    %77 = tpu.matmul %76, %1, %cst_40 {dimension_numbers = #tpu.dot_dimension_numbers<[1], [0], [0], [1], [0, 0, 1, 1], [], []>} : vector<16x16xf32>, vector<16x256xf32>, vector<16x256xf32> -> vector<16x256xf32>
    %78 = arith.addf %74, %77 : vector<16x256xf32>
    %c0_41 = arith.constant 0 : index
    %c129 = arith.constant 129 : index
    %79 = vector.load %arg15[%c0_41, %c129] : memref<16x512xf32, #tpu.memory_space<vmem>>, vector<16x256xf32>
    %cst_42 = arith.constant 0.000000e+00 : f32
    %80 = vector.shape_cast %36 : vector<1x256xi1> to vector<1x256xi1>
    %81 = vector.broadcast %80 : vector<1x256xi1> to vector<16x256xi1>
    %82 = vector.broadcast %cst_42 : f32 to vector<16x256xf32>
    %83 = arith.select %81, %79, %82 : vector<16x256xi1>, vector<16x256xf32>
    %c5 = arith.constant 5 : index
    %c0_43 = arith.constant 0 : index
    %c0_44 = arith.constant 0 : index
    %84 = vector.load %arg2[%c5, %c0_43, %c0_44] : memref<9x16x16xf32, #tpu.memory_space<vmem>>, vector<1x16x16xf32>
    %85 = vector.shape_cast %84 : vector<1x16x16xf32> to vector<16x16xf32>
    %cst_45 = arith.constant dense<0.000000e+00> : vector<16x256xf32>
    %86 = tpu.matmul %85, %83, %cst_45 {dimension_numbers = #tpu.dot_dimension_numbers<[1], [0], [0], [1], [0, 0, 1, 1], [], []>} : vector<16x16xf32>, vector<16x256xf32>, vector<16x256xf32> -> vector<16x256xf32>
    %87 = arith.addf %78, %86 : vector<16x256xf32>
    %c0_46 = arith.constant 0 : index
    %c143 = arith.constant 143 : index
    %88 = vector.load %arg15[%c0_46, %c143] : memref<16x512xf32, #tpu.memory_space<vmem>>, vector<16x256xf32>
    %cst_47 = arith.constant 0.000000e+00 : f32
    %89 = vector.shape_cast %27 : vector<1x256xi1> to vector<1x256xi1>
    %90 = vector.broadcast %89 : vector<1x256xi1> to vector<16x256xi1>
    %91 = vector.broadcast %cst_47 : f32 to vector<16x256xf32>
    %92 = arith.select %90, %88, %91 : vector<16x256xi1>, vector<16x256xf32>
    %c6 = arith.constant 6 : index
    %c0_48 = arith.constant 0 : index
    %c0_49 = arith.constant 0 : index
    %93 = vector.load %arg2[%c6, %c0_48, %c0_49] : memref<9x16x16xf32, #tpu.memory_space<vmem>>, vector<1x16x16xf32>
    %94 = vector.shape_cast %93 : vector<1x16x16xf32> to vector<16x16xf32>
    %cst_50 = arith.constant dense<0.000000e+00> : vector<16x256xf32>
    %95 = tpu.matmul %94, %92, %cst_50 {dimension_numbers = #tpu.dot_dimension_numbers<[1], [0], [0], [1], [0, 0, 1, 1], [], []>} : vector<16x16xf32>, vector<16x256xf32>, vector<16x256xf32> -> vector<16x256xf32>
    %96 = arith.addf %87, %95 : vector<16x256xf32>
    %c0_51 = arith.constant 0 : index
    %c144 = arith.constant 144 : index
    %97 = vector.load %arg15[%c0_51, %c144] : memref<16x512xf32, #tpu.memory_space<vmem>>, vector<16x256xf32>
    %c7 = arith.constant 7 : index
    %c0_52 = arith.constant 0 : index
    %c0_53 = arith.constant 0 : index
    %98 = vector.load %arg2[%c7, %c0_52, %c0_53] : memref<9x16x16xf32, #tpu.memory_space<vmem>>, vector<1x16x16xf32>
    %99 = vector.shape_cast %98 : vector<1x16x16xf32> to vector<16x16xf32>
    %cst_54 = arith.constant dense<0.000000e+00> : vector<16x256xf32>
    %100 = tpu.matmul %99, %97, %cst_54 {dimension_numbers = #tpu.dot_dimension_numbers<[1], [0], [0], [1], [0, 0, 1, 1], [], []>} : vector<16x16xf32>, vector<16x256xf32>, vector<16x256xf32> -> vector<16x256xf32>
    %101 = arith.addf %96, %100 : vector<16x256xf32>
    %c0_55 = arith.constant 0 : index
    %c145 = arith.constant 145 : index
    %102 = vector.load %arg15[%c0_55, %c145] : memref<16x512xf32, #tpu.memory_space<vmem>>, vector<16x256xf32>
    %cst_56 = arith.constant 0.000000e+00 : f32
    %103 = vector.shape_cast %36 : vector<1x256xi1> to vector<1x256xi1>
    %104 = vector.broadcast %103 : vector<1x256xi1> to vector<16x256xi1>
    %105 = vector.broadcast %cst_56 : f32 to vector<16x256xf32>
    %106 = arith.select %104, %102, %105 : vector<16x256xi1>, vector<16x256xf32>
    %c8 = arith.constant 8 : index
    %c0_57 = arith.constant 0 : index
    %c0_58 = arith.constant 0 : index
    %107 = vector.load %arg2[%c8, %c0_57, %c0_58] : memref<9x16x16xf32, #tpu.memory_space<vmem>>, vector<1x16x16xf32>
    %108 = vector.shape_cast %107 : vector<1x16x16xf32> to vector<16x16xf32>
    %cst_59 = arith.constant dense<0.000000e+00> : vector<16x256xf32>
    %109 = tpu.matmul %108, %106, %cst_59 {dimension_numbers = #tpu.dot_dimension_numbers<[1], [0], [0], [1], [0, 0, 1, 1], [], []>} : vector<16x16xf32>, vector<16x256xf32>, vector<16x256xf32> -> vector<16x256xf32>
    %110 = arith.addf %101, %109 : vector<16x256xf32>
    %c0_60 = arith.constant 0 : index
    %c0_61 = arith.constant 0 : index
    %111 = vector.load %arg3[%c0_60, %c0_61] : memref<16x1xf32, #tpu.memory_space<vmem>>, vector<16x1xf32>
    %112 = vector.broadcast %111 : vector<16x1xf32> to vector<16x256xf32>
    %113 = arith.addf %110, %112 : vector<16x256xf32>
    %cst_62 = arith.constant 0.000000e+00 : f32
    %114 = vector.broadcast %cst_62 : f32 to vector<16x256xf32>
    %115 = arith.maximumf %113, %114 : vector<16x256xf32>
    %116 = arith.addf %115, %1 : vector<16x256xf32>
    %c0_63 = arith.constant 0 : index
    %c128_64 = arith.constant 128 : index
    %117 = vector.load %arg15[%c0_63, %c128_64] : memref<16x512xf32, #tpu.memory_space<vmem>>, vector<16x256xf32>
    tpu.vector_store %arg15[%c0_63, %c128_64], %116 {strides = array<i32>} : memref<16x512xf32, #tpu.memory_space<vmem>>, vector<16x256xf32>,
    %cst_65 = arith.constant 0.000000e+00 : f32
    %118 = vector.broadcast %cst_65 : f32 to vector<16x256xf32>
    %c0_66 = arith.constant 0 : index
    %c111_67 = arith.constant 111 : index
    %119 = vector.load %arg15[%c0_66, %c111_67] : memref<16x512xf32, #tpu.memory_space<vmem>>, vector<16x256xf32>
    %cst_68 = arith.constant 0.000000e+00 : f32
    %120 = vector.shape_cast %27 : vector<1x256xi1> to vector<1x256xi1>
    %121 = vector.broadcast %120 : vector<1x256xi1> to vector<16x256xi1>
    %122 = vector.broadcast %cst_68 : f32 to vector<16x256xf32>
    %123 = arith.select %121, %119, %122 : vector<16x256xi1>, vector<16x256xf32>
    %c0_69 = arith.constant 0 : index
    %c0_70 = arith.constant 0 : index
    %c0_71 = arith.constant 0 : index
    %124 = vector.load %arg4[%c0_69, %c0_70, %c0_71] : memref<9x16x16xf32, #tpu.memory_space<vmem>>, vector<1x16x16xf32>
    %125 = vector.shape_cast %124 : vector<1x16x16xf32> to vector<16x16xf32>
    %cst_72 = arith.constant dense<0.000000e+00> : vector<16x256xf32>
    %126 = tpu.matmul %125, %123, %cst_72 {dimension_numbers = #tpu.dot_dimension_numbers<[1], [0], [0], [1], [0, 0, 1, 1], [], []>} : vector<16x16xf32>, vector<16x256xf32>, vector<16x256xf32> -> vector<16x256xf32>
    %127 = arith.addf %118, %126 : vector<16x256xf32>
    %c0_73 = arith.constant 0 : index
    %c112_74 = arith.constant 112 : index
    %128 = vector.load %arg15[%c0_73, %c112_74] : memref<16x512xf32, #tpu.memory_space<vmem>>, vector<16x256xf32>
    %c1_75 = arith.constant 1 : index
    %c0_76 = arith.constant 0 : index
    %c0_77 = arith.constant 0 : index
    %129 = vector.load %arg4[%c1_75, %c0_76, %c0_77] : memref<9x16x16xf32, #tpu.memory_space<vmem>>, vector<1x16x16xf32>
    %130 = vector.shape_cast %129 : vector<1x16x16xf32> to vector<16x16xf32>
    %cst_78 = arith.constant dense<0.000000e+00> : vector<16x256xf32>
    %131 = tpu.matmul %130, %128, %cst_78 {dimension_numbers = #tpu.dot_dimension_numbers<[1], [0], [0], [1], [0, 0, 1, 1], [], []>} : vector<16x16xf32>, vector<16x256xf32>, vector<16x256xf32> -> vector<16x256xf32>
    %132 = arith.addf %127, %131 : vector<16x256xf32>
    %c0_79 = arith.constant 0 : index
    %c113_80 = arith.constant 113 : index
    %133 = vector.load %arg15[%c0_79, %c113_80] : memref<16x512xf32, #tpu.memory_space<vmem>>, vector<16x256xf32>
    %cst_81 = arith.constant 0.000000e+00 : f32
    %134 = vector.shape_cast %36 : vector<1x256xi1> to vector<1x256xi1>
    %135 = vector.broadcast %134 : vector<1x256xi1> to vector<16x256xi1>
    %136 = vector.broadcast %cst_81 : f32 to vector<16x256xf32>
    %137 = arith.select %135, %133, %136 : vector<16x256xi1>, vector<16x256xf32>
    %c2_82 = arith.constant 2 : index
    %c0_83 = arith.constant 0 : index
    %c0_84 = arith.constant 0 : index
    %138 = vector.load %arg4[%c2_82, %c0_83, %c0_84] : memref<9x16x16xf32, #tpu.memory_space<vmem>>, vector<1x16x16xf32>
    %139 = vector.shape_cast %138 : vector<1x16x16xf32> to vector<16x16xf32>
    %cst_85 = arith.constant dense<0.000000e+00> : vector<16x256xf32>
    %140 = tpu.matmul %139, %137, %cst_85 {dimension_numbers = #tpu.dot_dimension_numbers<[1], [0], [0], [1], [0, 0, 1, 1], [], []>} : vector<16x16xf32>, vector<16x256xf32>, vector<16x256xf32> -> vector<16x256xf32>
    %141 = arith.addf %132, %140 : vector<16x256xf32>
    %c0_86 = arith.constant 0 : index
    %c127_87 = arith.constant 127 : index
    %142 = vector.load %arg15[%c0_86, %c127_87] : memref<16x512xf32, #tpu.memory_space<vmem>>, vector<16x256xf32>
    %cst_88 = arith.constant 0.000000e+00 : f32
    %143 = vector.shape_cast %27 : vector<1x256xi1> to vector<1x256xi1>
    %144 = vector.broadcast %143 : vector<1x256xi1> to vector<16x256xi1>
    %145 = vector.broadcast %cst_88 : f32 to vector<16x256xf32>
    %146 = arith.select %144, %142, %145 : vector<16x256xi1>, vector<16x256xf32>
    %c3_89 = arith.constant 3 : index
    %c0_90 = arith.constant 0 : index
    %c0_91 = arith.constant 0 : index
    %147 = vector.load %arg4[%c3_89, %c0_90, %c0_91] : memref<9x16x16xf32, #tpu.memory_space<vmem>>, vector<1x16x16xf32>
    %148 = vector.shape_cast %147 : vector<1x16x16xf32> to vector<16x16xf32>
    %cst_92 = arith.constant dense<0.000000e+00> : vector<16x256xf32>
    %149 = tpu.matmul %148, %146, %cst_92 {dimension_numbers = #tpu.dot_dimension_numbers<[1], [0], [0], [1], [0, 0, 1, 1], [], []>} : vector<16x16xf32>, vector<16x256xf32>, vector<16x256xf32> -> vector<16x256xf32>
    %150 = arith.addf %141, %149 : vector<16x256xf32>
    %c4_93 = arith.constant 4 : index
    %c0_94 = arith.constant 0 : index
    %c0_95 = arith.constant 0 : index
    %151 = vector.load %arg4[%c4_93, %c0_94, %c0_95] : memref<9x16x16xf32, #tpu.memory_space<vmem>>, vector<1x16x16xf32>
    %152 = vector.shape_cast %151 : vector<1x16x16xf32> to vector<16x16xf32>
    %cst_96 = arith.constant dense<0.000000e+00> : vector<16x256xf32>
    %153 = tpu.matmul %152, %116, %cst_96 {dimension_numbers = #tpu.dot_dimension_numbers<[1], [0], [0], [1], [0, 0, 1, 1], [], []>} : vector<16x16xf32>, vector<16x256xf32>, vector<16x256xf32> -> vector<16x256xf32>
    %154 = arith.addf %150, %153 : vector<16x256xf32>
    %c0_97 = arith.constant 0 : index
    %c129_98 = arith.constant 129 : index
    %155 = vector.load %arg15[%c0_97, %c129_98] : memref<16x512xf32, #tpu.memory_space<vmem>>, vector<16x256xf32>
    %cst_99 = arith.constant 0.000000e+00 : f32
    %156 = vector.shape_cast %36 : vector<1x256xi1> to vector<1x256xi1>
    %157 = vector.broadcast %156 : vector<1x256xi1> to vector<16x256xi1>
    %158 = vector.broadcast %cst_99 : f32 to vector<16x256xf32>
    %159 = arith.select %157, %155, %158 : vector<16x256xi1>, vector<16x256xf32>
    %c5_100 = arith.constant 5 : index
    %c0_101 = arith.constant 0 : index
    %c0_102 = arith.constant 0 : index
    %160 = vector.load %arg4[%c5_100, %c0_101, %c0_102] : memref<9x16x16xf32, #tpu.memory_space<vmem>>, vector<1x16x16xf32>
    %161 = vector.shape_cast %160 : vector<1x16x16xf32> to vector<16x16xf32>
    %cst_103 = arith.constant dense<0.000000e+00> : vector<16x256xf32>
    %162 = tpu.matmul %161, %159, %cst_103 {dimension_numbers = #tpu.dot_dimension_numbers<[1], [0], [0], [1], [0, 0, 1, 1], [], []>} : vector<16x16xf32>, vector<16x256xf32>, vector<16x256xf32> -> vector<16x256xf32>
    %163 = arith.addf %154, %162 : vector<16x256xf32>
    %c0_104 = arith.constant 0 : index
    %c143_105 = arith.constant 143 : index
    %164 = vector.load %arg15[%c0_104, %c143_105] : memref<16x512xf32, #tpu.memory_space<vmem>>, vector<16x256xf32>
    %cst_106 = arith.constant 0.000000e+00 : f32
    %165 = vector.shape_cast %27 : vector<1x256xi1> to vector<1x256xi1>
    %166 = vector.broadcast %165 : vector<1x256xi1> to vector<16x256xi1>
    %167 = vector.broadcast %cst_106 : f32 to vector<16x256xf32>
    %168 = arith.select %166, %164, %167 : vector<16x256xi1>, vector<16x256xf32>
    %c6_107 = arith.constant 6 : index
    %c0_108 = arith.constant 0 : index
    %c0_109 = arith.constant 0 : index
    %169 = vector.load %arg4[%c6_107, %c0_108, %c0_109] : memref<9x16x16xf32, #tpu.memory_space<vmem>>, vector<1x16x16xf32>
    %170 = vector.shape_cast %169 : vector<1x16x16xf32> to vector<16x16xf32>
    %cst_110 = arith.constant dense<0.000000e+00> : vector<16x256xf32>
    %171 = tpu.matmul %170, %168, %cst_110 {dimension_numbers = #tpu.dot_dimension_numbers<[1], [0], [0], [1], [0, 0, 1, 1], [], []>} : vector<16x16xf32>, vector<16x256xf32>, vector<16x256xf32> -> vector<16x256xf32>
    %172 = arith.addf %163, %171 : vector<16x256xf32>
    %c0_111 = arith.constant 0 : index
    %c144_112 = arith.constant 144 : index
    %173 = vector.load %arg15[%c0_111, %c144_112] : memref<16x512xf32, #tpu.memory_space<vmem>>, vector<16x256xf32>
    %c7_113 = arith.constant 7 : index
    %c0_114 = arith.constant 0 : index
    %c0_115 = arith.constant 0 : index
    %174 = vector.load %arg4[%c7_113, %c0_114, %c0_115] : memref<9x16x16xf32, #tpu.memory_space<vmem>>, vector<1x16x16xf32>
    %175 = vector.shape_cast %174 : vector<1x16x16xf32> to vector<16x16xf32>
    %cst_116 = arith.constant dense<0.000000e+00> : vector<16x256xf32>
    %176 = tpu.matmul %175, %173, %cst_116 {dimension_numbers = #tpu.dot_dimension_numbers<[1], [0], [0], [1], [0, 0, 1, 1], [], []>} : vector<16x16xf32>, vector<16x256xf32>, vector<16x256xf32> -> vector<16x256xf32>
    %177 = arith.addf %172, %176 : vector<16x256xf32>
    %c0_117 = arith.constant 0 : index
    %c145_118 = arith.constant 145 : index
    %178 = vector.load %arg15[%c0_117, %c145_118] : memref<16x512xf32, #tpu.memory_space<vmem>>, vector<16x256xf32>
    %cst_119 = arith.constant 0.000000e+00 : f32
    %179 = vector.shape_cast %36 : vector<1x256xi1> to vector<1x256xi1>
    %180 = vector.broadcast %179 : vector<1x256xi1> to vector<16x256xi1>
    %181 = vector.broadcast %cst_119 : f32 to vector<16x256xf32>
    %182 = arith.select %180, %178, %181 : vector<16x256xi1>, vector<16x256xf32>
    %c8_120 = arith.constant 8 : index
    %c0_121 = arith.constant 0 : index
    %c0_122 = arith.constant 0 : index
    %183 = vector.load %arg4[%c8_120, %c0_121, %c0_122] : memref<9x16x16xf32, #tpu.memory_space<vmem>>, vector<1x16x16xf32>
    %184 = vector.shape_cast %183 : vector<1x16x16xf32> to vector<16x16xf32>
    %cst_123 = arith.constant dense<0.000000e+00> : vector<16x256xf32>
    %185 = tpu.matmul %184, %182, %cst_123 {dimension_numbers = #tpu.dot_dimension_numbers<[1], [0], [0], [1], [0, 0, 1, 1], [], []>} : vector<16x16xf32>, vector<16x256xf32>, vector<16x256xf32> -> vector<16x256xf32>
    %186 = arith.addf %177, %185 : vector<16x256xf32>
    %c0_124 = arith.constant 0 : index
    %c0_125 = arith.constant 0 : index
    %187 = vector.load %arg5[%c0_124, %c0_125] : memref<16x1xf32, #tpu.memory_space<vmem>>, vector<16x1xf32>
    %188 = vector.broadcast %187 : vector<16x1xf32> to vector<16x256xf32>
    %189 = arith.addf %186, %188 : vector<16x256xf32>
    %cst_126 = arith.constant dense<0.000000e+00> : vector<16xf32>
    %190 = vector.multi_reduction <add>, %189, %cst_126 [1] : vector<16x256xf32> to vector<16xf32>
    %191 = vector.shape_cast %190 : vector<16xf32> to vector<16x1xf32>
    %cst_127 = arith.constant 3.906250e-03 : f32
    %192 = vector.broadcast %cst_127 : f32 to vector<16x1xf32>
    %193 = arith.mulf %191, %192 : vector<16x1xf32>
    %c0_128 = arith.constant 0 : index
    %c0_129 = arith.constant 0 : index
    %194 = vector.load %arg6[%c0_128, %c0_129] : memref<2x16xf32, #tpu.memory_space<vmem>>, vector<2x16xf32>
    %cst_130 = arith.constant dense<0.000000e+00> : vector<2x1xf32>
    %195 = tpu.matmul %194, %193, %cst_130 {dimension_numbers = #tpu.dot_dimension_numbers<[1], [0], [0], [1], [0, 0, 1, 1], [], []>} : vector<2x16xf32>, vector<16x1xf32>, vector<2x1xf32> -> vector<2x1xf32>
    %c0_131 = arith.constant 0 : index
    %c0_132 = arith.constant 0 : index
    %196 = vector.load %arg7[%c0_131, %c0_132] : memref<2x1xf32, #tpu.memory_space<vmem>>, vector<2x1xf32>
    %197 = arith.addf %195, %196 : vector<2x1xf32>
    %cst_133 = arith.constant 0.000000e+00 : f32
    %198 = vector.broadcast %cst_133 : f32 to vector<2x1xf32>
    %199 = arith.maximumf %197, %198 : vector<2x1xf32>
    %c0_134 = arith.constant 0 : index
    %c0_135 = arith.constant 0 : index
    %200 = vector.load %arg8[%c0_134, %c0_135] : memref<16x2xf32, #tpu.memory_space<vmem>>, vector<16x2xf32>
    %cst_136 = arith.constant dense<0.000000e+00> : vector<16x1xf32>
    %201 = tpu.matmul %200, %199, %cst_136 {dimension_numbers = #tpu.dot_dimension_numbers<[1], [0], [0], [1], [0, 0, 1, 1], [], []>} : vector<16x2xf32>, vector<2x1xf32>, vector<16x1xf32> -> vector<16x1xf32>
    %c0_137 = arith.constant 0 : index
    %c0_138 = arith.constant 0 : index
    %202 = vector.load %arg9[%c0_137, %c0_138] : memref<16x1xf32, #tpu.memory_space<vmem>>, vector<16x1xf32>
    %203 = arith.addf %201, %202 : vector<16x1xf32>
    %204 = arith.negf %203 : vector<16x1xf32>
    %205 = math.exp %204 : vector<16x1xf32>
    %cst_139 = arith.constant 1.000000e+00 : f32
    %206 = vector.broadcast %cst_139 : f32 to vector<16x1xf32>
    %207 = arith.addf %206, %205 : vector<16x1xf32>
    %208 = arith.divf %206, %207 : vector<16x1xf32>
    %209 = vector.broadcast %208 : vector<16x1xf32> to vector<16x256xf32>
    %210 = arith.mulf %189, %209 : vector<16x256xf32>
    %c0_140 = arith.constant 0 : index
    %c0_141 = arith.constant 0 : index
    %211 = vector.load %arg10[%c0_140, %c0_141] : memref<2x16xf32, #tpu.memory_space<vmem>>, vector<2x16xf32>
    %cst_142 = arith.constant dense<0.000000e+00> : vector<2x256xf32>
    %212 = tpu.matmul %211, %210, %cst_142 {dimension_numbers = #tpu.dot_dimension_numbers<[1], [0], [0], [1], [0, 0, 1, 1], [], []>} : vector<2x16xf32>, vector<16x256xf32>, vector<2x256xf32> -> vector<2x256xf32>
    %c0_143 = arith.constant 0 : index
    %c0_144 = arith.constant 0 : index
    %213 = vector.load %arg11[%c0_143, %c0_144] : memref<2x1xf32, #tpu.memory_space<vmem>>, vector<2x1xf32>
    %214 = vector.broadcast %213 : vector<2x1xf32> to vector<2x256xf32>
    %215 = arith.addf %212, %214 : vector<2x256xf32>
    %cst_145 = arith.constant 0.000000e+00 : f32
    %216 = vector.broadcast %cst_145 : f32 to vector<2x256xf32>
    %217 = arith.maximumf %215, %216 : vector<2x256xf32>
    %c0_146 = arith.constant 0 : index
    %c0_147 = arith.constant 0 : index
    %218 = vector.load %arg12[%c0_146, %c0_147] : memref<2x1xf32, #tpu.memory_space<vmem>>, vector<2x1xf32>
    %219 = vector.broadcast %218 : vector<2x1xf32> to vector<2x256xf32>
    %220 = arith.mulf %217, %219 : vector<2x256xf32>
    %cst_148 = arith.constant dense<0.000000e+00> : vector<256xf32>
    %221 = vector.multi_reduction <add>, %220, %cst_148 [0] : vector<2x256xf32> to vector<256xf32>
    %222 = vector.shape_cast %221 : vector<256xf32> to vector<1x256xf32>
    %c0_149 = arith.constant 0 : index
    %c0_150 = arith.constant 0 : index
    %223 = memref.load %arg13[%c0_149, %c0_150] : memref<1x1xf32, #tpu.memory_space<smem>>
    %224 = vector.broadcast %223 : f32 to vector<1x256xf32>
    %225 = arith.addf %222, %224 : vector<1x256xf32>
    %226 = arith.negf %225 : vector<1x256xf32>
    %227 = math.exp %226 : vector<1x256xf32>
    %cst_151 = arith.constant 1.000000e+00 : f32
    %228 = vector.broadcast %cst_151 : f32 to vector<1x256xf32>
    %229 = arith.addf %228, %227 : vector<1x256xf32>
    %230 = arith.divf %228, %229 : vector<1x256xf32>
    %231 = vector.broadcast %230 : vector<1x256xf32> to vector<16x256xf32>
    %232 = arith.mulf %210, %231 : vector<16x256xf32>
    %233 = arith.addf %232, %1 : vector<16x256xf32>
    %c0_152 = arith.constant 0 : index
    %c0_153 = arith.constant 0 : index
    %c0_154 = arith.constant 0 : index
    %234 = vector.load %arg14[%c0_152, %c0_153, %c0_154] : memref<1x16x256xf32, #tpu.memory_space<vmem>>, vector<1x16x256xf32>
    %235 = vector.shape_cast %234 : vector<1x16x256xf32> to vector<16x256xf32>
    %236 = vector.shape_cast %233 : vector<16x256xf32> to vector<1x16x256xf32>
    tpu.vector_store %arg14[%c0_152, %c0_153, %c0_154], %236 {strides = array<i32>} : memref<1x16x256xf32, #tpu.memory_space<vmem>>, vector<1x16x256xf32>,
    return
  }
  func.func @transform_0(%arg0: i32) -> (i32, i32, i32) {
    %c0_i32 = arith.constant 0 : i32
    %c0_i32_0 = arith.constant 0 : i32
    %c0_i32_1 = arith.constant 0 : i32
    return %arg0, %c0_i32, %c0_i32_0 : i32, i32, i32
  }
  func.func @transform_1(%arg0: i32) -> (i32, i32, i32) {
    %c0_i32 = arith.constant 0 : i32
    %c0_i32_0 = arith.constant 0 : i32
    %c0_i32_1 = arith.constant 0 : i32
    %c0_i32_2 = arith.constant 0 : i32
    return %c0_i32, %c0_i32_0, %c0_i32_1 : i32, i32, i32
  }
  func.func @transform_2(%arg0: i32) -> (i32, i32) {
    %c0_i32 = arith.constant 0 : i32
    %c0_i32_0 = arith.constant 0 : i32
    %c0_i32_1 = arith.constant 0 : i32
    return %c0_i32, %c0_i32_0 : i32, i32
  }
  func.func @transform_3(%arg0: i32) -> (i32, i32, i32) {
    %c0_i32 = arith.constant 0 : i32
    %c0_i32_0 = arith.constant 0 : i32
    %c0_i32_1 = arith.constant 0 : i32
    %c0_i32_2 = arith.constant 0 : i32
    return %c0_i32, %c0_i32_0, %c0_i32_1 : i32, i32, i32
  }
  func.func @transform_4(%arg0: i32) -> (i32, i32) {
    %c0_i32 = arith.constant 0 : i32
    %c0_i32_0 = arith.constant 0 : i32
    %c0_i32_1 = arith.constant 0 : i32
    return %c0_i32, %c0_i32_0 : i32, i32
  }
  func.func @transform_5(%arg0: i32) -> (i32, i32) {
    %c0_i32 = arith.constant 0 : i32
    %c0_i32_0 = arith.constant 0 : i32
    %c0_i32_1 = arith.constant 0 : i32
    return %c0_i32, %c0_i32_0 : i32, i32
  }
  func.func @transform_6(%arg0: i32) -> (i32, i32) {
    %c0_i32 = arith.constant 0 : i32
    %c0_i32_0 = arith.constant 0 : i32
    %c0_i32_1 = arith.constant 0 : i32
    return %c0_i32, %c0_i32_0 : i32, i32
  }
  func.func @transform_7(%arg0: i32) -> (i32, i32) {
    %c0_i32 = arith.constant 0 : i32
    %c0_i32_0 = arith.constant 0 : i32
    %c0_i32_1 = arith.constant 0 : i32
    return %c0_i32, %c0_i32_0 : i32, i32
  }
  func.func @transform_8(%arg0: i32) -> (i32, i32) {
    %c0_i32 = arith.constant 0 : i32
    %c0_i32_0 = arith.constant 0 : i32
    %c0_i32_1 = arith.constant 0 : i32
    return %c0_i32, %c0_i32_0 : i32, i32
  }
  func.func @transform_9(%arg0: i32) -> (i32, i32) {
    %c0_i32 = arith.constant 0 : i32
    %c0_i32_0 = arith.constant 0 : i32
    %c0_i32_1 = arith.constant 0 : i32
    return %c0_i32, %c0_i32_0 : i32, i32
  }
  func.func @transform_10(%arg0: i32) -> (i32, i32) {
    %c0_i32 = arith.constant 0 : i32
    %c0_i32_0 = arith.constant 0 : i32
    %c0_i32_1 = arith.constant 0 : i32
    return %c0_i32, %c0_i32_0 : i32, i32
  }
  func.func @transform_11(%arg0: i32) -> (i32, i32) {
    %c0_i32 = arith.constant 0 : i32
    %c0_i32_0 = arith.constant 0 : i32
    %c0_i32_1 = arith.constant 0 : i32
    return %c0_i32, %c0_i32_0 : i32, i32
  }
  func.func @transform_12(%arg0: i32) -> (i32, i32) {
    %c0_i32 = arith.constant 0 : i32
    %c0_i32_0 = arith.constant 0 : i32
    %c0_i32_1 = arith.constant 0 : i32
    return %c0_i32, %c0_i32_0 : i32, i32
  }
  func.func @transform_13(%arg0: i32) -> (i32, i32, i32) {
    %c0_i32 = arith.constant 0 : i32
    %c0_i32_0 = arith.constant 0 : i32
    %c0_i32_1 = arith.constant 0 : i32
    return %arg0, %c0_i32, %c0_i32_0 : i32, i32, i32
  }
}

</mosaic_0001>

<llo_original>
// kernel: tpu_custom_call.1
$region0: #{tpu_custom_call.1}
  #allocation0 [shape = 'u32[]', space=smem, size = 0x4, offset = 0x4, fixed_abs, tag = 'smem constant byte address 0x4 - core index']
  #allocation1 [shape = 'u32[144,128]{1,0:T(1,128)}', space=vmem, size = 0x12000, scoped, tag = 'internal scratch']
  #allocation2 [shape = 'f32[16,512]{1,0:T(8,128)}', space=vmem, size = 0x8000, scoped, tag = 'scratch operand']
  #allocation3 [shape = 'f32[1,1]{1,0:T(1,128)S(6)}', space=smem, size = 0x200, scoped, tag = 'scoped memory for tpu_custom_call.1']
  %s0 = inlined_call_operand.vmem [shape: f32[2,16,256], index: 0, kind: input, shape index: {}]
  %s1 = inlined_call_operand.hbm [shape: f32[9,16,16], index: 1, kind: input, shape index: {}]
  %s2 = inlined_call_operand.vmem [shape: f32[16,1], index: 2, kind: input, shape index: {}]
  %s3 = inlined_call_operand.hbm [shape: f32[9,16,16], index: 3, kind: input, shape index: {}]
  %s4 = inlined_call_operand.vmem [shape: f32[16,1], index: 4, kind: input, shape index: {}]
  %s5 = inlined_call_operand.vmem [shape: f32[2,16], index: 5, kind: input, shape index: {}]
  %s6 = inlined_call_operand.vmem [shape: f32[2,1], index: 6, kind: input, shape index: {}]
  %s7 = inlined_call_operand.vmem [shape: f32[16,2], index: 7, kind: input, shape index: {}]
  %s8 = inlined_call_operand.vmem [shape: f32[16,1], index: 8, kind: input, shape index: {}]
  %s9 = inlined_call_operand.vmem [shape: f32[2,16], index: 9, kind: input, shape index: {}]
  %s10 = inlined_call_operand.vmem [shape: f32[2,1], index: 10, kind: input, shape index: {}]
  %s11 = inlined_call_operand.vmem [shape: f32[2,1], index: 11, kind: input, shape index: {}]
  %s12 = inlined_call_operand.<no memory space> [shape: f32[1,1], index: 12, kind: input, shape index: {}]
  %s13 = inlined_call_operand.hbm [shape: f32[2,16,256], index: 13, kind: output, shape index: {}]
  %s14 = sld [smem:[#allocation0]]
  $region93: #{tpu_custom_call.1} parent=0
    _
  %s16 = ssub.s32 1, %s14
  %s17 = scalar_select 0, %s16, %s14
  %18 = sst [smem:[#allocation3]] %s12
  $region1: #{tpu_custom_call.1} parent=0
    #allocation4 [shape = 'u8[73728]{0}', space=vmem, size = 0x12000, scoped, tag = 'input window, operand 1, single buffered']
    #allocation5 [shape = 's32[2]{0}', space=sflag, size = 0x8, scoped, tag = 'scoped memory for tpu_custom_call.1']
    #allocation6 [shape = 's32[2]{0}', space=sflag, size = 0x8, scoped, tag = 'scoped memory for tpu_custom_call.1']
    #allocation7 [shape = 'u8[73728]{0}', space=vmem, size = 0x12000, scoped, tag = 'input window, operand 3, single buffered']
    #allocation8 [shape = 's32[1]{0}', space=sflag, size = 0x4, scoped, tag = 'scoped memory for tpu_custom_call.1']
    #allocation9 [shape = 'u8[32768]{0}', space=vmem, size = 0x8000, scoped, tag = 'output window, operand 0']
    %19 = vsyncpa [#allocation5], 0
    %20 = vsyncpa [#allocation8], 0
    %21 = vsyncpa [#allocation6], 0
    %s22 = scalar_lea.sflag [#allocation6], 1
    %23 = vsyncpa %s22, 0
    loop: start=0, step=1, limit=4
    $region2: #{tpu_custom_call.1} parent=1 // loop_pre_header
      _
    $region3: #{tpu_custom_call.1} parent=1 // loop_header
      %s25 = sphi 0, %s29
      %p26 = scmp.ge.s32.totalorder %s25, 4
      %s35 = sphi 0, %s37
      %s38 = sphi 0, %s35
      %s39 = sphi 0, %s38
      %s55 = sphi 0, %s39
      %s59 = sphi 0, %s59
      %s61 = sphi 0, %s59
      %s62 = sphi 0, %s61
      %s76 = sphi 0, %s62
      %s80 = sphi 0, %s80
      %s82 = sphi 0, %s80
      %s83 = sphi 0, %s82
      %s97 = sphi 0, %s83
      %s101 = sphi 0, %s101
      %s103 = sphi 0, %s101
      %s104 = sphi 0, %s103
      %s118 = sphi 0, %s104
      %s122 = sphi 0, %s122
      %s124 = sphi 0, %s122
      %s125 = sphi 0, %s124
      %s139 = sphi 0, %s125
      %s143 = sphi 0, %s143
      %s145 = sphi 0, %s143
      %s146 = sphi 0, %s145
      %s160 = sphi 0, %s146
      %s164 = sphi 0, %s164
      %s166 = sphi 0, %s164
      %s167 = sphi 0, %s166
      %s181 = sphi 0, %s167
      %s185 = sphi 0, %s185
      %s187 = sphi 0, %s185
      %s188 = sphi 0, %s187
      %s202 = sphi 0, %s188
      %s206 = sphi 0, %s206
      %s208 = sphi 0, %s206
      %s209 = sphi 0, %s208
      %s223 = sphi 0, %s209
      %s227 = sphi 0, %s227
      %s229 = sphi 0, %s227
      %s230 = sphi 0, %s229
      %s244 = sphi 0, %s230
      %s248 = sphi 0, %s248
      %s250 = sphi 0, %s248
      %s251 = sphi 0, %s250
      %s265 = sphi 0, %s251
      %s269 = sphi 0, %s269
      %s271 = sphi 0, %s269
      %s272 = sphi 0, %s271
      %s286 = sphi 0, %s272
      %s290 = sphi 0, %s290
      %s292 = sphi 0, %s290
      %s293 = sphi 0, %s292
      %s307 = sphi 0, %s293
      %s313 = sphi 0, %s315
      %s316 = sphi 0, %s313
      %s317 = sphi 0, %s316
      %s333 = sphi 0, %s317
    $region4: #{tpu_custom_call.1} parent=1 // loop_header_branch
      %28 = sbr.rel (%p26) target = $region8
    $region5: #{tpu_custom_call.1} parent=1 // loop_body
      %s30 = ssub.s32 %s25, 1
      %s31 = ssub.s32 %s25, 2
      %s32 = sadd.s32 %s25, 1
      %s33 = ssub.s32 %s25, %s32
      %p34 = scmp.eq.s32.totalorder %s33, 0
      %s36 = sadd.s32 %s35, 1
      %s37 = scalar_select %p34, %s35, %s36
      %p40 = pneg %p34
      %p41 = scmp.eq.s32.totalorder %s25, 1
      %p42 = por %p40, %p41
      %p43 = scmp.ne.s32.totalorder %s35, %s38
      %p44 = scmp.eq.s32.totalorder %s25, 0
      %p45 = por %p43, %p44
      %p46 = scmp.ne.s32.totalorder %s35, %s38
      %p47 = scmp.eq.s32.totalorder %s30, 1
      %p48 = por %p46, %p47
      %p49 = scmp.ne.s32.totalorder %s38, %s39
      %p50 = scmp.eq.s32.totalorder %s30, 0
      %p51 = por %p49, %p50
      %p52 = scmp.ne.s32.totalorder %s38, %s39
      %p53 = scmp.eq.s32.totalorder %s31, 1
      %p54 = por %p52, %p53
      %p56 = scmp.ne.s32.totalorder %s39, %s55
      %p57 = scmp.eq.s32.totalorder %s31, 0
      %p58 = por %p56, %p57
      %s60 = sadd.s32 %s59, 1
      %p63 = scmp.eq.s32.totalorder %s25, 1
      %p64 = scmp.ne.s32.totalorder %s59, %s61
      %p65 = scmp.eq.s32.totalorder %s25, 0
      %p66 = por %p64, %p65
      %p67 = scmp.ne.s32.totalorder %s59, %s61
      %p68 = scmp.eq.s32.totalorder %s30, 1
      %p69 = por %p67, %p68
      %p70 = scmp.ne.s32.totalorder %s61, %s62
      %p71 = scmp.eq.s32.totalorder %s30, 0
      %p72 = por %p70, %p71
      %p73 = scmp.ne.s32.totalorder %s61, %s62
      %p74 = scmp.eq.s32.totalorder %s31, 1
      %p75 = por %p73, %p74
      %p77 = scmp.ne.s32.totalorder %s62, %s76
      %p78 = scmp.eq.s32.totalorder %s31, 0
      %p79 = por %p77, %p78
      %s81 = sadd.s32 %s80, 1
      %p84 = scmp.eq.s32.totalorder %s25, 1
      %p85 = scmp.ne.s32.totalorder %s80, %s82
      %p86 = scmp.eq.s32.totalorder %s25, 0
      %p87 = por %p85, %p86
      %p88 = scmp.ne.s32.totalorder %s80, %s82
      %p89 = scmp.eq.s32.totalorder %s30, 1
      %p90 = por %p88, %p89
      %p91 = scmp.ne.s32.totalorder %s82, %s83
      %p92 = scmp.eq.s32.totalorder %s30, 0
      %p93 = por %p91, %p92
      %p94 = scmp.ne.s32.totalorder %s82, %s83
      %p95 = scmp.eq.s32.totalorder %s31, 1
      %p96 = por %p94, %p95
      %p98 = scmp.ne.s32.totalorder %s83, %s97
      %p99 = scmp.eq.s32.totalorder %s31, 0
      %p100 = por %p98, %p99
      %s102 = sadd.s32 %s101, 1
      %p105 = scmp.eq.s32.totalorder %s25, 1
      %p106 = scmp.ne.s32.totalorder %s101, %s103
      %p107 = scmp.eq.s32.totalorder %s25, 0
      %p108 = por %p106, %p107
      %p109 = scmp.ne.s32.totalorder %s101, %s103
      %p110 = scmp.eq.s32.totalorder %s30, 1
      %p111 = por %p109, %p110
      %p112 = scmp.ne.s32.totalorder %s103, %s104
      %p113 = scmp.eq.s32.totalorder %s30, 0
      %p114 = por %p112, %p113
      %p115 = scmp.ne.s32.totalorder %s103, %s104
      %p116 = scmp.eq.s32.totalorder %s31, 1
      %p117 = por %p115, %p116
      %p119 = scmp.ne.s32.totalorder %s104, %s118
      %p120 = scmp.eq.s32.totalorder %s31, 0
      %p121 = por %p119, %p120
      %s123 = sadd.s32 %s122, 1
      %p126 = scmp.eq.s32.totalorder %s25, 1
      %p127 = scmp.ne.s32.totalorder %s122, %s124
      %p128 = scmp.eq.s32.totalorder %s25, 0
      %p129 = por %p127, %p128
      %p130 = scmp.ne.s32.totalorder %s122, %s124
      %p131 = scmp.eq.s32.totalorder %s30, 1
      %p132 = por %p130, %p131
      %p133 = scmp.ne.s32.totalorder %s124, %s125
      %p134 = scmp.eq.s32.totalorder %s30, 0
      %p135 = por %p133, %p134
      %p136 = scmp.ne.s32.totalorder %s124, %s125
      %p137 = scmp.eq.s32.totalorder %s31, 1
      %p138 = por %p136, %p137
      %p140 = scmp.ne.s32.totalorder %s125, %s139
      %p141 = scmp.eq.s32.totalorder %s31, 0
      %p142 = por %p140, %p141
      %s144 = sadd.s32 %s143, 1
      %p147 = scmp.eq.s32.totalorder %s25, 1
      %p148 = scmp.ne.s32.totalorder %s143, %s145
      %p149 = scmp.eq.s32.totalorder %s25, 0
      %p150 = por %p148, %p149
      %p151 = scmp.ne.s32.totalorder %s143, %s145
      %p152 = scmp.eq.s32.totalorder %s30, 1
      %p153 = por %p151, %p152
      %p154 = scmp.ne.s32.totalorder %s145, %s146
      %p155 = scmp.eq.s32.totalorder %s30, 0
      %p156 = por %p154, %p155
      %p157 = scmp.ne.s32.totalorder %s145, %s146
      %p158 = scmp.eq.s32.totalorder %s31, 1
      %p159 = por %p157, %p158
      %p161 = scmp.ne.s32.totalorder %s146, %s160
      %p162 = scmp.eq.s32.totalorder %s31, 0
      %p163 = por %p161, %p162
      %s165 = sadd.s32 %s164, 1
      %p168 = scmp.eq.s32.totalorder %s25, 1
      %p169 = scmp.ne.s32.totalorder %s164, %s166
      %p170 = scmp.eq.s32.totalorder %s25, 0
      %p171 = por %p169, %p170
      %p172 = scmp.ne.s32.totalorder %s164, %s166
      %p173 = scmp.eq.s32.totalorder %s30, 1
      %p174 = por %p172, %p173
      %p175 = scmp.ne.s32.totalorder %s166, %s167
      %p176 = scmp.eq.s32.totalorder %s30, 0
      %p177 = por %p175, %p176
      %p178 = scmp.ne.s32.totalorder %s166, %s167
      %p179 = scmp.eq.s32.totalorder %s31, 1
      %p180 = por %p178, %p179
      %p182 = scmp.ne.s32.totalorder %s167, %s181
      %p183 = scmp.eq.s32.totalorder %s31, 0
      %p184 = por %p182, %p183
      %s186 = sadd.s32 %s185, 1
      %p189 = scmp.eq.s32.totalorder %s25, 1
      %p190 = scmp.ne.s32.totalorder %s185, %s187
      %p191 = scmp.eq.s32.totalorder %s25, 0
      %p192 = por %p190, %p191
      %p193 = scmp.ne.s32.totalorder %s185, %s187
      %p194 = scmp.eq.s32.totalorder %s30, 1
      %p195 = por %p193, %p194
      %p196 = scmp.ne.s32.totalorder %s187, %s188
      %p197 = scmp.eq.s32.totalorder %s30, 0
      %p198 = por %p196, %p197
      %p199 = scmp.ne.s32.totalorder %s187, %s188
      %p200 = scmp.eq.s32.totalorder %s31, 1
      %p201 = por %p199, %p200
      %p203 = scmp.ne.s32.totalorder %s188, %s202
      %p204 = scmp.eq.s32.totalorder %s31, 0
      %p205 = por %p203, %p204
      %s207 = sadd.s32 %s206, 1
      %p210 = scmp.eq.s32.totalorder %s25, 1
      %p211 = scmp.ne.s32.totalorder %s206, %s208
      %p212 = scmp.eq.s32.totalorder %s25, 0
      %p213 = por %p211, %p212
      %p214 = scmp.ne.s32.totalorder %s206, %s208
      %p215 = scmp.eq.s32.totalorder %s30, 1
      %p216 = por %p214, %p215
      %p217 = scmp.ne.s32.totalorder %s208, %s209
      %p218 = scmp.eq.s32.totalorder %s30, 0
      %p219 = por %p217, %p218
      %p220 = scmp.ne.s32.totalorder %s208, %s209
      %p221 = scmp.eq.s32.totalorder %s31, 1
      %p222 = por %p220, %p221
      %p224 = scmp.ne.s32.totalorder %s209, %s223
      %p225 = scmp.eq.s32.totalorder %s31, 0
      %p226 = por %p224, %p225
      %s228 = sadd.s32 %s227, 1
      %p231 = scmp.eq.s32.totalorder %s25, 1
      %p232 = scmp.ne.s32.totalorder %s227, %s229
      %p233 = scmp.eq.s32.totalorder %s25, 0
      %p234 = por %p232, %p233
      %p235 = scmp.ne.s32.totalorder %s227, %s229
      %p236 = scmp.eq.s32.totalorder %s30, 1
      %p237 = por %p235, %p236
      %p238 = scmp.ne.s32.totalorder %s229, %s230
      %p239 = scmp.eq.s32.totalorder %s30, 0
      %p240 = por %p238, %p239
      %p241 = scmp.ne.s32.totalorder %s229, %s230
      %p242 = scmp.eq.s32.totalorder %s31, 1
      %p243 = por %p241, %p242
      %p245 = scmp.ne.s32.totalorder %s230, %s244
      %p246 = scmp.eq.s32.totalorder %s31, 0
      %p247 = por %p245, %p246
      %s249 = sadd.s32 %s248, 1
      %p252 = scmp.eq.s32.totalorder %s25, 1
      %p253 = scmp.ne.s32.totalorder %s248, %s250
      %p254 = scmp.eq.s32.totalorder %s25, 0
      %p255 = por %p253, %p254
      %p256 = scmp.ne.s32.totalorder %s248, %s250
      %p257 = scmp.eq.s32.totalorder %s30, 1
      %p258 = por %p256, %p257
      %p259 = scmp.ne.s32.totalorder %s250, %s251
      %p260 = scmp.eq.s32.totalorder %s30, 0
      %p261 = por %p259, %p260
      %p262 = scmp.ne.s32.totalorder %s250, %s251
      %p263 = scmp.eq.s32.totalorder %s31, 1
      %p264 = por %p262, %p263
      %p266 = scmp.ne.s32.totalorder %s251, %s265
      %p267 = scmp.eq.s32.totalorder %s31, 0
      %p268 = por %p266, %p267
      %s270 = sadd.s32 %s269, 1
      %p273 = scmp.eq.s32.totalorder %s25, 1
      %p274 = scmp.ne.s32.totalorder %s269, %s271
      %p275 = scmp.eq.s32.totalorder %s25, 0
      %p276 = por %p274, %p275
      %p277 = scmp.ne.s32.totalorder %s269, %s271
      %p278 = scmp.eq.s32.totalorder %s30, 1
      %p279 = por %p277, %p278
      %p280 = scmp.ne.s32.totalorder %s271, %s272
      %p281 = scmp.eq.s32.totalorder %s30, 0
      %p282 = por %p280, %p281
      %p283 = scmp.ne.s32.totalorder %s271, %s272
      %p284 = scmp.eq.s32.totalorder %s31, 1
      %p285 = por %p283, %p284
      %p287 = scmp.ne.s32.totalorder %s272, %s286
      %p288 = scmp.eq.s32.totalorder %s31, 0
      %p289 = por %p287, %p288
      %s291 = sadd.s32 %s290, 1
      %p294 = scmp.eq.s32.totalorder %s25, 1
      %p295 = scmp.ne.s32.totalorder %s290, %s292
      %p296 = scmp.eq.s32.totalorder %s25, 0
      %p297 = por %p295, %p296
      %p298 = scmp.ne.s32.totalorder %s290, %s292
      %p299 = scmp.eq.s32.totalorder %s30, 1
      %p300 = por %p298, %p299
      %p301 = scmp.ne.s32.totalorder %s292, %s293
      %p302 = scmp.eq.s32.totalorder %s30, 0
      %p303 = por %p301, %p302
      %p304 = scmp.ne.s32.totalorder %s292, %s293
      %p305 = scmp.eq.s32.totalorder %s31, 1
      %p306 = por %p304, %p305
      %p308 = scmp.ne.s32.totalorder %s293, %s307
      %p309 = scmp.eq.s32.totalorder %s31, 0
      %p310 = por %p308, %p309
      %s311 = ssub.s32 %s25, %s32
      %p312 = scmp.eq.s32.totalorder %s311, 0
      %s314 = sadd.s32 %s313, 1
      %s315 = scalar_select %p312, %s313, %s314
      %p318 = pneg %p312
      %p319 = scmp.eq.s32.totalorder %s25, 1
      %p320 = por %p318, %p319
      %p321 = scmp.ne.s32.totalorder %s313, %s316
      %p322 = scmp.eq.s32.totalorder %s25, 0
      %p323 = por %p321, %p322
      %p324 = scmp.ne.s32.totalorder %s313, %s316
      %p325 = scmp.eq.s32.totalorder %s30, 1
      %p326 = por %p324, %p325
      %p327 = scmp.ne.s32.totalorder %s316, %s317
      %p328 = scmp.eq.s32.totalorder %s30, 0
      %p329 = por %p327, %p328
      %p330 = scmp.ne.s32.totalorder %s316, %s317
      %p331 = scmp.eq.s32.totalorder %s31, 1
      %p332 = por %p330, %p331
      %p334 = scmp.ne.s32.totalorder %s317, %s333
      %p335 = scmp.eq.s32.totalorder %s31, 0
      %p336 = por %p334, %p335
      %p337 = scmp.le.s32.totalorder 1, %s25
      %p338 = scmp.lt.s32.totalorder %s25, 3
      %p339 = pnand %p337, %p338
      %p340 = pneg %p339
      // Predicated region
      $region9: #{tpu_custom_call.1} parent=5 // pred_check
        _
      $region10: #{tpu_custom_call.1} parent=5 // pred_check_branch
        %342 = sbr.rel (%p339) target = $region12
      $region11: #{tpu_custom_call.1} parent=5 // pred_region
        %s343 = ssub.s32 %s25, 1
        // Predicated region
        $region13: #{tpu_custom_call.1} parent=11 // pred_check
          %p344 = pneg %p72
        $region14: #{tpu_custom_call.1} parent=11 // pred_check_branch
          %346 = sbr.rel (%p344) target = $region16
        $region15: #{tpu_custom_call.1} parent=11 // pred_region
          %s348 = ssub.s32 2304, 2304
          %349 = vsyncadd [#allocation5], %s348
          %s350 = sshll.u32 [#allocation4], 4
          %s351 = int_to_ptr.vmem [resolvable:$true] %s350
          %356 = dma.hbm_to_vmem [thread:$0]  %s1, 2304, %s351, [#allocation5], 128, 128, 8
        $region16: #{tpu_custom_call.1} parent=11 // pred_fallthru
          _
        // Predicated region
        $region17: #{tpu_custom_call.1} parent=11 // pred_check
          %p357 = pneg %p93
        $region18: #{tpu_custom_call.1} parent=11 // pred_check_branch
          %359 = sbr.rel (%p357) target = $region20
        $region19: #{tpu_custom_call.1} parent=11 // pred_region
          _
        $region20: #{tpu_custom_call.1} parent=11 // pred_fallthru
          _
        // Predicated region
        $region21: #{tpu_custom_call.1} parent=11 // pred_check
          %p360 = pneg %p114
        $region22: #{tpu_custom_call.1} parent=11 // pred_check_branch
          %362 = sbr.rel (%p360) target = $region24
        $region23: #{tpu_custom_call.1} parent=11 // pred_region
          %s364 = ssub.s32 2304, 2304
          %365 = vsyncadd [#allocation8], %s364
          %s366 = sshll.u32 [#allocation7], 4
          %s367 = int_to_ptr.vmem [resolvable:$true] %s366
          %372 = dma.hbm_to_vmem [thread:$0]  %s3, 2304, %s367, [#allocation8], 128, 128, 8
        $region24: #{tpu_custom_call.1} parent=11 // pred_fallthru
          _
        // Predicated region
        $region25: #{tpu_custom_call.1} parent=11 // pred_check
          %p373 = pneg %p135
        $region26: #{tpu_custom_call.1} parent=11 // pred_check_branch
          %375 = sbr.rel (%p373) target = $region28
        $region27: #{tpu_custom_call.1} parent=11 // pred_region
          _
        $region28: #{tpu_custom_call.1} parent=11 // pred_fallthru
          _
        // Predicated region
        $region29: #{tpu_custom_call.1} parent=11 // pred_check
          %p376 = pneg %p156
        $region30: #{tpu_custom_call.1} parent=11 // pred_check_branch
          %378 = sbr.rel (%p376) target = $region32
        $region31: #{tpu_custom_call.1} parent=11 // pred_region
          _
        $region32: #{tpu_custom_call.1} parent=11 // pred_fallthru
          _
        // Predicated region
        $region33: #{tpu_custom_call.1} parent=11 // pred_check
          %p379 = pneg %p177
        $region34: #{tpu_custom_call.1} parent=11 // pred_check_branch
          %381 = sbr.rel (%p379) target = $region36
        $region35: #{tpu_custom_call.1} parent=11 // pred_region
          _
        $region36: #{tpu_custom_call.1} parent=11 // pred_fallthru
          _
        // Predicated region
        $region37: #{tpu_custom_call.1} parent=11 // pred_check
          %p382 = pneg %p198
        $region38: #{tpu_custom_call.1} parent=11 // pred_check_branch
          %384 = sbr.rel (%p382) target = $region40
        $region39: #{tpu_custom_call.1} parent=11 // pred_region
          _
        $region40: #{tpu_custom_call.1} parent=11 // pred_fallthru
          _
        // Predicated region
        $region41: #{tpu_custom_call.1} parent=11 // pred_check
          %p385 = pneg %p219
        $region42: #{tpu_custom_call.1} parent=11 // pred_check_branch
          %387 = sbr.rel (%p385) target = $region44
        $region43: #{tpu_custom_call.1} parent=11 // pred_region
          _
        $region44: #{tpu_custom_call.1} parent=11 // pred_fallthru
          _
        // Predicated region
        $region45: #{tpu_custom_call.1} parent=11 // pred_check
          %p388 = pneg %p240
        $region46: #{tpu_custom_call.1} parent=11 // pred_check_branch
          %390 = sbr.rel (%p388) target = $region48
        $region47: #{tpu_custom_call.1} parent=11 // pred_region
          _
        $region48: #{tpu_custom_call.1} parent=11 // pred_fallthru
          _
        // Predicated region
        $region49: #{tpu_custom_call.1} parent=11 // pred_check
          %p391 = pneg %p261
        $region50: #{tpu_custom_call.1} parent=11 // pred_check_branch
          %393 = sbr.rel (%p391) target = $region52
        $region51: #{tpu_custom_call.1} parent=11 // pred_region
          _
        $region52: #{tpu_custom_call.1} parent=11 // pred_fallthru
          _
        // Predicated region
        $region53: #{tpu_custom_call.1} parent=11 // pred_check
          %p394 = pneg %p282
        $region54: #{tpu_custom_call.1} parent=11 // pred_check_branch
          %396 = sbr.rel (%p394) target = $region56
        $region55: #{tpu_custom_call.1} parent=11 // pred_region
          _
        $region56: #{tpu_custom_call.1} parent=11 // pred_fallthru
          _
        // Predicated region
        $region57: #{tpu_custom_call.1} parent=11 // pred_check
          %p397 = pneg %p303
        $region58: #{tpu_custom_call.1} parent=11 // pred_check_branch
          %399 = sbr.rel (%p397) target = $region60
        $region59: #{tpu_custom_call.1} parent=11 // pred_region
          _
        $region60: #{tpu_custom_call.1} parent=11 // pred_fallthru
          _
      $region12: #{tpu_custom_call.1} parent=5 // pred_fallthru
        _
      %p400 = scmp.lt.s32.totalorder %s25, 2
      // Predicated region
      $region61: #{tpu_custom_call.1} parent=5 // pred_check
        %p401 = pneg %p400
      $region62: #{tpu_custom_call.1} parent=5 // pred_check_branch
        %403 = sbr.rel (%p401) target = $region64
      $region63: #{tpu_custom_call.1} parent=5 // pred_region
        // Predicated region
        $region65: #{tpu_custom_call.1} parent=63 // pred_check
          %p404 = pneg %p45
        $region66: #{tpu_custom_call.1} parent=63 // pred_check_branch
          %406 = sbr.rel (%p404) target = $region68
        $region67: #{tpu_custom_call.1} parent=63 // pred_region
          %p407 = scmp.lt.s32.totalorder %s25, 1
          %s408 = scalar_select %p407, %s25, 1
          %s409 = smul.addr %s408, 4
          %s410 = smul.addr %s409, 8
          %s411 = scalar_lea.vmem %s0, %s410
        $region68: #{tpu_custom_call.1} parent=63 // pred_fallthru
          _
      $region64: #{tpu_custom_call.1} parent=5 // pred_fallthru
        _
      %p412 = scmp.le.s32.totalorder 1, %s25
      %p413 = scmp.lt.s32.totalorder %s25, 3
      %p414 = pnand %p412, %p413
      %p415 = pneg %p414
      // Predicated region
      $region69: #{tpu_custom_call.1} parent=5 // pred_check
        _
      $region70: #{tpu_custom_call.1} parent=5 // pred_check_branch
        %417 = sbr.rel (%p414) target = $region72
      $region71: #{tpu_custom_call.1} parent=5 // pred_region
        %s418 = ssub.s32 %s25, 1
        // Predicated region
        $region73: #{tpu_custom_call.1} parent=71 // pred_check
          %p419 = pneg %p72
        $region74: #{tpu_custom_call.1} parent=71 // pred_check_branch
          %421 = sbr.rel (%p419) target = $region76
        $region75: #{tpu_custom_call.1} parent=71 // pred_region
          %422 = dma.done [#allocation5], 2304
        $region76: #{tpu_custom_call.1} parent=71 // pred_fallthru
          _
        // Predicated region
        $region77: #{tpu_custom_call.1} parent=71 // pred_check
          %p423 = pneg %p114
        $region78: #{tpu_custom_call.1} parent=71 // pred_check_branch
          %425 = sbr.rel (%p423) target = $region80
        $region79: #{tpu_custom_call.1} parent=71 // pred_region
          %426 = dma.done [#allocation8], 2304
        $region80: #{tpu_custom_call.1} parent=71 // pred_fallthru
          _
        %p427 = scmp.lt.s32.totalorder %s30, 1
        %s428 = scalar_select %p427, %s30, 1
        %s429 = smul.addr %s428, 4
        %s430 = smul.addr %s429, 8
        %s431 = scalar_lea.vmem %s0, %s430
        %p432 = pneg %p51
        %p433 = pneg %p48
        %p434 = pneg %p72
        %p435 = pneg %p69
        %p436 = pneg %p93
        %p437 = pneg %p90
        %p438 = pneg %p114
        %p439 = pneg %p111
        %p440 = pneg %p135
        %p441 = pneg %p132
        %p442 = pneg %p156
        %p443 = pneg %p153
        %p444 = pneg %p177
        %p445 = pneg %p174
        %p446 = pneg %p198
        %p447 = pneg %p195
        %p448 = pneg %p219
        %p449 = pneg %p216
        %p450 = pneg %p240
        %p451 = pneg %p237
        %p452 = pneg %p261
        %p453 = pneg %p258
        %p454 = pneg %p282
        %p455 = pneg %p279
        %p456 = pneg %p303
        %p457 = pneg %p300
        %p458 = pneg %p329
        %p459 = pneg %p326
        %s460 = sand.u32 %s316, 1
        %s461 = scalar_lea.sflag [#allocation6], %s460
        %s462 = sand.u32 %s316, 1
        %s463 = smul.addr %s462, 32
        %s464 = scalar_lea.vmem [#allocation9], %s463
        %p465 = scmp.lt.s32.totalorder %s30, 1
        %s466 = scalar_select %p465, %s30, 1
        %s467 = smul.addr %s466, 4
        %s468 = smul.addr %s467, 8
        %s469 = scalar_lea.vmem %s0, %s468
        %v470 = vld [vmem:[%s469] sm:$0xff]
        %v471 = vld [vmem:[%s469 + $0x8] sm:$0xff]
        %v472 = vld [vmem:[%s469 + $0x10] sm:$0xff]
        %v473 = vld [vmem:[%s469 + $0x18] sm:$0xff]
        %v474 = vlaneseq
        %v475 = vand.u32 %v474, 127
        %v476 = vadd.s32 %v475, 128
        %vm477 = vcmp.lt.s32.totalorder %v475, 0
        %v478 = vsub.s32 0, %v475
        %v479 = vsel %vm477, %v478, %v475
        %v480 = vshrl.u32 %v479, 4
        %v481 = vand.u32 %v479, 15
        %v482 = vsub.s32 0, %v481
        %v483 = vsel %vm477, %v482, %v481
        %vm484 = vcmp.lt.s32.totalorder %v476, 0
        %v485 = vsub.s32 0, %v476
        %v486 = vsel %vm484, %v485, %v476
        %v487 = vshrl.u32 %v486, 4
        %v488 = vand.u32 %v486, 15
        %v489 = vsub.s32 0, %v488
        %v490 = vsel %vm484, %v489, %v488
        %vm491 = vcmp.ne.s32.totalorder %v483, 0
        %vm492 = vcmp.ne.s32.totalorder %v490, 0
        %vm493 = vcmp.lt.s32.totalorder %v483, 0
        %vm494 = vcmp.lt.s32.totalorder %v490, 0
        %vm495 = vmand %vm493, %vm491
        %vm496 = vmand %vm494, %vm492
        %v497 = vadd.s32 %v483, 16
        %v498 = vadd.s32 %v490, 16
        %v499 = vsel %vm495, %v497, %v483
        %v500 = vsel %vm496, %v498, %v490
        %v501 = vadd.s32 %v499, 4294967295
        %v502 = vadd.s32 %v500, 4294967295
        %vm503 = vcmp.ge.s32.totalorder %v501, 0
        %vm504 = vcmp.ge.s32.totalorder %v502, 0
        %vm505 = vcmp.lt.s32.totalorder %v501, 16
        %vm506 = vcmp.lt.s32.totalorder %v502, 16
        %vm507 = vmand %vm503, %vm505
        %vm508 = vmand %vm504, %vm506
        %v509 = vadd.s32 %v499, 1
        %v510 = vadd.s32 %v500, 1
        %vm511 = vcmp.ge.s32.totalorder %v509, 0
        %vm512 = vcmp.ge.s32.totalorder %v510, 0
        %vm513 = vcmp.lt.s32.totalorder %v509, 16
        %vm514 = vcmp.lt.s32.totalorder %v510, 16
        %vm515 = vmand %vm511, %vm513
        %vm516 = vmand %vm512, %vm514
        %517 = vst [vmem:[#allocation2] sm:$0xff] 0.0
        %518 = vst [vmem:[#allocation2 + $0x20] sm:$0xff] 0.0
        %519 = vst [vmem:[#allocation2 + $0x18] sm:$0xff] 0.0
        %520 = vst [vmem:[#allocation2 + $0x38] sm:$0xff] 0.0
        %521 = vst [vmem:[#allocation2 + $0x8] sm:$0xff] %v470
        %522 = vst [vmem:[#allocation2 + $0x10] sm:$0xff] %v471
        %523 = vst [vmem:[#allocation2 + $0x28] sm:$0xff] %v472
        %524 = vst [vmem:[#allocation2 + $0x30] sm:$0xff] %v473
        %v525 = vld [vmem:[#allocation2] sm:$0xff]
        %v526 = vld [vmem:[#allocation2 + $0x8] sm:$0xff]
        %v527 = vld [vmem:[#allocation2 + $0x10] sm:$0xff]
        %v528 = vld [vmem:[#allocation2 + $0x20] sm:$0xff]
        %v529 = vld [vmem:[#allocation2 + $0x28] sm:$0xff]
        %v530 = vld [vmem:[#allocation2 + $0x30] sm:$0xff]
        %v531 = vsel %vm507, 1, 0
        %v532 = vsel %vm508, 1, 0
        %vm533 = vcmp.eq.s32.totalorder %v531, 1
        %vm534 = vcmp.eq.s32.totalorder %v532, 1
        %541 = vrot.lane.b32.xlu0 %v525, 17
        %v542 = vpop.permute.xlu0 %541
        %543 = vrot.lane.b32.xlu0 %v526, 17
        %v544 = vpop.permute.xlu0 %543
        %545 = vrot.lane.b32.xlu0 %v527, 17
        %v546 = vpop.permute.xlu0 %545
        %547 = vrot.lane.b32.xlu0 %v528, 17
        %v548 = vpop.permute.xlu0 %547
        %549 = vrot.lane.b32.xlu0 %v529, 17
        %v550 = vpop.permute.xlu0 %549
        %551 = vrot.lane.b32.xlu0 %v530, 17
        %v552 = vpop.permute.xlu0 %551
        %vm553 = vcmask 138240
        %v554 = vsel %vm553, %v542, %v544
        %v555 = vsel %vm553, %v544, %v546
        %v556 = vsel %vm553, %v548, %v550
        %v557 = vsel %vm553, %v550, %v552
        %v562 = vsel %vm533, %v554, 0.0
        %v563 = vsel %vm534, %v555, 0.0
        %v564 = vsel %vm533, %v556, 0.0
        %v565 = vsel %vm534, %v557, 0.0
        %v566 = vld [vmem:[#allocation4] sm:$0xff]
        %v567 = vld [vmem:[#allocation4 + $0x8] sm:$0xff]
        %s568 = scalar_lea.vmem [#allocation4], 16
        %v569 = vld [vmem:[%s568] sm:$0xff]
        %v570 = vld [vmem:[%s568 + $0x8] sm:$0xff]
        %571 = vrot.lane.b32.xlu0 %v525, 16
        %v572 = vpop.permute.xlu0 %571
        %573 = vrot.lane.b32.xlu0 %v526, 16
        %v574 = vpop.permute.xlu0 %573
        %575 = vrot.lane.b32.xlu0 %v527, 16
        %v576 = vpop.permute.xlu0 %575
        %577 = vrot.lane.b32.xlu0 %v528, 16
        %v578 = vpop.permute.xlu0 %577
        %579 = vrot.lane.b32.xlu0 %v529, 16
        %v580 = vpop.permute.xlu0 %579
        %581 = vrot.lane.b32.xlu0 %v530, 16
        %v582 = vpop.permute.xlu0 %581
        %vm583 = vcmask 130048
        %v584 = vsel %vm583, %v572, %v574
        %v585 = vsel %vm583, %v574, %v576
        %v586 = vsel %vm583, %v578, %v580
        %v587 = vsel %vm583, %v580, %v582
        %v593 = vsel %vm583, %v569, 0
        %v596 = vsel %vm583, %v570, 0
        %598 = vmatprep.subr.mxu0 0.0
        %599 = vmatpush1.msra.mxu0 0.0
        %600 = vmatprep.subr.mxu0 0.0
        %601 = vmatpush1.msra.mxu0 0.0
        %602 = vmatprep.subr.mxu0 0.0
        %603 = vmatpush1.msra.mxu0 0.0
        %604 = vmatprep.subr.mxu0 0.0
        %605 = vmatpush1.msra.mxu0 0.0
        %606 = vmatprep.subr.mxu0 0.0
        %607 = vmatpush1.msra.mxu0 0.0
        %608 = vmatprep.subr.mxu0 0.0
        %609 = vmatpush1.msra.mxu0 0.0
        %610 = vmatprep.subr.mxu0 0.0
        %611 = vmatpush1.msra.mxu0 0.0
        %612 = vmatprep.subr.mxu0 0.0
        %613 = vmatpush1.msra.mxu0 0.0
        %614 = vmatprep.subr.mxu0 0.0
        %615 = vmatpush1.msra.mxu0 0.0
        %616 = vmatprep.subr.mxu0 0.0
        %617 = vmatpush1.msra.mxu0 0.0
        %618 = vmatprep.subr.mxu0 0.0
        %619 = vmatpush1.msra.mxu0 0.0
        %620 = vmatprep.subr.mxu0 0.0
        %621 = vmatpush1.msra.mxu0 0.0
        %622 = vmatprep.subr.mxu0 0.0
        %623 = vmatpush1.msra.mxu0 0.0
        %624 = vmatprep.subr.mxu0 0.0
        %625 = vmatpush1.msra.mxu0 0.0
        %626 = vmatprep.subr.mxu0 %v587
        %627 = vmatpush1.msra.mxu0 %v586
        %628 = vmatprep.subr.mxu0 %v585
        %629 = vmatpush1.msra.mxu0 %v584
        %630 = vmatprep.subr.mxu0 0.0
        %631 = vmatpush2.msra.mxu0 0.0
        %632 = vmatprep.subr.mxu0 0.0
        %633 = vmatpush2.msra.mxu0 0.0
        %634 = vmatprep.subr.mxu0 0.0
        %635 = vmatpush2.msra.mxu0 0.0
        %636 = vmatprep.subr.mxu0 0.0
        %637 = vmatpush2.msra.mxu0 0.0
        %638 = vmatprep.subr.mxu0 0.0
        %639 = vmatpush2.msra.mxu0 0.0
        %640 = vmatprep.subr.mxu0 0.0
        %641 = vmatpush2.msra.mxu0 0.0
        %642 = vmatprep.subr.mxu0 0.0
        %643 = vmatpush2.msra.mxu0 0.0
        %644 = vmatprep.subr.mxu0 0.0
        %645 = vmatpush2.msra.mxu0 0.0
        %646 = vmatprep.subr.mxu0 0.0
        %647 = vmatpush2.msra.mxu0 0.0
        %648 = vmatprep.subr.mxu0 0.0
        %649 = vmatpush2.msra.mxu0 0.0
        %650 = vmatprep.subr.mxu0 0.0
        %651 = vmatpush2.msra.mxu0 0.0
        %652 = vmatprep.subr.mxu0 0.0
        %653 = vmatpush2.msra.mxu0 0.0
        %654 = vmatprep.subr.mxu0 0.0
        %655 = vmatpush2.msra.mxu0 0.0
        %656 = vmatprep.subr.mxu0 0.0
        %657 = vmatpush2.msra.mxu0 0.0
        %658 = vmatprep.subr.mxu0 0.0
        %659 = vmatpush2.msra.mxu0 0.0
        %660 = vmatprep.subr.mxu0 0.0
        %661 = vmatpush2.msra.mxu0 0.0
        %662 = vmatprep.mubr.f32.mxu0 0.0
        %663 = vmatmul.mubr.f32.gmra.mxu0 %v593
        %v664 = vpop.f32.mrf.mxu0
        %v665 = vadd.f32 0.0, %v664
        %v666 = vpop.f32.mrf.mxu0
        %v667 = vadd.f32 0.0, %v666
        %668 = vmatprep.mubr.f32.mxu0 0.0
        %669 = vmatmul.mubr.f32.gmra.mxu0 %v596
        %v670 = vpop.f32.mrf.mxu0
        %v671 = vadd.f32 0.0, %v670
        %v672 = vpop.f32.mrf.mxu0
        %v673 = vadd.f32 0.0, %v672
        %674 = vdwg.mxu0
        %v676 = vsel %vm583, %v566, 0
        %v679 = vsel %vm583, %v567, 0
        %681 = vmatprep.subr.mxu0 0.0
        %682 = vmatpush1.msra.mxu0 0.0
        %683 = vmatprep.subr.mxu0 0.0
        %684 = vmatpush1.msra.mxu0 0.0
        %685 = vmatprep.subr.mxu0 0.0
        %686 = vmatpush1.msra.mxu0 0.0
        %687 = vmatprep.subr.mxu0 0.0
        %688 = vmatpush1.msra.mxu0 0.0
        %689 = vmatprep.subr.mxu0 0.0
        %690 = vmatpush1.msra.mxu0 0.0
        %691 = vmatprep.subr.mxu0 0.0
        %692 = vmatpush1.msra.mxu0 0.0
        %693 = vmatprep.subr.mxu0 0.0
        %694 = vmatpush1.msra.mxu0 0.0
        %695 = vmatprep.subr.mxu0 0.0
        %696 = vmatpush1.msra.mxu0 0.0
        %697 = vmatprep.subr.mxu0 0.0
        %698 = vmatpush1.msra.mxu0 0.0
        %699 = vmatprep.subr.mxu0 0.0
        %700 = vmatpush1.msra.mxu0 0.0
        %701 = vmatprep.subr.mxu0 0.0
        %702 = vmatpush1.msra.mxu0 0.0
        %703 = vmatprep.subr.mxu0 0.0
        %704 = vmatpush1.msra.mxu0 0.0
        %705 = vmatprep.subr.mxu0 0.0
        %706 = vmatpush1.msra.mxu0 0.0
        %707 = vmatprep.subr.mxu0 0.0
        %708 = vmatpush1.msra.mxu0 0.0
        %709 = vmatprep.subr.mxu0 %v565
        %710 = vmatpush1.msra.mxu0 %v564
        %711 = vmatprep.subr.mxu0 %v563
        %712 = vmatpush1.msra.mxu0 %v562
        %713 = vmatprep.subr.mxu0 0.0
        %714 = vmatpush2.msra.mxu0 0.0
        %715 = vmatprep.subr.mxu0 0.0
        %716 = vmatpush2.msra.mxu0 0.0
        %717 = vmatprep.subr.mxu0 0.0
        %718 = vmatpush2.msra.mxu0 0.0
        %719 = vmatprep.subr.mxu0 0.0
        %720 = vmatpush2.msra.mxu0 0.0
        %721 = vmatprep.subr.mxu0 0.0
        %722 = vmatpush2.msra.mxu0 0.0
        %723 = vmatprep.subr.mxu0 0.0
        %724 = vmatpush2.msra.mxu0 0.0
        %725 = vmatprep.subr.mxu0 0.0
        %726 = vmatpush2.msra.mxu0 0.0
        %727 = vmatprep.subr.mxu0 0.0
        %728 = vmatpush2.msra.mxu0 0.0
        %729 = vmatprep.subr.mxu0 0.0
        %730 = vmatpush2.msra.mxu0 0.0
        %731 = vmatprep.subr.mxu0 0.0
        %732 = vmatpush2.msra.mxu0 0.0
        %733 = vmatprep.subr.mxu0 0.0
        %734 = vmatpush2.msra.mxu0 0.0
        %735 = vmatprep.subr.mxu0 0.0
        %736 = vmatpush2.msra.mxu0 0.0
        %737 = vmatprep.subr.mxu0 0.0
        %738 = vmatpush2.msra.mxu0 0.0
        %739 = vmatprep.subr.mxu0 0.0
        %740 = vmatpush2.msra.mxu0 0.0
        %741 = vmatprep.subr.mxu0 0.0
        %742 = vmatpush2.msra.mxu0 0.0
        %743 = vmatprep.subr.mxu0 0.0
        %744 = vmatpush2.msra.mxu0 0.0
        %745 = vmatprep.mubr.f32.mxu0 0.0
        %746 = vmatmul.mubr.f32.gmra.mxu0 %v676
        %v747 = vpop.f32.mrf.mxu0
        %v748 = vadd.f32 %v665, %v747
        %v749 = vpop.f32.mrf.mxu0
        %v750 = vadd.f32 %v667, %v749
        %751 = vmatprep.mubr.f32.mxu0 0.0
        %752 = vmatmul.mubr.f32.gmra.mxu0 %v679
        %v753 = vpop.f32.mrf.mxu0
        %v754 = vadd.f32 %v671, %v753
        %v755 = vpop.f32.mrf.mxu0
        %v756 = vadd.f32 %v673, %v755
        %757 = vdwg.mxu0
        %v758 = vsel %vm515, 1, 0
        %v759 = vsel %vm516, 1, 0
        %vm760 = vcmp.eq.s32.totalorder %v758, 1
        %vm761 = vcmp.eq.s32.totalorder %v759, 1
        %762 = vrot.lane.b32.xlu0 %v525, 15
        %v763 = vpop.permute.xlu0 %762
        %764 = vrot.lane.b32.xlu0 %v526, 15
        %v765 = vpop.permute.xlu0 %764
        %766 = vrot.lane.b32.xlu0 %v527, 15
        %v767 = vpop.permute.xlu0 %766
        %768 = vrot.lane.b32.xlu0 %v528, 15
        %v769 = vpop.permute.xlu0 %768
        %770 = vrot.lane.b32.xlu0 %v529, 15
        %v771 = vpop.permute.xlu0 %770
        %772 = vrot.lane.b32.xlu0 %v530, 15
        %v773 = vpop.permute.xlu0 %772
        %vm774 = vcmask 121856
        %v775 = vsel %vm774, %v763, %v765
        %v776 = vsel %vm774, %v765, %v767
        %v777 = vsel %vm774, %v769, %v771
        %v778 = vsel %vm774, %v771, %v773
        %v783 = vsel %vm760, %v775, 0.0
        %v784 = vsel %vm761, %v776, 0.0
        %v785 = vsel %vm760, %v777, 0.0
        %v786 = vsel %vm761, %v778, 0.0
        %s787 = scalar_lea.vmem [#allocation4], 32
        %v788 = vld [vmem:[%s787] sm:$0xff]
        %v789 = vld [vmem:[%s787 + $0x8] sm:$0xff]
        %v791 = vsel %vm583, %v788, 0
        %v794 = vsel %vm583, %v789, 0
        %796 = vmatprep.subr.mxu0 0.0
        %797 = vmatpush1.msra.mxu0 0.0
        %798 = vmatprep.subr.mxu0 0.0
        %799 = vmatpush1.msra.mxu0 0.0
        %800 = vmatprep.subr.mxu0 0.0
        %801 = vmatpush1.msra.mxu0 0.0
        %802 = vmatprep.subr.mxu0 0.0
        %803 = vmatpush1.msra.mxu0 0.0
        %804 = vmatprep.subr.mxu0 0.0
        %805 = vmatpush1.msra.mxu0 0.0
        %806 = vmatprep.subr.mxu0 0.0
        %807 = vmatpush1.msra.mxu0 0.0
        %808 = vmatprep.subr.mxu0 0.0
        %809 = vmatpush1.msra.mxu0 0.0
        %810 = vmatprep.subr.mxu0 0.0
        %811 = vmatpush1.msra.mxu0 0.0
        %812 = vmatprep.subr.mxu0 0.0
        %813 = vmatpush1.msra.mxu0 0.0
        %814 = vmatprep.subr.mxu0 0.0
        %815 = vmatpush1.msra.mxu0 0.0
        %816 = vmatprep.subr.mxu0 0.0
        %817 = vmatpush1.msra.mxu0 0.0
        %818 = vmatprep.subr.mxu0 0.0
        %819 = vmatpush1.msra.mxu0 0.0
        %820 = vmatprep.subr.mxu0 0.0
        %821 = vmatpush1.msra.mxu0 0.0
        %822 = vmatprep.subr.mxu0 0.0
        %823 = vmatpush1.msra.mxu0 0.0
        %824 = vmatprep.subr.mxu0 %v786
        %825 = vmatpush1.msra.mxu0 %v785
        %826 = vmatprep.subr.mxu0 %v784
        %827 = vmatpush1.msra.mxu0 %v783
        %828 = vmatprep.subr.mxu0 0.0
        %829 = vmatpush2.msra.mxu0 0.0
        %830 = vmatprep.subr.mxu0 0.0
        %831 = vmatpush2.msra.mxu0 0.0
        %832 = vmatprep.subr.mxu0 0.0
        %833 = vmatpush2.msra.mxu0 0.0
        %834 = vmatprep.subr.mxu0 0.0
        %835 = vmatpush2.msra.mxu0 0.0
        %836 = vmatprep.subr.mxu0 0.0
        %837 = vmatpush2.msra.mxu0 0.0
        %838 = vmatprep.subr.mxu0 0.0
        %839 = vmatpush2.msra.mxu0 0.0
        %840 = vmatprep.subr.mxu0 0.0
        %841 = vmatpush2.msra.mxu0 0.0
        %842 = vmatprep.subr.mxu0 0.0
        %843 = vmatpush2.msra.mxu0 0.0
        %844 = vmatprep.subr.mxu0 0.0
        %845 = vmatpush2.msra.mxu0 0.0
        %846 = vmatprep.subr.mxu0 0.0
        %847 = vmatpush2.msra.mxu0 0.0
        %848 = vmatprep.subr.mxu0 0.0
        %849 = vmatpush2.msra.mxu0 0.0
        %850 = vmatprep.subr.mxu0 0.0
        %851 = vmatpush2.msra.mxu0 0.0
        %852 = vmatprep.subr.mxu0 0.0
        %853 = vmatpush2.msra.mxu0 0.0
        %854 = vmatprep.subr.mxu0 0.0
        %855 = vmatpush2.msra.mxu0 0.0
        %856 = vmatprep.subr.mxu0 0.0
        %857 = vmatpush2.msra.mxu0 0.0
        %858 = vmatprep.subr.mxu0 0.0
        %859 = vmatpush2.msra.mxu0 0.0
        %860 = vmatprep.mubr.f32.mxu0 0.0
        %861 = vmatmul.mubr.f32.gmra.mxu0 %v791
        %v862 = vpop.f32.mrf.mxu0
        %v863 = vadd.f32 0.0, %v862
        %v864 = vpop.f32.mrf.mxu0
        %v865 = vadd.f32 0.0, %v864
        %866 = vmatprep.mubr.f32.mxu0 0.0
        %867 = vmatmul.mubr.f32.gmra.mxu0 %v794
        %v868 = vpop.f32.mrf.mxu0
        %v869 = vadd.f32 0.0, %v868
        %v870 = vpop.f32.mrf.mxu0
        %v871 = vadd.f32 0.0, %v870
        %872 = vdwg.mxu0
        %v873 = vadd.f32 %v748, %v863
        %v874 = vadd.f32 %v750, %v865
        %v875 = vadd.f32 %v754, %v869
        %v876 = vadd.f32 %v756, %v871
        %877 = vrot.lane.b32.xlu0 %v525, 1
        %v878 = vpop.permute.xlu0 %877
        %879 = vrot.lane.b32.xlu0 %v526, 1
        %v880 = vpop.permute.xlu0 %879
        %881 = vrot.lane.b32.xlu0 %v527, 1
        %v882 = vpop.permute.xlu0 %881
        %883 = vrot.lane.b32.xlu0 %v528, 1
        %v884 = vpop.permute.xlu0 %883
        %885 = vrot.lane.b32.xlu0 %v529, 1
        %v886 = vpop.permute.xlu0 %885
        %887 = vrot.lane.b32.xlu0 %v530, 1
        %v888 = vpop.permute.xlu0 %887
        %vm889 = vcmask 7168
        %v890 = vsel %vm889, %v878, %v880
        %v891 = vsel %vm889, %v880, %v882
        %v892 = vsel %vm889, %v884, %v886
        %v893 = vsel %vm889, %v886, %v888
        %v898 = vsel %vm533, %v890, 0.0
        %v899 = vsel %vm534, %v891, 0.0
        %v900 = vsel %vm533, %v892, 0.0
        %v901 = vsel %vm534, %v893, 0.0
        %s902 = scalar_lea.vmem [#allocation4], 48
        %v903 = vld [vmem:[%s902] sm:$0xff]
        %v904 = vld [vmem:[%s902 + $0x8] sm:$0xff]
        %v906 = vsel %vm583, %v903, 0
        %v909 = vsel %vm583, %v904, 0
        %911 = vmatprep.subr.mxu0 0.0
        %912 = vmatpush1.msra.mxu0 0.0
        %913 = vmatprep.subr.mxu0 0.0
        %914 = vmatpush1.msra.mxu0 0.0
        %915 = vmatprep.subr.mxu0 0.0
        %916 = vmatpush1.msra.mxu0 0.0
        %917 = vmatprep.subr.mxu0 0.0
        %918 = vmatpush1.msra.mxu0 0.0
        %919 = vmatprep.subr.mxu0 0.0
        %920 = vmatpush1.msra.mxu0 0.0
        %921 = vmatprep.subr.mxu0 0.0
        %922 = vmatpush1.msra.mxu0 0.0
        %923 = vmatprep.subr.mxu0 0.0
        %924 = vmatpush1.msra.mxu0 0.0
        %925 = vmatprep.subr.mxu0 0.0
        %926 = vmatpush1.msra.mxu0 0.0
        %927 = vmatprep.subr.mxu0 0.0
        %928 = vmatpush1.msra.mxu0 0.0
        %929 = vmatprep.subr.mxu0 0.0
        %930 = vmatpush1.msra.mxu0 0.0
        %931 = vmatprep.subr.mxu0 0.0
        %932 = vmatpush1.msra.mxu0 0.0
        %933 = vmatprep.subr.mxu0 0.0
        %934 = vmatpush1.msra.mxu0 0.0
        %935 = vmatprep.subr.mxu0 0.0
        %936 = vmatpush1.msra.mxu0 0.0
        %937 = vmatprep.subr.mxu0 0.0
        %938 = vmatpush1.msra.mxu0 0.0
        %939 = vmatprep.subr.mxu0 %v901
        %940 = vmatpush1.msra.mxu0 %v900
        %941 = vmatprep.subr.mxu0 %v899
        %942 = vmatpush1.msra.mxu0 %v898
        %943 = vmatprep.subr.mxu0 0.0
        %944 = vmatpush2.msra.mxu0 0.0
        %945 = vmatprep.subr.mxu0 0.0
        %946 = vmatpush2.msra.mxu0 0.0
        %947 = vmatprep.subr.mxu0 0.0
        %948 = vmatpush2.msra.mxu0 0.0
        %949 = vmatprep.subr.mxu0 0.0
        %950 = vmatpush2.msra.mxu0 0.0
        %951 = vmatprep.subr.mxu0 0.0
        %952 = vmatpush2.msra.mxu0 0.0
        %953 = vmatprep.subr.mxu0 0.0
        %954 = vmatpush2.msra.mxu0 0.0
        %955 = vmatprep.subr.mxu0 0.0
        %956 = vmatpush2.msra.mxu0 0.0
        %957 = vmatprep.subr.mxu0 0.0
        %958 = vmatpush2.msra.mxu0 0.0
        %959 = vmatprep.subr.mxu0 0.0
        %960 = vmatpush2.msra.mxu0 0.0
        %961 = vmatprep.subr.mxu0 0.0
        %962 = vmatpush2.msra.mxu0 0.0
        %963 = vmatprep.subr.mxu0 0.0
        %964 = vmatpush2.msra.mxu0 0.0
        %965 = vmatprep.subr.mxu0 0.0
        %966 = vmatpush2.msra.mxu0 0.0
        %967 = vmatprep.subr.mxu0 0.0
        %968 = vmatpush2.msra.mxu0 0.0
        %969 = vmatprep.subr.mxu0 0.0
        %970 = vmatpush2.msra.mxu0 0.0
        %971 = vmatprep.subr.mxu0 0.0
        %972 = vmatpush2.msra.mxu0 0.0
        %973 = vmatprep.subr.mxu0 0.0
        %974 = vmatpush2.msra.mxu0 0.0
        %975 = vmatprep.mubr.f32.mxu0 0.0
        %976 = vmatmul.mubr.f32.gmra.mxu0 %v906
        %v977 = vpop.f32.mrf.mxu0
        %v978 = vadd.f32 0.0, %v977
        %v979 = vpop.f32.mrf.mxu0
        %v980 = vadd.f32 0.0, %v979
        %981 = vmatprep.mubr.f32.mxu0 0.0
        %982 = vmatmul.mubr.f32.gmra.mxu0 %v909
        %v983 = vpop.f32.mrf.mxu0
        %v984 = vadd.f32 0.0, %v983
        %v985 = vpop.f32.mrf.mxu0
        %v986 = vadd.f32 0.0, %v985
        %987 = vdwg.mxu0
        %v988 = vadd.f32 %v873, %v978
        %v989 = vadd.f32 %v874, %v980
        %v990 = vadd.f32 %v875, %v984
        %v991 = vadd.f32 %v876, %v986
        %s992 = scalar_lea.vmem [#allocation4], 64
        %v993 = vld [vmem:[%s992] sm:$0xff]
        %v994 = vld [vmem:[%s992 + $0x8] sm:$0xff]
        %v996 = vsel %vm583, %v993, 0
        %v999 = vsel %vm583, %v994, 0
        %1001 = vmatprep.subr.mxu0 0.0
        %1002 = vmatpush1.msra.mxu0 0.0
        %1003 = vmatprep.subr.mxu0 0.0
        %1004 = vmatpush1.msra.mxu0 0.0
        %1005 = vmatprep.subr.mxu0 0.0
        %1006 = vmatpush1.msra.mxu0 0.0
        %1007 = vmatprep.subr.mxu0 0.0
        %1008 = vmatpush1.msra.mxu0 0.0
        %1009 = vmatprep.subr.mxu0 0.0
        %1010 = vmatpush1.msra.mxu0 0.0
        %1011 = vmatprep.subr.mxu0 0.0
        %1012 = vmatpush1.msra.mxu0 0.0
        %1013 = vmatprep.subr.mxu0 0.0
        %1014 = vmatpush1.msra.mxu0 0.0
        %1015 = vmatprep.subr.mxu0 0.0
        %1016 = vmatpush1.msra.mxu0 0.0
        %1017 = vmatprep.subr.mxu0 0.0
        %1018 = vmatpush1.msra.mxu0 0.0
        %1019 = vmatprep.subr.mxu0 0.0
        %1020 = vmatpush1.msra.mxu0 0.0
        %1021 = vmatprep.subr.mxu0 0.0
        %1022 = vmatpush1.msra.mxu0 0.0
        %1023 = vmatprep.subr.mxu0 0.0
        %1024 = vmatpush1.msra.mxu0 0.0
        %1025 = vmatprep.subr.mxu0 0.0
        %1026 = vmatpush1.msra.mxu0 0.0
        %1027 = vmatprep.subr.mxu0 0.0
        %1028 = vmatpush1.msra.mxu0 0.0
        %1029 = vmatprep.subr.mxu0 %v473
        %1030 = vmatpush1.msra.mxu0 %v472
        %1031 = vmatprep.subr.mxu0 %v471
        %1032 = vmatpush1.msra.mxu0 %v470
        %1033 = vmatprep.subr.mxu0 0.0
        %1034 = vmatpush2.msra.mxu0 0.0
        %1035 = vmatprep.subr.mxu0 0.0
        %1036 = vmatpush2.msra.mxu0 0.0
        %1037 = vmatprep.subr.mxu0 0.0
        %1038 = vmatpush2.msra.mxu0 0.0
        %1039 = vmatprep.subr.mxu0 0.0
        %1040 = vmatpush2.msra.mxu0 0.0
        %1041 = vmatprep.subr.mxu0 0.0
        %1042 = vmatpush2.msra.mxu0 0.0
        %1043 = vmatprep.subr.mxu0 0.0
        %1044 = vmatpush2.msra.mxu0 0.0
        %1045 = vmatprep.subr.mxu0 0.0
        %1046 = vmatpush2.msra.mxu0 0.0
        %1047 = vmatprep.subr.mxu0 0.0
        %1048 = vmatpush2.msra.mxu0 0.0
        %1049 = vmatprep.subr.mxu0 0.0
        %1050 = vmatpush2.msra.mxu0 0.0
        %1051 = vmatprep.subr.mxu0 0.0
        %1052 = vmatpush2.msra.mxu0 0.0
        %1053 = vmatprep.subr.mxu0 0.0
        %1054 = vmatpush2.msra.mxu0 0.0
        %1055 = vmatprep.subr.mxu0 0.0
        %1056 = vmatpush2.msra.mxu0 0.0
        %1057 = vmatprep.subr.mxu0 0.0
        %1058 = vmatpush2.msra.mxu0 0.0
        %1059 = vmatprep.subr.mxu0 0.0
        %1060 = vmatpush2.msra.mxu0 0.0
        %1061 = vmatprep.subr.mxu0 0.0
        %1062 = vmatpush2.msra.mxu0 0.0
        %1063 = vmatprep.subr.mxu0 0.0
        %1064 = vmatpush2.msra.mxu0 0.0
        %1065 = vmatprep.mubr.f32.mxu0 0.0
        %1066 = vmatmul.mubr.f32.gmra.mxu0 %v996
        %v1067 = vpop.f32.mrf.mxu0
        %v1068 = vadd.f32 0.0, %v1067
        %v1069 = vpop.f32.mrf.mxu0
        %v1070 = vadd.f32 0.0, %v1069
        %1071 = vmatprep.mubr.f32.mxu0 0.0
        %1072 = vmatmul.mubr.f32.gmra.mxu0 %v999
        %v1073 = vpop.f32.mrf.mxu0
        %v1074 = vadd.f32 0.0, %v1073
        %v1075 = vpop.f32.mrf.mxu0
        %v1076 = vadd.f32 0.0, %v1075
        %1077 = vdwg.mxu0
        %v1078 = vadd.f32 %v988, %v1068
        %v1079 = vadd.f32 %v989, %v1070
        %v1080 = vadd.f32 %v990, %v1074
        %v1081 = vadd.f32 %v991, %v1076
        %v1082 = vld [vmem:[#allocation2 + $0x8] sm:$0xff]
        %v1083 = vld [vmem:[#allocation2 + $0x10] sm:$0xff]
        %v1084 = vld [vmem:[#allocation2 + $0x18] sm:$0xff]
        %v1085 = vld [vmem:[#allocation2 + $0x28] sm:$0xff]
        %v1086 = vld [vmem:[#allocation2 + $0x30] sm:$0xff]
        %v1087 = vld [vmem:[#allocation2 + $0x38] sm:$0xff]
        %1094 = vrot.lane.b32.xlu0 %v1082, 127
        %v1095 = vpop.permute.xlu0 %1094
        %1096 = vrot.lane.b32.xlu0 %v1083, 127
        %v1097 = vpop.permute.xlu0 %1096
        %1098 = vrot.lane.b32.xlu0 %v1084, 127
        %v1099 = vpop.permute.xlu0 %1098
        %1100 = vrot.lane.b32.xlu0 %v1085, 127
        %v1101 = vpop.permute.xlu0 %1100
        %1102 = vrot.lane.b32.xlu0 %v1086, 127
        %v1103 = vpop.permute.xlu0 %1102
        %1104 = vrot.lane.b32.xlu0 %v1087, 127
        %v1105 = vpop.permute.xlu0 %1104
        %vm1106 = vcmask 1039360
        %v1107 = vsel %vm1106, %v1095, %v1097
        %v1108 = vsel %vm1106, %v1097, %v1099
        %v1109 = vsel %vm1106, %v1101, %v1103
        %v1110 = vsel %vm1106, %v1103, %v1105
        %v1115 = vsel %vm760, %v1107, 0.0
        %v1116 = vsel %vm761, %v1108, 0.0
        %v1117 = vsel %vm760, %v1109, 0.0
        %v1118 = vsel %vm761, %v1110, 0.0
        %s1119 = scalar_lea.vmem [#allocation4], 80
        %v1120 = vld [vmem:[%s1119] sm:$0xff]
        %v1121 = vld [vmem:[%s1119 + $0x8] sm:$0xff]
        %v1123 = vsel %vm583, %v1120, 0
        %v1126 = vsel %vm583, %v1121, 0
        %1128 = vmatprep.subr.mxu0 0.0
        %1129 = vmatpush1.msra.mxu0 0.0
        %1130 = vmatprep.subr.mxu0 0.0
        %1131 = vmatpush1.msra.mxu0 0.0
        %1132 = vmatprep.subr.mxu0 0.0
        %1133 = vmatpush1.msra.mxu0 0.0
        %1134 = vmatprep.subr.mxu0 0.0
        %1135 = vmatpush1.msra.mxu0 0.0
        %1136 = vmatprep.subr.mxu0 0.0
        %1137 = vmatpush1.msra.mxu0 0.0
        %1138 = vmatprep.subr.mxu0 0.0
        %1139 = vmatpush1.msra.mxu0 0.0
        %1140 = vmatprep.subr.mxu0 0.0
        %1141 = vmatpush1.msra.mxu0 0.0
        %1142 = vmatprep.subr.mxu0 0.0
        %1143 = vmatpush1.msra.mxu0 0.0
        %1144 = vmatprep.subr.mxu0 0.0
        %1145 = vmatpush1.msra.mxu0 0.0
        %1146 = vmatprep.subr.mxu0 0.0
        %1147 = vmatpush1.msra.mxu0 0.0
        %1148 = vmatprep.subr.mxu0 0.0
        %1149 = vmatpush1.msra.mxu0 0.0
        %1150 = vmatprep.subr.mxu0 0.0
        %1151 = vmatpush1.msra.mxu0 0.0
        %1152 = vmatprep.subr.mxu0 0.0
        %1153 = vmatpush1.msra.mxu0 0.0
        %1154 = vmatprep.subr.mxu0 0.0
        %1155 = vmatpush1.msra.mxu0 0.0
        %1156 = vmatprep.subr.mxu0 %v1118
        %1157 = vmatpush1.msra.mxu0 %v1117
        %1158 = vmatprep.subr.mxu0 %v1116
        %1159 = vmatpush1.msra.mxu0 %v1115
        %1160 = vmatprep.subr.mxu0 0.0
        %1161 = vmatpush2.msra.mxu0 0.0
        %1162 = vmatprep.subr.mxu0 0.0
        %1163 = vmatpush2.msra.mxu0 0.0
        %1164 = vmatprep.subr.mxu0 0.0
        %1165 = vmatpush2.msra.mxu0 0.0
        %1166 = vmatprep.subr.mxu0 0.0
        %1167 = vmatpush2.msra.mxu0 0.0
        %1168 = vmatprep.subr.mxu0 0.0
        %1169 = vmatpush2.msra.mxu0 0.0
        %1170 = vmatprep.subr.mxu0 0.0
        %1171 = vmatpush2.msra.mxu0 0.0
        %1172 = vmatprep.subr.mxu0 0.0
        %1173 = vmatpush2.msra.mxu0 0.0
        %1174 = vmatprep.subr.mxu0 0.0
        %1175 = vmatpush2.msra.mxu0 0.0
        %1176 = vmatprep.subr.mxu0 0.0
        %1177 = vmatpush2.msra.mxu0 0.0
        %1178 = vmatprep.subr.mxu0 0.0
        %1179 = vmatpush2.msra.mxu0 0.0
        %1180 = vmatprep.subr.mxu0 0.0
        %1181 = vmatpush2.msra.mxu0 0.0
        %1182 = vmatprep.subr.mxu0 0.0
        %1183 = vmatpush2.msra.mxu0 0.0
        %1184 = vmatprep.subr.mxu0 0.0
        %1185 = vmatpush2.msra.mxu0 0.0
        %1186 = vmatprep.subr.mxu0 0.0
        %1187 = vmatpush2.msra.mxu0 0.0
        %1188 = vmatprep.subr.mxu0 0.0
        %1189 = vmatpush2.msra.mxu0 0.0
        %1190 = vmatprep.subr.mxu0 0.0
        %1191 = vmatpush2.msra.mxu0 0.0
        %1192 = vmatprep.mubr.f32.mxu0 0.0
        %1193 = vmatmul.mubr.f32.gmra.mxu0 %v1123
        %v1194 = vpop.f32.mrf.mxu0
        %v1195 = vadd.f32 0.0, %v1194
        %v1196 = vpop.f32.mrf.mxu0
        %v1197 = vadd.f32 0.0, %v1196
        %1198 = vmatprep.mubr.f32.mxu0 0.0
        %1199 = vmatmul.mubr.f32.gmra.mxu0 %v1126
        %v1200 = vpop.f32.mrf.mxu0
        %v1201 = vadd.f32 0.0, %v1200
        %v1202 = vpop.f32.mrf.mxu0
        %v1203 = vadd.f32 0.0, %v1202
        %1204 = vdwg.mxu0
        %v1205 = vadd.f32 %v1078, %v1195
        %v1206 = vadd.f32 %v1079, %v1197
        %v1207 = vadd.f32 %v1080, %v1201
        %v1208 = vadd.f32 %v1081, %v1203
        %1209 = vrot.lane.b32.xlu0 %v1082, 113
        %v1210 = vpop.permute.xlu0 %1209
        %1211 = vrot.lane.b32.xlu0 %v1083, 113
        %v1212 = vpop.permute.xlu0 %1211
        %1213 = vrot.lane.b32.xlu0 %v1084, 113
        %v1214 = vpop.permute.xlu0 %1213
        %1215 = vrot.lane.b32.xlu0 %v1085, 113
        %v1216 = vpop.permute.xlu0 %1215
        %1217 = vrot.lane.b32.xlu0 %v1086, 113
        %v1218 = vpop.permute.xlu0 %1217
        %1219 = vrot.lane.b32.xlu0 %v1087, 113
        %v1220 = vpop.permute.xlu0 %1219
        %vm1221 = vcmask 924672
        %v1222 = vsel %vm1221, %v1210, %v1212
        %v1223 = vsel %vm1221, %v1212, %v1214
        %v1224 = vsel %vm1221, %v1216, %v1218
        %v1225 = vsel %vm1221, %v1218, %v1220
        %v1230 = vsel %vm533, %v1222, 0.0
        %v1231 = vsel %vm534, %v1223, 0.0
        %v1232 = vsel %vm533, %v1224, 0.0
        %v1233 = vsel %vm534, %v1225, 0.0
        %s1234 = scalar_lea.vmem [#allocation4], 96
        %v1235 = vld [vmem:[%s1234] sm:$0xff]
        %v1236 = vld [vmem:[%s1234 + $0x8] sm:$0xff]
        %v1238 = vsel %vm583, %v1235, 0
        %v1241 = vsel %vm583, %v1236, 0
        %1243 = vmatprep.subr.mxu0 0.0
        %1244 = vmatpush1.msra.mxu0 0.0
        %1245 = vmatprep.subr.mxu0 0.0
        %1246 = vmatpush1.msra.mxu0 0.0
        %1247 = vmatprep.subr.mxu0 0.0
        %1248 = vmatpush1.msra.mxu0 0.0
        %1249 = vmatprep.subr.mxu0 0.0
        %1250 = vmatpush1.msra.mxu0 0.0
        %1251 = vmatprep.subr.mxu0 0.0
        %1252 = vmatpush1.msra.mxu0 0.0
        %1253 = vmatprep.subr.mxu0 0.0
        %1254 = vmatpush1.msra.mxu0 0.0
        %1255 = vmatprep.subr.mxu0 0.0
        %1256 = vmatpush1.msra.mxu0 0.0
        %1257 = vmatprep.subr.mxu0 0.0
        %1258 = vmatpush1.msra.mxu0 0.0
        %1259 = vmatprep.subr.mxu0 0.0
        %1260 = vmatpush1.msra.mxu0 0.0
        %1261 = vmatprep.subr.mxu0 0.0
        %1262 = vmatpush1.msra.mxu0 0.0
        %1263 = vmatprep.subr.mxu0 0.0
        %1264 = vmatpush1.msra.mxu0 0.0
        %1265 = vmatprep.subr.mxu0 0.0
        %1266 = vmatpush1.msra.mxu0 0.0
        %1267 = vmatprep.subr.mxu0 0.0
        %1268 = vmatpush1.msra.mxu0 0.0
        %1269 = vmatprep.subr.mxu0 0.0
        %1270 = vmatpush1.msra.mxu0 0.0
        %1271 = vmatprep.subr.mxu0 %v1233
        %1272 = vmatpush1.msra.mxu0 %v1232
        %1273 = vmatprep.subr.mxu0 %v1231
        %1274 = vmatpush1.msra.mxu0 %v1230
        %1275 = vmatprep.subr.mxu0 0.0
        %1276 = vmatpush2.msra.mxu0 0.0
        %1277 = vmatprep.subr.mxu0 0.0
        %1278 = vmatpush2.msra.mxu0 0.0
        %1279 = vmatprep.subr.mxu0 0.0
        %1280 = vmatpush2.msra.mxu0 0.0
        %1281 = vmatprep.subr.mxu0 0.0
        %1282 = vmatpush2.msra.mxu0 0.0
        %1283 = vmatprep.subr.mxu0 0.0
        %1284 = vmatpush2.msra.mxu0 0.0
        %1285 = vmatprep.subr.mxu0 0.0
        %1286 = vmatpush2.msra.mxu0 0.0
        %1287 = vmatprep.subr.mxu0 0.0
        %1288 = vmatpush2.msra.mxu0 0.0
        %1289 = vmatprep.subr.mxu0 0.0
        %1290 = vmatpush2.msra.mxu0 0.0
        %1291 = vmatprep.subr.mxu0 0.0
        %1292 = vmatpush2.msra.mxu0 0.0
        %1293 = vmatprep.subr.mxu0 0.0
        %1294 = vmatpush2.msra.mxu0 0.0
        %1295 = vmatprep.subr.mxu0 0.0
        %1296 = vmatpush2.msra.mxu0 0.0
        %1297 = vmatprep.subr.mxu0 0.0
        %1298 = vmatpush2.msra.mxu0 0.0
        %1299 = vmatprep.subr.mxu0 0.0
        %1300 = vmatpush2.msra.mxu0 0.0
        %1301 = vmatprep.subr.mxu0 0.0
        %1302 = vmatpush2.msra.mxu0 0.0
        %1303 = vmatprep.subr.mxu0 0.0
        %1304 = vmatpush2.msra.mxu0 0.0
        %1305 = vmatprep.subr.mxu0 0.0
        %1306 = vmatpush2.msra.mxu0 0.0
        %1307 = vmatprep.mubr.f32.mxu0 0.0
        %1308 = vmatmul.mubr.f32.gmra.mxu0 %v1238
        %v1309 = vpop.f32.mrf.mxu0
        %v1310 = vadd.f32 0.0, %v1309
        %v1311 = vpop.f32.mrf.mxu0
        %v1312 = vadd.f32 0.0, %v1311
        %1313 = vmatprep.mubr.f32.mxu0 0.0
        %1314 = vmatmul.mubr.f32.gmra.mxu0 %v1241
        %v1315 = vpop.f32.mrf.mxu0
        %v1316 = vadd.f32 0.0, %v1315
        %v1317 = vpop.f32.mrf.mxu0
        %v1318 = vadd.f32 0.0, %v1317
        %1319 = vdwg.mxu0
        %v1320 = vadd.f32 %v1205, %v1310
        %v1321 = vadd.f32 %v1206, %v1312
        %v1322 = vadd.f32 %v1207, %v1316
        %v1323 = vadd.f32 %v1208, %v1318
        %s1324 = scalar_lea.vmem [#allocation4], 112
        %v1325 = vld [vmem:[%s1324] sm:$0xff]
        %v1326 = vld [vmem:[%s1324 + $0x8] sm:$0xff]
        %1327 = vrot.lane.b32.xlu0 %v1082, 112
        %v1328 = vpop.permute.xlu0 %1327
        %1329 = vrot.lane.b32.xlu0 %v1083, 112
        %v1330 = vpop.permute.xlu0 %1329
        %1331 = vrot.lane.b32.xlu0 %v1084, 112
        %v1332 = vpop.permute.xlu0 %1331
        %1333 = vrot.lane.b32.xlu0 %v1085, 112
        %v1334 = vpop.permute.xlu0 %1333
        %1335 = vrot.lane.b32.xlu0 %v1086, 112
        %v1336 = vpop.permute.xlu0 %1335
        %1337 = vrot.lane.b32.xlu0 %v1087, 112
        %v1338 = vpop.permute.xlu0 %1337
        %vm1339 = vcmask 916480
        %v1340 = vsel %vm1339, %v1328, %v1330
        %v1341 = vsel %vm1339, %v1330, %v1332
        %v1342 = vsel %vm1339, %v1334, %v1336
        %v1343 = vsel %vm1339, %v1336, %v1338
        %v1349 = vsel %vm583, %v1325, 0
        %v1352 = vsel %vm583, %v1326, 0
        %1354 = vmatprep.subr.mxu0 0.0
        %1355 = vmatpush1.msra.mxu0 0.0
        %1356 = vmatprep.subr.mxu0 0.0
        %1357 = vmatpush1.msra.mxu0 0.0
        %1358 = vmatprep.subr.mxu0 0.0
        %1359 = vmatpush1.msra.mxu0 0.0
        %1360 = vmatprep.subr.mxu0 0.0
        %1361 = vmatpush1.msra.mxu0 0.0
        %1362 = vmatprep.subr.mxu0 0.0
        %1363 = vmatpush1.msra.mxu0 0.0
        %1364 = vmatprep.subr.mxu0 0.0
        %1365 = vmatpush1.msra.mxu0 0.0
        %1366 = vmatprep.subr.mxu0 0.0
        %1367 = vmatpush1.msra.mxu0 0.0
        %1368 = vmatprep.subr.mxu0 0.0
        %1369 = vmatpush1.msra.mxu0 0.0
        %1370 = vmatprep.subr.mxu0 0.0
        %1371 = vmatpush1.msra.mxu0 0.0
        %1372 = vmatprep.subr.mxu0 0.0
        %1373 = vmatpush1.msra.mxu0 0.0
        %1374 = vmatprep.subr.mxu0 0.0
        %1375 = vmatpush1.msra.mxu0 0.0
        %1376 = vmatprep.subr.mxu0 0.0
        %1377 = vmatpush1.msra.mxu0 0.0
        %1378 = vmatprep.subr.mxu0 0.0
        %1379 = vmatpush1.msra.mxu0 0.0
        %1380 = vmatprep.subr.mxu0 0.0
        %1381 = vmatpush1.msra.mxu0 0.0
        %1382 = vmatprep.subr.mxu0 %v1343
        %1383 = vmatpush1.msra.mxu0 %v1342
        %1384 = vmatprep.subr.mxu0 %v1341
        %1385 = vmatpush1.msra.mxu0 %v1340
        %1386 = vmatprep.subr.mxu0 0.0
        %1387 = vmatpush2.msra.mxu0 0.0
        %1388 = vmatprep.subr.mxu0 0.0
        %1389 = vmatpush2.msra.mxu0 0.0
        %1390 = vmatprep.subr.mxu0 0.0
        %1391 = vmatpush2.msra.mxu0 0.0
        %1392 = vmatprep.subr.mxu0 0.0
        %1393 = vmatpush2.msra.mxu0 0.0
        %1394 = vmatprep.subr.mxu0 0.0
        %1395 = vmatpush2.msra.mxu0 0.0
        %1396 = vmatprep.subr.mxu0 0.0
        %1397 = vmatpush2.msra.mxu0 0.0
        %1398 = vmatprep.subr.mxu0 0.0
        %1399 = vmatpush2.msra.mxu0 0.0
        %1400 = vmatprep.subr.mxu0 0.0
        %1401 = vmatpush2.msra.mxu0 0.0
        %1402 = vmatprep.subr.mxu0 0.0
        %1403 = vmatpush2.msra.mxu0 0.0
        %1404 = vmatprep.subr.mxu0 0.0
        %1405 = vmatpush2.msra.mxu0 0.0
        %1406 = vmatprep.subr.mxu0 0.0
        %1407 = vmatpush2.msra.mxu0 0.0
        %1408 = vmatprep.subr.mxu0 0.0
        %1409 = vmatpush2.msra.mxu0 0.0
        %1410 = vmatprep.subr.mxu0 0.0
        %1411 = vmatpush2.msra.mxu0 0.0
        %1412 = vmatprep.subr.mxu0 0.0
        %1413 = vmatpush2.msra.mxu0 0.0
        %1414 = vmatprep.subr.mxu0 0.0
        %1415 = vmatpush2.msra.mxu0 0.0
        %1416 = vmatprep.subr.mxu0 0.0
        %1417 = vmatpush2.msra.mxu0 0.0
        %1418 = vmatprep.mubr.f32.mxu0 0.0
        %1419 = vmatmul.mubr.f32.gmra.mxu0 %v1349
        %v1420 = vpop.f32.mrf.mxu0
        %v1421 = vadd.f32 0.0, %v1420
        %v1422 = vpop.f32.mrf.mxu0
        %v1423 = vadd.f32 0.0, %v1422
        %1424 = vmatprep.mubr.f32.mxu0 0.0
        %1425 = vmatmul.mubr.f32.gmra.mxu0 %v1352
        %v1426 = vpop.f32.mrf.mxu0
        %v1427 = vadd.f32 0.0, %v1426
        %v1428 = vpop.f32.mrf.mxu0
        %v1429 = vadd.f32 0.0, %v1428
        %1430 = vdwg.mxu0
        %v1431 = vadd.f32 %v1320, %v1421
        %v1432 = vadd.f32 %v1321, %v1423
        %v1433 = vadd.f32 %v1322, %v1427
        %v1434 = vadd.f32 %v1323, %v1429
        %1435 = vrot.lane.b32.xlu0 %v1082, 111
        %v1436 = vpop.permute.xlu0 %1435
        %1437 = vrot.lane.b32.xlu0 %v1083, 111
        %v1438 = vpop.permute.xlu0 %1437
        %1439 = vrot.lane.b32.xlu0 %v1084, 111
        %v1440 = vpop.permute.xlu0 %1439
        %1441 = vrot.lane.b32.xlu0 %v1085, 111
        %v1442 = vpop.permute.xlu0 %1441
        %1443 = vrot.lane.b32.xlu0 %v1086, 111
        %v1444 = vpop.permute.xlu0 %1443
        %1445 = vrot.lane.b32.xlu0 %v1087, 111
        %v1446 = vpop.permute.xlu0 %1445
        %vm1447 = vcmask 908288
        %v1448 = vsel %vm1447, %v1436, %v1438
        %v1449 = vsel %vm1447, %v1438, %v1440
        %v1450 = vsel %vm1447, %v1442, %v1444
        %v1451 = vsel %vm1447, %v1444, %v1446
        %v1456 = vsel %vm760, %v1448, 0.0
        %v1457 = vsel %vm761, %v1449, 0.0
        %v1458 = vsel %vm760, %v1450, 0.0
        %v1459 = vsel %vm761, %v1451, 0.0
        %s1460 = scalar_lea.vmem [#allocation4], 128
        %v1461 = vld [vmem:[%s1460] sm:$0xff]
        %v1462 = vld [vmem:[%s1460 + $0x8] sm:$0xff]
        %v1464 = vsel %vm583, %v1461, 0
        %v1467 = vsel %vm583, %v1462, 0
        %1469 = vmatprep.subr.mxu0 0.0
        %1470 = vmatpush1.msra.mxu0 0.0
        %1471 = vmatprep.subr.mxu0 0.0
        %1472 = vmatpush1.msra.mxu0 0.0
        %1473 = vmatprep.subr.mxu0 0.0
        %1474 = vmatpush1.msra.mxu0 0.0
        %1475 = vmatprep.subr.mxu0 0.0
        %1476 = vmatpush1.msra.mxu0 0.0
        %1477 = vmatprep.subr.mxu0 0.0
        %1478 = vmatpush1.msra.mxu0 0.0
        %1479 = vmatprep.subr.mxu0 0.0
        %1480 = vmatpush1.msra.mxu0 0.0
        %1481 = vmatprep.subr.mxu0 0.0
        %1482 = vmatpush1.msra.mxu0 0.0
        %1483 = vmatprep.subr.mxu0 0.0
        %1484 = vmatpush1.msra.mxu0 0.0
        %1485 = vmatprep.subr.mxu0 0.0
        %1486 = vmatpush1.msra.mxu0 0.0
        %1487 = vmatprep.subr.mxu0 0.0
        %1488 = vmatpush1.msra.mxu0 0.0
        %1489 = vmatprep.subr.mxu0 0.0
        %1490 = vmatpush1.msra.mxu0 0.0
        %1491 = vmatprep.subr.mxu0 0.0
        %1492 = vmatpush1.msra.mxu0 0.0
        %1493 = vmatprep.subr.mxu0 0.0
        %1494 = vmatpush1.msra.mxu0 0.0
        %1495 = vmatprep.subr.mxu0 0.0
        %1496 = vmatpush1.msra.mxu0 0.0
        %1497 = vmatprep.subr.mxu0 %v1459
        %1498 = vmatpush1.msra.mxu0 %v1458
        %1499 = vmatprep.subr.mxu0 %v1457
        %1500 = vmatpush1.msra.mxu0 %v1456
        %1501 = vmatprep.subr.mxu0 0.0
        %1502 = vmatpush2.msra.mxu0 0.0
        %1503 = vmatprep.subr.mxu0 0.0
        %1504 = vmatpush2.msra.mxu0 0.0
        %1505 = vmatprep.subr.mxu0 0.0
        %1506 = vmatpush2.msra.mxu0 0.0
        %1507 = vmatprep.subr.mxu0 0.0
        %1508 = vmatpush2.msra.mxu0 0.0
        %1509 = vmatprep.subr.mxu0 0.0
        %1510 = vmatpush2.msra.mxu0 0.0
        %1511 = vmatprep.subr.mxu0 0.0
        %1512 = vmatpush2.msra.mxu0 0.0
        %1513 = vmatprep.subr.mxu0 0.0
        %1514 = vmatpush2.msra.mxu0 0.0
        %1515 = vmatprep.subr.mxu0 0.0
        %1516 = vmatpush2.msra.mxu0 0.0
        %1517 = vmatprep.subr.mxu0 0.0
        %1518 = vmatpush2.msra.mxu0 0.0
        %1519 = vmatprep.subr.mxu0 0.0
        %1520 = vmatpush2.msra.mxu0 0.0
        %1521 = vmatprep.subr.mxu0 0.0
        %1522 = vmatpush2.msra.mxu0 0.0
        %1523 = vmatprep.subr.mxu0 0.0
        %1524 = vmatpush2.msra.mxu0 0.0
        %1525 = vmatprep.subr.mxu0 0.0
        %1526 = vmatpush2.msra.mxu0 0.0
        %1527 = vmatprep.subr.mxu0 0.0
        %1528 = vmatpush2.msra.mxu0 0.0
        %1529 = vmatprep.subr.mxu0 0.0
        %1530 = vmatpush2.msra.mxu0 0.0
        %1531 = vmatprep.subr.mxu0 0.0
        %1532 = vmatpush2.msra.mxu0 0.0
        %1533 = vmatprep.mubr.f32.mxu0 0.0
        %1534 = vmatmul.mubr.f32.gmra.mxu0 %v1464
        %v1535 = vpop.f32.mrf.mxu0
        %v1536 = vadd.f32 0.0, %v1535
        %v1537 = vpop.f32.mrf.mxu0
        %v1538 = vadd.f32 0.0, %v1537
        %1539 = vmatprep.mubr.f32.mxu0 0.0
        %1540 = vmatmul.mubr.f32.gmra.mxu0 %v1467
        %v1541 = vpop.f32.mrf.mxu0
        %v1542 = vadd.f32 0.0, %v1541
        %v1543 = vpop.f32.mrf.mxu0
        %v1544 = vadd.f32 0.0, %v1543
        %1545 = vdwg.mxu0
        %v1546 = vadd.f32 %v1431, %v1536
        %v1547 = vadd.f32 %v1432, %v1538
        %v1548 = vadd.f32 %v1433, %v1542
        %v1549 = vadd.f32 %v1434, %v1544
        %v1550 = vld [vmem:[%s2] sm:$0xff]
        %v1551 = vld [vmem:[%s2 + $0x8] sm:$0xff]
        %1553 = vset.pattern.permute.xlu0 0
        %1554 = vperm.xlu0 %1553, %v1550
        %v1555 = vpop.permute.xlu0 %1554
        %1558 = vset.pattern.permute.xlu0 0
        %1559 = vperm.xlu0 %1558, %v1551
        %v1560 = vpop.permute.xlu0 %1559
        %v1562 = vadd.f32 %v1546, %v1555
        %v1563 = vadd.f32 %v1547, %v1555
        %v1564 = vadd.f32 %v1548, %v1560
        %v1565 = vadd.f32 %v1549, %v1560
        %v1566 = vmax.f32 %v1562, 0.0
        %v1567 = vmax.f32 %v1563, 0.0
        %v1568 = vmax.f32 %v1564, 0.0
        %v1569 = vmax.f32 %v1565, 0.0
        %v1570 = vadd.f32 %v1566, %v470
        %v1571 = vadd.f32 %v1567, %v471
        %v1572 = vadd.f32 %v1568, %v472
        %v1573 = vadd.f32 %v1569, %v473
        %1574 = vst [vmem:[#allocation2 + $0x8] sm:$0xff] %v1570
        %1575 = vst [vmem:[#allocation2 + $0x10] sm:$0xff] %v1571
        %1576 = vst [vmem:[#allocation2 + $0x28] sm:$0xff] %v1572
        %1577 = vst [vmem:[#allocation2 + $0x30] sm:$0xff] %v1573
        %v1578 = vld [vmem:[#allocation2] sm:$0xff]
        %v1579 = vld [vmem:[#allocation2 + $0x8] sm:$0xff]
        %v1580 = vld [vmem:[#allocation2 + $0x10] sm:$0xff]
        %v1581 = vld [vmem:[#allocation2 + $0x20] sm:$0xff]
        %v1582 = vld [vmem:[#allocation2 + $0x28] sm:$0xff]
        %v1583 = vld [vmem:[#allocation2 + $0x30] sm:$0xff]
        %1590 = vrot.lane.b32.xlu0 %v1578, 17
        %v1591 = vpop.permute.xlu0 %1590
        %1592 = vrot.lane.b32.xlu0 %v1579, 17
        %v1593 = vpop.permute.xlu0 %1592
        %1594 = vrot.lane.b32.xlu0 %v1580, 17
        %v1595 = vpop.permute.xlu0 %1594
        %1596 = vrot.lane.b32.xlu0 %v1581, 17
        %v1597 = vpop.permute.xlu0 %1596
        %1598 = vrot.lane.b32.xlu0 %v1582, 17
        %v1599 = vpop.permute.xlu0 %1598
        %1600 = vrot.lane.b32.xlu0 %v1583, 17
        %v1601 = vpop.permute.xlu0 %1600
        %v1602 = vsel %vm553, %v1591, %v1593
        %v1603 = vsel %vm553, %v1593, %v1595
        %v1604 = vsel %vm553, %v1597, %v1599
        %v1605 = vsel %vm553, %v1599, %v1601
        %v1610 = vsel %vm533, %v1602, 0.0
        %v1611 = vsel %vm534, %v1603, 0.0
        %v1612 = vsel %vm533, %v1604, 0.0
        %v1613 = vsel %vm534, %v1605, 0.0
        %v1614 = vld [vmem:[#allocation7] sm:$0xff]
        %v1615 = vld [vmem:[#allocation7 + $0x8] sm:$0xff]
        %s1616 = scalar_lea.vmem [#allocation7], 16
        %v1617 = vld [vmem:[%s1616] sm:$0xff]
        %v1618 = vld [vmem:[%s1616 + $0x8] sm:$0xff]
        %1619 = vrot.lane.b32.xlu0 %v1578, 16
        %v1620 = vpop.permute.xlu0 %1619
        %1621 = vrot.lane.b32.xlu0 %v1579, 16
        %v1622 = vpop.permute.xlu0 %1621
        %1623 = vrot.lane.b32.xlu0 %v1580, 16
        %v1624 = vpop.permute.xlu0 %1623
        %1625 = vrot.lane.b32.xlu0 %v1581, 16
        %v1626 = vpop.permute.xlu0 %1625
        %1627 = vrot.lane.b32.xlu0 %v1582, 16
        %v1628 = vpop.permute.xlu0 %1627
        %1629 = vrot.lane.b32.xlu0 %v1583, 16
        %v1630 = vpop.permute.xlu0 %1629
        %v1631 = vsel %vm583, %v1620, %v1622
        %v1632 = vsel %vm583, %v1622, %v1624
        %v1633 = vsel %vm583, %v1626, %v1628
        %v1634 = vsel %vm583, %v1628, %v1630
        %v1640 = vsel %vm583, %v1617, 0
        %v1643 = vsel %vm583, %v1618, 0
        %1645 = vmatprep.subr.mxu0 0.0
        %1646 = vmatpush1.msra.mxu0 0.0
        %1647 = vmatprep.subr.mxu0 0.0
        %1648 = vmatpush1.msra.mxu0 0.0
        %1649 = vmatprep.subr.mxu0 0.0
        %1650 = vmatpush1.msra.mxu0 0.0
        %1651 = vmatprep.subr.mxu0 0.0
        %1652 = vmatpush1.msra.mxu0 0.0
        %1653 = vmatprep.subr.mxu0 0.0
        %1654 = vmatpush1.msra.mxu0 0.0
        %1655 = vmatprep.subr.mxu0 0.0
        %1656 = vmatpush1.msra.mxu0 0.0
        %1657 = vmatprep.subr.mxu0 0.0
        %1658 = vmatpush1.msra.mxu0 0.0
        %1659 = vmatprep.subr.mxu0 0.0
        %1660 = vmatpush1.msra.mxu0 0.0
        %1661 = vmatprep.subr.mxu0 0.0
        %1662 = vmatpush1.msra.mxu0 0.0
        %1663 = vmatprep.subr.mxu0 0.0
        %1664 = vmatpush1.msra.mxu0 0.0
        %1665 = vmatprep.subr.mxu0 0.0
        %1666 = vmatpush1.msra.mxu0 0.0
        %1667 = vmatprep.subr.mxu0 0.0
        %1668 = vmatpush1.msra.mxu0 0.0
        %1669 = vmatprep.subr.mxu0 0.0
        %1670 = vmatpush1.msra.mxu0 0.0
        %1671 = vmatprep.subr.mxu0 0.0
        %1672 = vmatpush1.msra.mxu0 0.0
        %1673 = vmatprep.subr.mxu0 %v1634
        %1674 = vmatpush1.msra.mxu0 %v1633
        %1675 = vmatprep.subr.mxu0 %v1632
        %1676 = vmatpush1.msra.mxu0 %v1631
        %1677 = vmatprep.subr.mxu0 0.0
        %1678 = vmatpush2.msra.mxu0 0.0
        %1679 = vmatprep.subr.mxu0 0.0
        %1680 = vmatpush2.msra.mxu0 0.0
        %1681 = vmatprep.subr.mxu0 0.0
        %1682 = vmatpush2.msra.mxu0 0.0
        %1683 = vmatprep.subr.mxu0 0.0
        %1684 = vmatpush2.msra.mxu0 0.0
        %1685 = vmatprep.subr.mxu0 0.0
        %1686 = vmatpush2.msra.mxu0 0.0
        %1687 = vmatprep.subr.mxu0 0.0
        %1688 = vmatpush2.msra.mxu0 0.0
        %1689 = vmatprep.subr.mxu0 0.0
        %1690 = vmatpush2.msra.mxu0 0.0
        %1691 = vmatprep.subr.mxu0 0.0
        %1692 = vmatpush2.msra.mxu0 0.0
        %1693 = vmatprep.subr.mxu0 0.0
        %1694 = vmatpush2.msra.mxu0 0.0
        %1695 = vmatprep.subr.mxu0 0.0
        %1696 = vmatpush2.msra.mxu0 0.0
        %1697 = vmatprep.subr.mxu0 0.0
        %1698 = vmatpush2.msra.mxu0 0.0
        %1699 = vmatprep.subr.mxu0 0.0
        %1700 = vmatpush2.msra.mxu0 0.0
        %1701 = vmatprep.subr.mxu0 0.0
        %1702 = vmatpush2.msra.mxu0 0.0
        %1703 = vmatprep.subr.mxu0 0.0
        %1704 = vmatpush2.msra.mxu0 0.0
        %1705 = vmatprep.subr.mxu0 0.0
        %1706 = vmatpush2.msra.mxu0 0.0
        %1707 = vmatprep.subr.mxu0 0.0
        %1708 = vmatpush2.msra.mxu0 0.0
        %1709 = vmatprep.mubr.f32.mxu0 0.0
        %1710 = vmatmul.mubr.f32.gmra.mxu0 %v1640
        %v1711 = vpop.f32.mrf.mxu0
        %v1712 = vadd.f32 0.0, %v1711
        %v1713 = vpop.f32.mrf.mxu0
        %v1714 = vadd.f32 0.0, %v1713
        %1715 = vmatprep.mubr.f32.mxu0 0.0
        %1716 = vmatmul.mubr.f32.gmra.mxu0 %v1643
        %v1717 = vpop.f32.mrf.mxu0
        %v1718 = vadd.f32 0.0, %v1717
        %v1719 = vpop.f32.mrf.mxu0
        %v1720 = vadd.f32 0.0, %v1719
        %1721 = vdwg.mxu0
        %v1723 = vsel %vm583, %v1614, 0
        %v1726 = vsel %vm583, %v1615, 0
        %1728 = vmatprep.subr.mxu0 0.0
        %1729 = vmatpush1.msra.mxu0 0.0
        %1730 = vmatprep.subr.mxu0 0.0
        %1731 = vmatpush1.msra.mxu0 0.0
        %1732 = vmatprep.subr.mxu0 0.0
        %1733 = vmatpush1.msra.mxu0 0.0
        %1734 = vmatprep.subr.mxu0 0.0
        %1735 = vmatpush1.msra.mxu0 0.0
        %1736 = vmatprep.subr.mxu0 0.0
        %1737 = vmatpush1.msra.mxu0 0.0
        %1738 = vmatprep.subr.mxu0 0.0
        %1739 = vmatpush1.msra.mxu0 0.0
        %1740 = vmatprep.subr.mxu0 0.0
        %1741 = vmatpush1.msra.mxu0 0.0
        %1742 = vmatprep.subr.mxu0 0.0
        %1743 = vmatpush1.msra.mxu0 0.0
        %1744 = vmatprep.subr.mxu0 0.0
        %1745 = vmatpush1.msra.mxu0 0.0
        %1746 = vmatprep.subr.mxu0 0.0
        %1747 = vmatpush1.msra.mxu0 0.0
        %1748 = vmatprep.subr.mxu0 0.0
        %1749 = vmatpush1.msra.mxu0 0.0
        %1750 = vmatprep.subr.mxu0 0.0
        %1751 = vmatpush1.msra.mxu0 0.0
        %1752 = vmatprep.subr.mxu0 0.0
        %1753 = vmatpush1.msra.mxu0 0.0
        %1754 = vmatprep.subr.mxu0 0.0
        %1755 = vmatpush1.msra.mxu0 0.0
        %1756 = vmatprep.subr.mxu0 %v1613
        %1757 = vmatpush1.msra.mxu0 %v1612
        %1758 = vmatprep.subr.mxu0 %v1611
        %1759 = vmatpush1.msra.mxu0 %v1610
        %1760 = vmatprep.subr.mxu0 0.0
        %1761 = vmatpush2.msra.mxu0 0.0
        %1762 = vmatprep.subr.mxu0 0.0
        %1763 = vmatpush2.msra.mxu0 0.0
        %1764 = vmatprep.subr.mxu0 0.0
        %1765 = vmatpush2.msra.mxu0 0.0
        %1766 = vmatprep.subr.mxu0 0.0
        %1767 = vmatpush2.msra.mxu0 0.0
        %1768 = vmatprep.subr.mxu0 0.0
        %1769 = vmatpush2.msra.mxu0 0.0
        %1770 = vmatprep.subr.mxu0 0.0
        %1771 = vmatpush2.msra.mxu0 0.0
        %1772 = vmatprep.subr.mxu0 0.0
        %1773 = vmatpush2.msra.mxu0 0.0
        %1774 = vmatprep.subr.mxu0 0.0
        %1775 = vmatpush2.msra.mxu0 0.0
        %1776 = vmatprep.subr.mxu0 0.0
        %1777 = vmatpush2.msra.mxu0 0.0
        %1778 = vmatprep.subr.mxu0 0.0
        %1779 = vmatpush2.msra.mxu0 0.0
        %1780 = vmatprep.subr.mxu0 0.0
        %1781 = vmatpush2.msra.mxu0 0.0
        %1782 = vmatprep.subr.mxu0 0.0
        %1783 = vmatpush2.msra.mxu0 0.0
        %1784 = vmatprep.subr.mxu0 0.0
        %1785 = vmatpush2.msra.mxu0 0.0
        %1786 = vmatprep.subr.mxu0 0.0
        %1787 = vmatpush2.msra.mxu0 0.0
        %1788 = vmatprep.subr.mxu0 0.0
        %1789 = vmatpush2.msra.mxu0 0.0
        %1790 = vmatprep.subr.mxu0 0.0
        %1791 = vmatpush2.msra.mxu0 0.0
        %1792 = vmatprep.mubr.f32.mxu0 0.0
        %1793 = vmatmul.mubr.f32.gmra.mxu0 %v1723
        %v1794 = vpop.f32.mrf.mxu0
        %v1795 = vadd.f32 %v1712, %v1794
        %v1796 = vpop.f32.mrf.mxu0
        %v1797 = vadd.f32 %v1714, %v1796
        %1798 = vmatprep.mubr.f32.mxu0 0.0
        %1799 = vmatmul.mubr.f32.gmra.mxu0 %v1726
        %v1800 = vpop.f32.mrf.mxu0
        %v1801 = vadd.f32 %v1718, %v1800
        %v1802 = vpop.f32.mrf.mxu0
        %v1803 = vadd.f32 %v1720, %v1802
        %1804 = vdwg.mxu0
        %1805 = vrot.lane.b32.xlu0 %v1578, 15
        %v1806 = vpop.permute.xlu0 %1805
        %1807 = vrot.lane.b32.xlu0 %v1579, 15
        %v1808 = vpop.permute.xlu0 %1807
        %1809 = vrot.lane.b32.xlu0 %v1580, 15
        %v1810 = vpop.permute.xlu0 %1809
        %1811 = vrot.lane.b32.xlu0 %v1581, 15
        %v1812 = vpop.permute.xlu0 %1811
        %1813 = vrot.lane.b32.xlu0 %v1582, 15
        %v1814 = vpop.permute.xlu0 %1813
        %1815 = vrot.lane.b32.xlu0 %v1583, 15
        %v1816 = vpop.permute.xlu0 %1815
        %v1817 = vsel %vm774, %v1806, %v1808
        %v1818 = vsel %vm774, %v1808, %v1810
        %v1819 = vsel %vm774, %v1812, %v1814
        %v1820 = vsel %vm774, %v1814, %v1816
        %v1825 = vsel %vm760, %v1817, 0.0
        %v1826 = vsel %vm761, %v1818, 0.0
        %v1827 = vsel %vm760, %v1819, 0.0
        %v1828 = vsel %vm761, %v1820, 0.0
        %s1829 = scalar_lea.vmem [#allocation7], 32
        %v1830 = vld [vmem:[%s1829] sm:$0xff]
        %v1831 = vld [vmem:[%s1829 + $0x8] sm:$0xff]
        %v1833 = vsel %vm583, %v1830, 0
        %v1836 = vsel %vm583, %v1831, 0
        %1838 = vmatprep.subr.mxu0 0.0
        %1839 = vmatpush1.msra.mxu0 0.0
        %1840 = vmatprep.subr.mxu0 0.0
        %1841 = vmatpush1.msra.mxu0 0.0
        %1842 = vmatprep.subr.mxu0 0.0
        %1843 = vmatpush1.msra.mxu0 0.0
        %1844 = vmatprep.subr.mxu0 0.0
        %1845 = vmatpush1.msra.mxu0 0.0
        %1846 = vmatprep.subr.mxu0 0.0
        %1847 = vmatpush1.msra.mxu0 0.0
        %1848 = vmatprep.subr.mxu0 0.0
        %1849 = vmatpush1.msra.mxu0 0.0
        %1850 = vmatprep.subr.mxu0 0.0
        %1851 = vmatpush1.msra.mxu0 0.0
        %1852 = vmatprep.subr.mxu0 0.0
        %1853 = vmatpush1.msra.mxu0 0.0
        %1854 = vmatprep.subr.mxu0 0.0
        %1855 = vmatpush1.msra.mxu0 0.0
        %1856 = vmatprep.subr.mxu0 0.0
        %1857 = vmatpush1.msra.mxu0 0.0
        %1858 = vmatprep.subr.mxu0 0.0
        %1859 = vmatpush1.msra.mxu0 0.0
        %1860 = vmatprep.subr.mxu0 0.0
        %1861 = vmatpush1.msra.mxu0 0.0
        %1862 = vmatprep.subr.mxu0 0.0
        %1863 = vmatpush1.msra.mxu0 0.0
        %1864 = vmatprep.subr.mxu0 0.0
        %1865 = vmatpush1.msra.mxu0 0.0
        %1866 = vmatprep.subr.mxu0 %v1828
        %1867 = vmatpush1.msra.mxu0 %v1827
        %1868 = vmatprep.subr.mxu0 %v1826
        %1869 = vmatpush1.msra.mxu0 %v1825
        %1870 = vmatprep.subr.mxu0 0.0
        %1871 = vmatpush2.msra.mxu0 0.0
        %1872 = vmatprep.subr.mxu0 0.0
        %1873 = vmatpush2.msra.mxu0 0.0
        %1874 = vmatprep.subr.mxu0 0.0
        %1875 = vmatpush2.msra.mxu0 0.0
        %1876 = vmatprep.subr.mxu0 0.0
        %1877 = vmatpush2.msra.mxu0 0.0
        %1878 = vmatprep.subr.mxu0 0.0
        %1879 = vmatpush2.msra.mxu0 0.0
        %1880 = vmatprep.subr.mxu0 0.0
        %1881 = vmatpush2.msra.mxu0 0.0
        %1882 = vmatprep.subr.mxu0 0.0
        %1883 = vmatpush2.msra.mxu0 0.0
        %1884 = vmatprep.subr.mxu0 0.0
        %1885 = vmatpush2.msra.mxu0 0.0
        %1886 = vmatprep.subr.mxu0 0.0
        %1887 = vmatpush2.msra.mxu0 0.0
        %1888 = vmatprep.subr.mxu0 0.0
        %1889 = vmatpush2.msra.mxu0 0.0
        %1890 = vmatprep.subr.mxu0 0.0
        %1891 = vmatpush2.msra.mxu0 0.0
        %1892 = vmatprep.subr.mxu0 0.0
        %1893 = vmatpush2.msra.mxu0 0.0
        %1894 = vmatprep.subr.mxu0 0.0
        %1895 = vmatpush2.msra.mxu0 0.0
        %1896 = vmatprep.subr.mxu0 0.0
        %1897 = vmatpush2.msra.mxu0 0.0
        %1898 = vmatprep.subr.mxu0 0.0
        %1899 = vmatpush2.msra.mxu0 0.0
        %1900 = vmatprep.subr.mxu0 0.0
        %1901 = vmatpush2.msra.mxu0 0.0
        %1902 = vmatprep.mubr.f32.mxu0 0.0
        %1903 = vmatmul.mubr.f32.gmra.mxu0 %v1833
        %v1904 = vpop.f32.mrf.mxu0
        %v1905 = vadd.f32 0.0, %v1904
        %v1906 = vpop.f32.mrf.mxu0
        %v1907 = vadd.f32 0.0, %v1906
        %1908 = vmatprep.mubr.f32.mxu0 0.0
        %1909 = vmatmul.mubr.f32.gmra.mxu0 %v1836
        %v1910 = vpop.f32.mrf.mxu0
        %v1911 = vadd.f32 0.0, %v1910
        %v1912 = vpop.f32.mrf.mxu0
        %v1913 = vadd.f32 0.0, %v1912
        %1914 = vdwg.mxu0
        %v1915 = vadd.f32 %v1795, %v1905
        %v1916 = vadd.f32 %v1797, %v1907
        %v1917 = vadd.f32 %v1801, %v1911
        %v1918 = vadd.f32 %v1803, %v1913
        %1919 = vrot.lane.b32.xlu0 %v1578, 1
        %v1920 = vpop.permute.xlu0 %1919
        %1921 = vrot.lane.b32.xlu0 %v1579, 1
        %v1922 = vpop.permute.xlu0 %1921
        %1923 = vrot.lane.b32.xlu0 %v1580, 1
        %v1924 = vpop.permute.xlu0 %1923
        %1925 = vrot.lane.b32.xlu0 %v1581, 1
        %v1926 = vpop.permute.xlu0 %1925
        %1927 = vrot.lane.b32.xlu0 %v1582, 1
        %v1928 = vpop.permute.xlu0 %1927
        %1929 = vrot.lane.b32.xlu0 %v1583, 1
        %v1930 = vpop.permute.xlu0 %1929
        %v1931 = vsel %vm889, %v1920, %v1922
        %v1932 = vsel %vm889, %v1922, %v1924
        %v1933 = vsel %vm889, %v1926, %v1928
        %v1934 = vsel %vm889, %v1928, %v1930
        %v1939 = vsel %vm533, %v1931, 0.0
        %v1940 = vsel %vm534, %v1932, 0.0
        %v1941 = vsel %vm533, %v1933, 0.0
        %v1942 = vsel %vm534, %v1934, 0.0
        %s1943 = scalar_lea.vmem [#allocation7], 48
        %v1944 = vld [vmem:[%s1943] sm:$0xff]
        %v1945 = vld [vmem:[%s1943 + $0x8] sm:$0xff]
        %v1947 = vsel %vm583, %v1944, 0
        %v1950 = vsel %vm583, %v1945, 0
        %1952 = vmatprep.subr.mxu0 0.0
        %1953 = vmatpush1.msra.mxu0 0.0
        %1954 = vmatprep.subr.mxu0 0.0
        %1955 = vmatpush1.msra.mxu0 0.0
        %1956 = vmatprep.subr.mxu0 0.0
        %1957 = vmatpush1.msra.mxu0 0.0
        %1958 = vmatprep.subr.mxu0 0.0
        %1959 = vmatpush1.msra.mxu0 0.0
        %1960 = vmatprep.subr.mxu0 0.0
        %1961 = vmatpush1.msra.mxu0 0.0
        %1962 = vmatprep.subr.mxu0 0.0
        %1963 = vmatpush1.msra.mxu0 0.0
        %1964 = vmatprep.subr.mxu0 0.0
        %1965 = vmatpush1.msra.mxu0 0.0
        %1966 = vmatprep.subr.mxu0 0.0
        %1967 = vmatpush1.msra.mxu0 0.0
        %1968 = vmatprep.subr.mxu0 0.0
        %1969 = vmatpush1.msra.mxu0 0.0
        %1970 = vmatprep.subr.mxu0 0.0
        %1971 = vmatpush1.msra.mxu0 0.0
        %1972 = vmatprep.subr.mxu0 0.0
        %1973 = vmatpush1.msra.mxu0 0.0
        %1974 = vmatprep.subr.mxu0 0.0
        %1975 = vmatpush1.msra.mxu0 0.0
        %1976 = vmatprep.subr.mxu0 0.0
        %1977 = vmatpush1.msra.mxu0 0.0
        %1978 = vmatprep.subr.mxu0 0.0
        %1979 = vmatpush1.msra.mxu0 0.0
        %1980 = vmatprep.subr.mxu0 %v1942
        %1981 = vmatpush1.msra.mxu0 %v1941
        %1982 = vmatprep.subr.mxu0 %v1940
        %1983 = vmatpush1.msra.mxu0 %v1939
        %1984 = vmatprep.subr.mxu0 0.0
        %1985 = vmatpush2.msra.mxu0 0.0
        %1986 = vmatprep.subr.mxu0 0.0
        %1987 = vmatpush2.msra.mxu0 0.0
        %1988 = vmatprep.subr.mxu0 0.0
        %1989 = vmatpush2.msra.mxu0 0.0
        %1990 = vmatprep.subr.mxu0 0.0
        %1991 = vmatpush2.msra.mxu0 0.0
        %1992 = vmatprep.subr.mxu0 0.0
        %1993 = vmatpush2.msra.mxu0 0.0
        %1994 = vmatprep.subr.mxu0 0.0
        %1995 = vmatpush2.msra.mxu0 0.0
        %1996 = vmatprep.subr.mxu0 0.0
        %1997 = vmatpush2.msra.mxu0 0.0
        %1998 = vmatprep.subr.mxu0 0.0
        %1999 = vmatpush2.msra.mxu0 0.0
        %2000 = vmatprep.subr.mxu0 0.0
        %2001 = vmatpush2.msra.mxu0 0.0
        %2002 = vmatprep.subr.mxu0 0.0
        %2003 = vmatpush2.msra.mxu0 0.0
        %2004 = vmatprep.subr.mxu0 0.0
        %2005 = vmatpush2.msra.mxu0 0.0
        %2006 = vmatprep.subr.mxu0 0.0
        %2007 = vmatpush2.msra.mxu0 0.0
        %2008 = vmatprep.subr.mxu0 0.0
        %2009 = vmatpush2.msra.mxu0 0.0
        %2010 = vmatprep.subr.mxu0 0.0
        %2011 = vmatpush2.msra.mxu0 0.0
        %2012 = vmatprep.subr.mxu0 0.0
        %2013 = vmatpush2.msra.mxu0 0.0
        %2014 = vmatprep.subr.mxu0 0.0
        %2015 = vmatpush2.msra.mxu0 0.0
        %2016 = vmatprep.mubr.f32.mxu0 0.0
        %2017 = vmatmul.mubr.f32.gmra.mxu0 %v1947
        %v2018 = vpop.f32.mrf.mxu0
        %v2019 = vadd.f32 0.0, %v2018
        %v2020 = vpop.f32.mrf.mxu0
        %v2021 = vadd.f32 0.0, %v2020
        %2022 = vmatprep.mubr.f32.mxu0 0.0
        %2023 = vmatmul.mubr.f32.gmra.mxu0 %v1950
        %v2024 = vpop.f32.mrf.mxu0
        %v2025 = vadd.f32 0.0, %v2024
        %v2026 = vpop.f32.mrf.mxu0
        %v2027 = vadd.f32 0.0, %v2026
        %2028 = vdwg.mxu0
        %v2029 = vadd.f32 %v1915, %v2019
        %v2030 = vadd.f32 %v1916, %v2021
        %v2031 = vadd.f32 %v1917, %v2025
        %v2032 = vadd.f32 %v1918, %v2027
        %s2033 = scalar_lea.vmem [#allocation7], 64
        %v2034 = vld [vmem:[%s2033] sm:$0xff]
        %v2035 = vld [vmem:[%s2033 + $0x8] sm:$0xff]
        %v2037 = vsel %vm583, %v2034, 0
        %v2040 = vsel %vm583, %v2035, 0
        %2042 = vmatprep.subr.mxu0 0.0
        %2043 = vmatpush1.msra.mxu0 0.0
        %2044 = vmatprep.subr.mxu0 0.0
        %2045 = vmatpush1.msra.mxu0 0.0
        %2046 = vmatprep.subr.mxu0 0.0
        %2047 = vmatpush1.msra.mxu0 0.0
        %2048 = vmatprep.subr.mxu0 0.0
        %2049 = vmatpush1.msra.mxu0 0.0
        %2050 = vmatprep.subr.mxu0 0.0
        %2051 = vmatpush1.msra.mxu0 0.0
        %2052 = vmatprep.subr.mxu0 0.0
        %2053 = vmatpush1.msra.mxu0 0.0
        %2054 = vmatprep.subr.mxu0 0.0
        %2055 = vmatpush1.msra.mxu0 0.0
        %2056 = vmatprep.subr.mxu0 0.0
        %2057 = vmatpush1.msra.mxu0 0.0
        %2058 = vmatprep.subr.mxu0 0.0
        %2059 = vmatpush1.msra.mxu0 0.0
        %2060 = vmatprep.subr.mxu0 0.0
        %2061 = vmatpush1.msra.mxu0 0.0
        %2062 = vmatprep.subr.mxu0 0.0
        %2063 = vmatpush1.msra.mxu0 0.0
        %2064 = vmatprep.subr.mxu0 0.0
        %2065 = vmatpush1.msra.mxu0 0.0
        %2066 = vmatprep.subr.mxu0 0.0
        %2067 = vmatpush1.msra.mxu0 0.0
        %2068 = vmatprep.subr.mxu0 0.0
        %2069 = vmatpush1.msra.mxu0 0.0
        %2070 = vmatprep.subr.mxu0 %v1573
        %2071 = vmatpush1.msra.mxu0 %v1572
        %2072 = vmatprep.subr.mxu0 %v1571
        %2073 = vmatpush1.msra.mxu0 %v1570
        %2074 = vmatprep.subr.mxu0 0.0
        %2075 = vmatpush2.msra.mxu0 0.0
        %2076 = vmatprep.subr.mxu0 0.0
        %2077 = vmatpush2.msra.mxu0 0.0
        %2078 = vmatprep.subr.mxu0 0.0
        %2079 = vmatpush2.msra.mxu0 0.0
        %2080 = vmatprep.subr.mxu0 0.0
        %2081 = vmatpush2.msra.mxu0 0.0
        %2082 = vmatprep.subr.mxu0 0.0
        %2083 = vmatpush2.msra.mxu0 0.0
        %2084 = vmatprep.subr.mxu0 0.0
        %2085 = vmatpush2.msra.mxu0 0.0
        %2086 = vmatprep.subr.mxu0 0.0
        %2087 = vmatpush2.msra.mxu0 0.0
        %2088 = vmatprep.subr.mxu0 0.0
        %2089 = vmatpush2.msra.mxu0 0.0
        %2090 = vmatprep.subr.mxu0 0.0
        %2091 = vmatpush2.msra.mxu0 0.0
        %2092 = vmatprep.subr.mxu0 0.0
        %2093 = vmatpush2.msra.mxu0 0.0
        %2094 = vmatprep.subr.mxu0 0.0
        %2095 = vmatpush2.msra.mxu0 0.0
        %2096 = vmatprep.subr.mxu0 0.0
        %2097 = vmatpush2.msra.mxu0 0.0
        %2098 = vmatprep.subr.mxu0 0.0
        %2099 = vmatpush2.msra.mxu0 0.0
        %2100 = vmatprep.subr.mxu0 0.0
        %2101 = vmatpush2.msra.mxu0 0.0
        %2102 = vmatprep.subr.mxu0 0.0
        %2103 = vmatpush2.msra.mxu0 0.0
        %2104 = vmatprep.subr.mxu0 0.0
        %2105 = vmatpush2.msra.mxu0 0.0
        %2106 = vmatprep.mubr.f32.mxu0 0.0
        %2107 = vmatmul.mubr.f32.gmra.mxu0 %v2037
        %v2108 = vpop.f32.mrf.mxu0
        %v2109 = vadd.f32 0.0, %v2108
        %v2110 = vpop.f32.mrf.mxu0
        %v2111 = vadd.f32 0.0, %v2110
        %2112 = vmatprep.mubr.f32.mxu0 0.0
        %2113 = vmatmul.mubr.f32.gmra.mxu0 %v2040
        %v2114 = vpop.f32.mrf.mxu0
        %v2115 = vadd.f32 0.0, %v2114
        %v2116 = vpop.f32.mrf.mxu0
        %v2117 = vadd.f32 0.0, %v2116
        %2118 = vdwg.mxu0
        %v2119 = vadd.f32 %v2029, %v2109
        %v2120 = vadd.f32 %v2030, %v2111
        %v2121 = vadd.f32 %v2031, %v2115
        %v2122 = vadd.f32 %v2032, %v2117
        %v2123 = vld [vmem:[#allocation2 + $0x8] sm:$0xff]
        %v2124 = vld [vmem:[#allocation2 + $0x10] sm:$0xff]
        %v2125 = vld [vmem:[#allocation2 + $0x18] sm:$0xff]
        %v2126 = vld [vmem:[#allocation2 + $0x28] sm:$0xff]
        %v2127 = vld [vmem:[#allocation2 + $0x30] sm:$0xff]
        %v2128 = vld [vmem:[#allocation2 + $0x38] sm:$0xff]
        %2135 = vrot.lane.b32.xlu0 %v2123, 127
        %v2136 = vpop.permute.xlu0 %2135
        %2137 = vrot.lane.b32.xlu0 %v2124, 127
        %v2138 = vpop.permute.xlu0 %2137
        %2139 = vrot.lane.b32.xlu0 %v2125, 127
        %v2140 = vpop.permute.xlu0 %2139
        %2141 = vrot.lane.b32.xlu0 %v2126, 127
        %v2142 = vpop.permute.xlu0 %2141
        %2143 = vrot.lane.b32.xlu0 %v2127, 127
        %v2144 = vpop.permute.xlu0 %2143
        %2145 = vrot.lane.b32.xlu0 %v2128, 127
        %v2146 = vpop.permute.xlu0 %2145
        %v2147 = vsel %vm1106, %v2136, %v2138
        %v2148 = vsel %vm1106, %v2138, %v2140
        %v2149 = vsel %vm1106, %v2142, %v2144
        %v2150 = vsel %vm1106, %v2144, %v2146
        %v2155 = vsel %vm760, %v2147, 0.0
        %v2156 = vsel %vm761, %v2148, 0.0
        %v2157 = vsel %vm760, %v2149, 0.0
        %v2158 = vsel %vm761, %v2150, 0.0
        %s2159 = scalar_lea.vmem [#allocation7], 80
        %v2160 = vld [vmem:[%s2159] sm:$0xff]
        %v2161 = vld [vmem:[%s2159 + $0x8] sm:$0xff]
        %v2163 = vsel %vm583, %v2160, 0
        %v2166 = vsel %vm583, %v2161, 0
        %2168 = vmatprep.subr.mxu0 0.0
        %2169 = vmatpush1.msra.mxu0 0.0
        %2170 = vmatprep.subr.mxu0 0.0
        %2171 = vmatpush1.msra.mxu0 0.0
        %2172 = vmatprep.subr.mxu0 0.0
        %2173 = vmatpush1.msra.mxu0 0.0
        %2174 = vmatprep.subr.mxu0 0.0
        %2175 = vmatpush1.msra.mxu0 0.0
        %2176 = vmatprep.subr.mxu0 0.0
        %2177 = vmatpush1.msra.mxu0 0.0
        %2178 = vmatprep.subr.mxu0 0.0
        %2179 = vmatpush1.msra.mxu0 0.0
        %2180 = vmatprep.subr.mxu0 0.0
        %2181 = vmatpush1.msra.mxu0 0.0
        %2182 = vmatprep.subr.mxu0 0.0
        %2183 = vmatpush1.msra.mxu0 0.0
        %2184 = vmatprep.subr.mxu0 0.0
        %2185 = vmatpush1.msra.mxu0 0.0
        %2186 = vmatprep.subr.mxu0 0.0
        %2187 = vmatpush1.msra.mxu0 0.0
        %2188 = vmatprep.subr.mxu0 0.0
        %2189 = vmatpush1.msra.mxu0 0.0
        %2190 = vmatprep.subr.mxu0 0.0
        %2191 = vmatpush1.msra.mxu0 0.0
        %2192 = vmatprep.subr.mxu0 0.0
        %2193 = vmatpush1.msra.mxu0 0.0
        %2194 = vmatprep.subr.mxu0 0.0
        %2195 = vmatpush1.msra.mxu0 0.0
        %2196 = vmatprep.subr.mxu0 %v2158
        %2197 = vmatpush1.msra.mxu0 %v2157
        %2198 = vmatprep.subr.mxu0 %v2156
        %2199 = vmatpush1.msra.mxu0 %v2155
        %2200 = vmatprep.subr.mxu0 0.0
        %2201 = vmatpush2.msra.mxu0 0.0
        %2202 = vmatprep.subr.mxu0 0.0
        %2203 = vmatpush2.msra.mxu0 0.0
        %2204 = vmatprep.subr.mxu0 0.0
        %2205 = vmatpush2.msra.mxu0 0.0
        %2206 = vmatprep.subr.mxu0 0.0
        %2207 = vmatpush2.msra.mxu0 0.0
        %2208 = vmatprep.subr.mxu0 0.0
        %2209 = vmatpush2.msra.mxu0 0.0
        %2210 = vmatprep.subr.mxu0 0.0
        %2211 = vmatpush2.msra.mxu0 0.0
        %2212 = vmatprep.subr.mxu0 0.0
        %2213 = vmatpush2.msra.mxu0 0.0
        %2214 = vmatprep.subr.mxu0 0.0
        %2215 = vmatpush2.msra.mxu0 0.0
        %2216 = vmatprep.subr.mxu0 0.0
        %2217 = vmatpush2.msra.mxu0 0.0
        %2218 = vmatprep.subr.mxu0 0.0
        %2219 = vmatpush2.msra.mxu0 0.0
        %2220 = vmatprep.subr.mxu0 0.0
        %2221 = vmatpush2.msra.mxu0 0.0
        %2222 = vmatprep.subr.mxu0 0.0
        %2223 = vmatpush2.msra.mxu0 0.0
        %2224 = vmatprep.subr.mxu0 0.0
        %2225 = vmatpush2.msra.mxu0 0.0
        %2226 = vmatprep.subr.mxu0 0.0
        %2227 = vmatpush2.msra.mxu0 0.0
        %2228 = vmatprep.subr.mxu0 0.0
        %2229 = vmatpush2.msra.mxu0 0.0
        %2230 = vmatprep.subr.mxu0 0.0
        %2231 = vmatpush2.msra.mxu0 0.0
        %2232 = vmatprep.mubr.f32.mxu0 0.0
        %2233 = vmatmul.mubr.f32.gmra.mxu0 %v2163
        %v2234 = vpop.f32.mrf.mxu0
        %v2235 = vadd.f32 0.0, %v2234
        %v2236 = vpop.f32.mrf.mxu0
        %v2237 = vadd.f32 0.0, %v2236
        %2238 = vmatprep.mubr.f32.mxu0 0.0
        %2239 = vmatmul.mubr.f32.gmra.mxu0 %v2166
        %v2240 = vpop.f32.mrf.mxu0
        %v2241 = vadd.f32 0.0, %v2240
        %v2242 = vpop.f32.mrf.mxu0
        %v2243 = vadd.f32 0.0, %v2242
        %2244 = vdwg.mxu0
        %v2245 = vadd.f32 %v2119, %v2235
        %v2246 = vadd.f32 %v2120, %v2237
        %v2247 = vadd.f32 %v2121, %v2241
        %v2248 = vadd.f32 %v2122, %v2243
        %2249 = vrot.lane.b32.xlu0 %v2123, 113
        %v2250 = vpop.permute.xlu0 %2249
        %2251 = vrot.lane.b32.xlu0 %v2124, 113
        %v2252 = vpop.permute.xlu0 %2251
        %2253 = vrot.lane.b32.xlu0 %v2125, 113
        %v2254 = vpop.permute.xlu0 %2253
        %2255 = vrot.lane.b32.xlu0 %v2126, 113
        %v2256 = vpop.permute.xlu0 %2255
        %2257 = vrot.lane.b32.xlu0 %v2127, 113
        %v2258 = vpop.permute.xlu0 %2257
        %2259 = vrot.lane.b32.xlu0 %v2128, 113
        %v2260 = vpop.permute.xlu0 %2259
        %v2261 = vsel %vm1221, %v2250, %v2252
        %v2262 = vsel %vm1221, %v2252, %v2254
        %v2263 = vsel %vm1221, %v2256, %v2258
        %v2264 = vsel %vm1221, %v2258, %v2260
        %v2269 = vsel %vm533, %v2261, 0.0
        %v2270 = vsel %vm534, %v2262, 0.0
        %v2271 = vsel %vm533, %v2263, 0.0
        %v2272 = vsel %vm534, %v2264, 0.0
        %s2273 = scalar_lea.vmem [#allocation7], 96
        %v2274 = vld [vmem:[%s2273] sm:$0xff]
        %v2275 = vld [vmem:[%s2273 + $0x8] sm:$0xff]
        %v2277 = vsel %vm583, %v2274, 0
        %v2280 = vsel %vm583, %v2275, 0
        %2282 = vmatprep.subr.mxu0 0.0
        %2283 = vmatpush1.msra.mxu0 0.0
        %2284 = vmatprep.subr.mxu0 0.0
        %2285 = vmatpush1.msra.mxu0 0.0
        %2286 = vmatprep.subr.mxu0 0.0
        %2287 = vmatpush1.msra.mxu0 0.0
        %2288 = vmatprep.subr.mxu0 0.0
        %2289 = vmatpush1.msra.mxu0 0.0
        %2290 = vmatprep.subr.mxu0 0.0
        %2291 = vmatpush1.msra.mxu0 0.0
        %2292 = vmatprep.subr.mxu0 0.0
        %2293 = vmatpush1.msra.mxu0 0.0
        %2294 = vmatprep.subr.mxu0 0.0
        %2295 = vmatpush1.msra.mxu0 0.0
        %2296 = vmatprep.subr.mxu0 0.0
        %2297 = vmatpush1.msra.mxu0 0.0
        %2298 = vmatprep.subr.mxu0 0.0
        %2299 = vmatpush1.msra.mxu0 0.0
        %2300 = vmatprep.subr.mxu0 0.0
        %2301 = vmatpush1.msra.mxu0 0.0
        %2302 = vmatprep.subr.mxu0 0.0
        %2303 = vmatpush1.msra.mxu0 0.0
        %2304 = vmatprep.subr.mxu0 0.0
        %2305 = vmatpush1.msra.mxu0 0.0
        %2306 = vmatprep.subr.mxu0 0.0
        %2307 = vmatpush1.msra.mxu0 0.0
        %2308 = vmatprep.subr.mxu0 0.0
        %2309 = vmatpush1.msra.mxu0 0.0
        %2310 = vmatprep.subr.mxu0 %v2272
        %2311 = vmatpush1.msra.mxu0 %v2271
        %2312 = vmatprep.subr.mxu0 %v2270
        %2313 = vmatpush1.msra.mxu0 %v2269
        %2314 = vmatprep.subr.mxu0 0.0
        %2315 = vmatpush2.msra.mxu0 0.0
        %2316 = vmatprep.subr.mxu0 0.0
        %2317 = vmatpush2.msra.mxu0 0.0
        %2318 = vmatprep.subr.mxu0 0.0
        %2319 = vmatpush2.msra.mxu0 0.0
        %2320 = vmatprep.subr.mxu0 0.0
        %2321 = vmatpush2.msra.mxu0 0.0
        %2322 = vmatprep.subr.mxu0 0.0
        %2323 = vmatpush2.msra.mxu0 0.0
        %2324 = vmatprep.subr.mxu0 0.0
        %2325 = vmatpush2.msra.mxu0 0.0
        %2326 = vmatprep.subr.mxu0 0.0
        %2327 = vmatpush2.msra.mxu0 0.0
        %2328 = vmatprep.subr.mxu0 0.0
        %2329 = vmatpush2.msra.mxu0 0.0
        %2330 = vmatprep.subr.mxu0 0.0
        %2331 = vmatpush2.msra.mxu0 0.0
        %2332 = vmatprep.subr.mxu0 0.0
        %2333 = vmatpush2.msra.mxu0 0.0
        %2334 = vmatprep.subr.mxu0 0.0
        %2335 = vmatpush2.msra.mxu0 0.0
        %2336 = vmatprep.subr.mxu0 0.0
        %2337 = vmatpush2.msra.mxu0 0.0
        %2338 = vmatprep.subr.mxu0 0.0
        %2339 = vmatpush2.msra.mxu0 0.0
        %2340 = vmatprep.subr.mxu0 0.0
        %2341 = vmatpush2.msra.mxu0 0.0
        %2342 = vmatprep.subr.mxu0 0.0
        %2343 = vmatpush2.msra.mxu0 0.0
        %2344 = vmatprep.subr.mxu0 0.0
        %2345 = vmatpush2.msra.mxu0 0.0
        %2346 = vmatprep.mubr.f32.mxu0 0.0
        %2347 = vmatmul.mubr.f32.gmra.mxu0 %v2277
        %v2348 = vpop.f32.mrf.mxu0
        %v2349 = vadd.f32 0.0, %v2348
        %v2350 = vpop.f32.mrf.mxu0
        %v2351 = vadd.f32 0.0, %v2350
        %2352 = vmatprep.mubr.f32.mxu0 0.0
        %2353 = vmatmul.mubr.f32.gmra.mxu0 %v2280
        %v2354 = vpop.f32.mrf.mxu0
        %v2355 = vadd.f32 0.0, %v2354
        %v2356 = vpop.f32.mrf.mxu0
        %v2357 = vadd.f32 0.0, %v2356
        %2358 = vdwg.mxu0
        %v2359 = vadd.f32 %v2245, %v2349
        %v2360 = vadd.f32 %v2246, %v2351
        %v2361 = vadd.f32 %v2247, %v2355
        %v2362 = vadd.f32 %v2248, %v2357
        %s2363 = scalar_lea.vmem [#allocation7], 112
        %v2364 = vld [vmem:[%s2363] sm:$0xff]
        %v2365 = vld [vmem:[%s2363 + $0x8] sm:$0xff]
        %2366 = vrot.lane.b32.xlu0 %v2123, 112
        %v2367 = vpop.permute.xlu0 %2366
        %2368 = vrot.lane.b32.xlu0 %v2124, 112
        %v2369 = vpop.permute.xlu0 %2368
        %2370 = vrot.lane.b32.xlu0 %v2125, 112
        %v2371 = vpop.permute.xlu0 %2370
        %2372 = vrot.lane.b32.xlu0 %v2126, 112
        %v2373 = vpop.permute.xlu0 %2372
        %2374 = vrot.lane.b32.xlu0 %v2127, 112
        %v2375 = vpop.permute.xlu0 %2374
        %2376 = vrot.lane.b32.xlu0 %v2128, 112
        %v2377 = vpop.permute.xlu0 %2376
        %v2378 = vsel %vm1339, %v2367, %v2369
        %v2379 = vsel %vm1339, %v2369, %v2371
        %v2380 = vsel %vm1339, %v2373, %v2375
        %v2381 = vsel %vm1339, %v2375, %v2377
        %v2387 = vsel %vm583, %v2364, 0
        %v2390 = vsel %vm583, %v2365, 0
        %2392 = vmatprep.subr.mxu0 0.0
        %2393 = vmatpush1.msra.mxu0 0.0
        %2394 = vmatprep.subr.mxu0 0.0
        %2395 = vmatpush1.msra.mxu0 0.0
        %2396 = vmatprep.subr.mxu0 0.0
        %2397 = vmatpush1.msra.mxu0 0.0
        %2398 = vmatprep.subr.mxu0 0.0
        %2399 = vmatpush1.msra.mxu0 0.0
        %2400 = vmatprep.subr.mxu0 0.0
        %2401 = vmatpush1.msra.mxu0 0.0
        %2402 = vmatprep.subr.mxu0 0.0
        %2403 = vmatpush1.msra.mxu0 0.0
        %2404 = vmatprep.subr.mxu0 0.0
        %2405 = vmatpush1.msra.mxu0 0.0
        %2406 = vmatprep.subr.mxu0 0.0
        %2407 = vmatpush1.msra.mxu0 0.0
        %2408 = vmatprep.subr.mxu0 0.0
        %2409 = vmatpush1.msra.mxu0 0.0
        %2410 = vmatprep.subr.mxu0 0.0
        %2411 = vmatpush1.msra.mxu0 0.0
        %2412 = vmatprep.subr.mxu0 0.0
        %2413 = vmatpush1.msra.mxu0 0.0
        %2414 = vmatprep.subr.mxu0 0.0
        %2415 = vmatpush1.msra.mxu0 0.0
        %2416 = vmatprep.subr.mxu0 0.0
        %2417 = vmatpush1.msra.mxu0 0.0
        %2418 = vmatprep.subr.mxu0 0.0
        %2419 = vmatpush1.msra.mxu0 0.0
        %2420 = vmatprep.subr.mxu0 %v2381
        %2421 = vmatpush1.msra.mxu0 %v2380
        %2422 = vmatprep.subr.mxu0 %v2379
        %2423 = vmatpush1.msra.mxu0 %v2378
        %2424 = vmatprep.subr.mxu0 0.0
        %2425 = vmatpush2.msra.mxu0 0.0
        %2426 = vmatprep.subr.mxu0 0.0
        %2427 = vmatpush2.msra.mxu0 0.0
        %2428 = vmatprep.subr.mxu0 0.0
        %2429 = vmatpush2.msra.mxu0 0.0
        %2430 = vmatprep.subr.mxu0 0.0
        %2431 = vmatpush2.msra.mxu0 0.0
        %2432 = vmatprep.subr.mxu0 0.0
        %2433 = vmatpush2.msra.mxu0 0.0
        %2434 = vmatprep.subr.mxu0 0.0
        %2435 = vmatpush2.msra.mxu0 0.0
        %2436 = vmatprep.subr.mxu0 0.0
        %2437 = vmatpush2.msra.mxu0 0.0
        %2438 = vmatprep.subr.mxu0 0.0
        %2439 = vmatpush2.msra.mxu0 0.0
        %2440 = vmatprep.subr.mxu0 0.0
        %2441 = vmatpush2.msra.mxu0 0.0
        %2442 = vmatprep.subr.mxu0 0.0
        %2443 = vmatpush2.msra.mxu0 0.0
        %2444 = vmatprep.subr.mxu0 0.0
        %2445 = vmatpush2.msra.mxu0 0.0
        %2446 = vmatprep.subr.mxu0 0.0
        %2447 = vmatpush2.msra.mxu0 0.0
        %2448 = vmatprep.subr.mxu0 0.0
        %2449 = vmatpush2.msra.mxu0 0.0
        %2450 = vmatprep.subr.mxu0 0.0
        %2451 = vmatpush2.msra.mxu0 0.0
        %2452 = vmatprep.subr.mxu0 0.0
        %2453 = vmatpush2.msra.mxu0 0.0
        %2454 = vmatprep.subr.mxu0 0.0
        %2455 = vmatpush2.msra.mxu0 0.0
        %2456 = vmatprep.mubr.f32.mxu0 0.0
        %2457 = vmatmul.mubr.f32.gmra.mxu0 %v2387
        %v2458 = vpop.f32.mrf.mxu0
        %v2459 = vadd.f32 0.0, %v2458
        %v2460 = vpop.f32.mrf.mxu0
        %v2461 = vadd.f32 0.0, %v2460
        %2462 = vmatprep.mubr.f32.mxu0 0.0
        %2463 = vmatmul.mubr.f32.gmra.mxu0 %v2390
        %v2464 = vpop.f32.mrf.mxu0
        %v2465 = vadd.f32 0.0, %v2464
        %v2466 = vpop.f32.mrf.mxu0
        %v2467 = vadd.f32 0.0, %v2466
        %2468 = vdwg.mxu0
        %v2469 = vadd.f32 %v2359, %v2459
        %v2470 = vadd.f32 %v2360, %v2461
        %v2471 = vadd.f32 %v2361, %v2465
        %v2472 = vadd.f32 %v2362, %v2467
        %2473 = vrot.lane.b32.xlu0 %v2123, 111
        %v2474 = vpop.permute.xlu0 %2473
        %2475 = vrot.lane.b32.xlu0 %v2124, 111
        %v2476 = vpop.permute.xlu0 %2475
        %2477 = vrot.lane.b32.xlu0 %v2125, 111
        %v2478 = vpop.permute.xlu0 %2477
        %2479 = vrot.lane.b32.xlu0 %v2126, 111
        %v2480 = vpop.permute.xlu0 %2479
        %2481 = vrot.lane.b32.xlu0 %v2127, 111
        %v2482 = vpop.permute.xlu0 %2481
        %2483 = vrot.lane.b32.xlu0 %v2128, 111
        %v2484 = vpop.permute.xlu0 %2483
        %v2485 = vsel %vm1447, %v2474, %v2476
        %v2486 = vsel %vm1447, %v2476, %v2478
        %v2487 = vsel %vm1447, %v2480, %v2482
        %v2488 = vsel %vm1447, %v2482, %v2484
        %v2493 = vsel %vm760, %v2485, 0.0
        %v2494 = vsel %vm761, %v2486, 0.0
        %v2495 = vsel %vm760, %v2487, 0.0
        %v2496 = vsel %vm761, %v2488, 0.0
        %s2497 = scalar_lea.vmem [#allocation7], 128
        %v2498 = vld [vmem:[%s2497] sm:$0xff]
        %v2499 = vld [vmem:[%s2497 + $0x8] sm:$0xff]
        %v2501 = vsel %vm583, %v2498, 0
        %v2504 = vsel %vm583, %v2499, 0
        %2506 = vmatprep.subr.mxu0 0.0
        %2507 = vmatpush1.msra.mxu0 0.0
        %2508 = vmatprep.subr.mxu0 0.0
        %2509 = vmatpush1.msra.mxu0 0.0
        %2510 = vmatprep.subr.mxu0 0.0
        %2511 = vmatpush1.msra.mxu0 0.0
        %2512 = vmatprep.subr.mxu0 0.0
        %2513 = vmatpush1.msra.mxu0 0.0
        %2514 = vmatprep.subr.mxu0 0.0
        %2515 = vmatpush1.msra.mxu0 0.0
        %2516 = vmatprep.subr.mxu0 0.0
        %2517 = vmatpush1.msra.mxu0 0.0
        %2518 = vmatprep.subr.mxu0 0.0
        %2519 = vmatpush1.msra.mxu0 0.0
        %2520 = vmatprep.subr.mxu0 0.0
        %2521 = vmatpush1.msra.mxu0 0.0
        %2522 = vmatprep.subr.mxu0 0.0
        %2523 = vmatpush1.msra.mxu0 0.0
        %2524 = vmatprep.subr.mxu0 0.0
        %2525 = vmatpush1.msra.mxu0 0.0
        %2526 = vmatprep.subr.mxu0 0.0
        %2527 = vmatpush1.msra.mxu0 0.0
        %2528 = vmatprep.subr.mxu0 0.0
        %2529 = vmatpush1.msra.mxu0 0.0
        %2530 = vmatprep.subr.mxu0 0.0
        %2531 = vmatpush1.msra.mxu0 0.0
        %2532 = vmatprep.subr.mxu0 0.0
        %2533 = vmatpush1.msra.mxu0 0.0
        %2534 = vmatprep.subr.mxu0 %v2496
        %2535 = vmatpush1.msra.mxu0 %v2495
        %2536 = vmatprep.subr.mxu0 %v2494
        %2537 = vmatpush1.msra.mxu0 %v2493
        %2538 = vmatprep.subr.mxu0 0.0
        %2539 = vmatpush2.msra.mxu0 0.0
        %2540 = vmatprep.subr.mxu0 0.0
        %2541 = vmatpush2.msra.mxu0 0.0
        %2542 = vmatprep.subr.mxu0 0.0
        %2543 = vmatpush2.msra.mxu0 0.0
        %2544 = vmatprep.subr.mxu0 0.0
        %2545 = vmatpush2.msra.mxu0 0.0
        %2546 = vmatprep.subr.mxu0 0.0
        %2547 = vmatpush2.msra.mxu0 0.0
        %2548 = vmatprep.subr.mxu0 0.0
        %2549 = vmatpush2.msra.mxu0 0.0
        %2550 = vmatprep.subr.mxu0 0.0
        %2551 = vmatpush2.msra.mxu0 0.0
        %2552 = vmatprep.subr.mxu0 0.0
        %2553 = vmatpush2.msra.mxu0 0.0
        %2554 = vmatprep.subr.mxu0 0.0
        %2555 = vmatpush2.msra.mxu0 0.0
        %2556 = vmatprep.subr.mxu0 0.0
        %2557 = vmatpush2.msra.mxu0 0.0
        %2558 = vmatprep.subr.mxu0 0.0
        %2559 = vmatpush2.msra.mxu0 0.0
        %2560 = vmatprep.subr.mxu0 0.0
        %2561 = vmatpush2.msra.mxu0 0.0
        %2562 = vmatprep.subr.mxu0 0.0
        %2563 = vmatpush2.msra.mxu0 0.0
        %2564 = vmatprep.subr.mxu0 0.0
        %2565 = vmatpush2.msra.mxu0 0.0
        %2566 = vmatprep.subr.mxu0 0.0
        %2567 = vmatpush2.msra.mxu0 0.0
        %2568 = vmatprep.subr.mxu0 0.0
        %2569 = vmatpush2.msra.mxu0 0.0
        %2570 = vmatprep.mubr.f32.mxu0 0.0
        %2571 = vmatmul.mubr.f32.gmra.mxu0 %v2501
        %v2572 = vpop.f32.mrf.mxu0
        %v2573 = vadd.f32 0.0, %v2572
        %v2574 = vpop.f32.mrf.mxu0
        %v2575 = vadd.f32 0.0, %v2574
        %2576 = vmatprep.mubr.f32.mxu0 0.0
        %2577 = vmatmul.mubr.f32.gmra.mxu0 %v2504
        %v2578 = vpop.f32.mrf.mxu0
        %v2579 = vadd.f32 0.0, %v2578
        %v2580 = vpop.f32.mrf.mxu0
        %v2581 = vadd.f32 0.0, %v2580
        %2582 = vdwg.mxu0
        %v2583 = vadd.f32 %v2469, %v2573
        %v2584 = vadd.f32 %v2470, %v2575
        %v2585 = vadd.f32 %v2471, %v2579
        %v2586 = vadd.f32 %v2472, %v2581
        %v2587 = vld [vmem:[%s4] sm:$0xff]
        %v2588 = vld [vmem:[%s4 + $0x8] sm:$0xff]
        %2590 = vset.pattern.permute.xlu0 0
        %2591 = vperm.xlu0 %2590, %v2587
        %v2592 = vpop.permute.xlu0 %2591
        %2595 = vset.pattern.permute.xlu0 0
        %2596 = vperm.xlu0 %2595, %v2588
        %v2597 = vpop.permute.xlu0 %2596
        %v2599 = vadd.f32 %v2583, %v2592
        %v2600 = vadd.f32 %v2584, %v2592
        %v2601 = vadd.f32 %v2585, %v2597
        %v2602 = vadd.f32 %v2586, %v2597
        %v2603 = vadd.f32 %v2599, %v2600
        %2604 = vadd.xlane.f32.xlu0 %v2603
        %v2605 = vpop.xlane.xlu0 %2604
        %v2606 = vadd.f32 %v2601, %v2602
        %2607 = vadd.xlane.f32.xlu0 %v2606
        %v2608 = vpop.xlane.xlu0 %2607
        %v2609 = vmul.f32 %v2605, 0.00390625
        %v2610 = vmul.f32 %v2608, 0.00390625
        %v2611 = vld [vmem:[%s5] sm:$0x3]
        %v2612 = vld [vmem:[%s6] sm:$0x3]
        %v2614 = vsel %vm583, %v2611, 0
        %2616 = vmatprep.subr.mxu0 0.0
        %2617 = vmatpush1.msra.mxu0 0.0
        %2618 = vmatprep.subr.mxu0 0.0
        %2619 = vmatpush1.msra.mxu0 0.0
        %2620 = vmatprep.subr.mxu0 0.0
        %2621 = vmatpush1.msra.mxu0 0.0
        %2622 = vmatprep.subr.mxu0 0.0
        %2623 = vmatpush1.msra.mxu0 0.0
        %2624 = vmatprep.subr.mxu0 0.0
        %2625 = vmatpush1.msra.mxu0 0.0
        %2626 = vmatprep.subr.mxu0 0.0
        %2627 = vmatpush1.msra.mxu0 0.0
        %2628 = vmatprep.subr.mxu0 0.0
        %2629 = vmatpush1.msra.mxu0 0.0
        %2630 = vmatprep.subr.mxu0 0.0
        %2631 = vmatpush1.msra.mxu0 0.0
        %2632 = vmatprep.subr.mxu0 0.0
        %2633 = vmatpush1.msra.mxu0 0.0
        %2634 = vmatprep.subr.mxu0 0.0
        %2635 = vmatpush1.msra.mxu0 0.0
        %2636 = vmatprep.subr.mxu0 0.0
        %2637 = vmatpush1.msra.mxu0 0.0
        %2638 = vmatprep.subr.mxu0 0.0
        %2639 = vmatpush1.msra.mxu0 0.0
        %2640 = vmatprep.subr.mxu0 0.0
        %2641 = vmatpush1.msra.mxu0 0.0
        %2642 = vmatprep.subr.mxu0 0.0
        %2643 = vmatpush1.msra.mxu0 0.0
        %2644 = vmatprep.subr.mxu0 0.0
        %2645 = vmatpush1.msra.mxu0 %v2610
        %2646 = vmatprep.subr.mxu0 0.0
        %2647 = vmatpush1.msra.mxu0 %v2609
        %2648 = vmatprep.subr.mxu0 0.0
        %2649 = vmatpush2.msra.mxu0 0.0
        %2650 = vmatprep.subr.mxu0 0.0
        %2651 = vmatpush2.msra.mxu0 0.0
        %2652 = vmatprep.subr.mxu0 0.0
        %2653 = vmatpush2.msra.mxu0 0.0
        %2654 = vmatprep.subr.mxu0 0.0
        %2655 = vmatpush2.msra.mxu0 0.0
        %2656 = vmatprep.subr.mxu0 0.0
        %2657 = vmatpush2.msra.mxu0 0.0
        %2658 = vmatprep.subr.mxu0 0.0
        %2659 = vmatpush2.msra.mxu0 0.0
        %2660 = vmatprep.subr.mxu0 0.0
        %2661 = vmatpush2.msra.mxu0 0.0
        %2662 = vmatprep.subr.mxu0 0.0
        %2663 = vmatpush2.msra.mxu0 0.0
        %2664 = vmatprep.subr.mxu0 0.0
        %2665 = vmatpush2.msra.mxu0 0.0
        %2666 = vmatprep.subr.mxu0 0.0
        %2667 = vmatpush2.msra.mxu0 0.0
        %2668 = vmatprep.subr.mxu0 0.0
        %2669 = vmatpush2.msra.mxu0 0.0
        %2670 = vmatprep.subr.mxu0 0.0
        %2671 = vmatpush2.msra.mxu0 0.0
        %2672 = vmatprep.subr.mxu0 0.0
        %2673 = vmatpush2.msra.mxu0 0.0
        %2674 = vmatprep.subr.mxu0 0.0
        %2675 = vmatpush2.msra.mxu0 0.0
        %2676 = vmatprep.subr.mxu0 0.0
        %2677 = vmatpush2.msra.mxu0 0.0
        %2678 = vmatprep.subr.mxu0 0.0
        %2679 = vmatpush2.msra.mxu0 0.0
        %2680 = vmatprep.mubr.f32.mxu0 0.0
        %2681 = vmatmul.mubr.f32.gmra.mxu0 %v2614
        %v2682 = vpop.f32.mrf.mxu0
        %v2683 = vadd.f32 %v2612, %v2682
        %v2684 = vpop.f32.mrf.mxu0
        %2685 = vdwg.mxu0
        %v2686 = vmax.f32 %v2683, 0.0
        %v2687 = vld [vmem:[%s7] sm:$0xff]
        %v2688 = vld [vmem:[%s7 + $0x8] sm:$0xff]
        %v2689 = vld [vmem:[%s8] sm:$0xff]
        %v2690 = vld [vmem:[%s8 + $0x8] sm:$0xff]
        %vm2691 = vcmask 15360
        %v2693 = vsel %vm2691, %v2687, 0
        %v2696 = vsel %vm2691, %v2688, 0
        %vm2698 = vcmask 1041408
        %v2700 = vsel %vm2698, %v2686, 0
        %2702 = vmatprep.subr.mxu0 0.0
        %2703 = vmatpush1.msra.mxu0 0.0
        %2704 = vmatprep.subr.mxu0 0.0
        %2705 = vmatpush1.msra.mxu0 0.0
        %2706 = vmatprep.subr.mxu0 0.0
        %2707 = vmatpush1.msra.mxu0 0.0
        %2708 = vmatprep.subr.mxu0 0.0
        %2709 = vmatpush1.msra.mxu0 0.0
        %2710 = vmatprep.subr.mxu0 0.0
        %2711 = vmatpush1.msra.mxu0 0.0
        %2712 = vmatprep.subr.mxu0 0.0
        %2713 = vmatpush1.msra.mxu0 0.0
        %2714 = vmatprep.subr.mxu0 0.0
        %2715 = vmatpush1.msra.mxu0 0.0
        %2716 = vmatprep.subr.mxu0 0.0
        %2717 = vmatpush1.msra.mxu0 0.0
        %2718 = vmatprep.subr.mxu0 0.0
        %2719 = vmatpush1.msra.mxu0 0.0
        %2720 = vmatprep.subr.mxu0 0.0
        %2721 = vmatpush1.msra.mxu0 0.0
        %2722 = vmatprep.subr.mxu0 0.0
        %2723 = vmatpush1.msra.mxu0 0.0
        %2724 = vmatprep.subr.mxu0 0.0
        %2725 = vmatpush1.msra.mxu0 0.0
        %2726 = vmatprep.subr.mxu0 0.0
        %2727 = vmatpush1.msra.mxu0 0.0
        %2728 = vmatprep.subr.mxu0 0.0
        %2729 = vmatpush1.msra.mxu0 0.0
        %2730 = vmatprep.subr.mxu0 0.0
        %2731 = vmatpush1.msra.mxu0 0.0
        %2732 = vmatprep.subr.mxu0 0.0
        %2733 = vmatpush1.msra.mxu0 %v2700
        %2734 = vmatprep.subr.mxu0 0.0
        %2735 = vmatpush2.msra.mxu0 0.0
        %2736 = vmatprep.subr.mxu0 0.0
        %2737 = vmatpush2.msra.mxu0 0.0
        %2738 = vmatprep.subr.mxu0 0.0
        %2739 = vmatpush2.msra.mxu0 0.0
        %2740 = vmatprep.subr.mxu0 0.0
        %2741 = vmatpush2.msra.mxu0 0.0
        %2742 = vmatprep.subr.mxu0 0.0
        %2743 = vmatpush2.msra.mxu0 0.0
        %2744 = vmatprep.subr.mxu0 0.0
        %2745 = vmatpush2.msra.mxu0 0.0
        %2746 = vmatprep.subr.mxu0 0.0
        %2747 = vmatpush2.msra.mxu0 0.0
        %2748 = vmatprep.subr.mxu0 0.0
        %2749 = vmatpush2.msra.mxu0 0.0
        %2750 = vmatprep.subr.mxu0 0.0
        %2751 = vmatpush2.msra.mxu0 0.0
        %2752 = vmatprep.subr.mxu0 0.0
        %2753 = vmatpush2.msra.mxu0 0.0
        %2754 = vmatprep.subr.mxu0 0.0
        %2755 = vmatpush2.msra.mxu0 0.0
        %2756 = vmatprep.subr.mxu0 0.0
        %2757 = vmatpush2.msra.mxu0 0.0
        %2758 = vmatprep.subr.mxu0 0.0
        %2759 = vmatpush2.msra.mxu0 0.0
        %2760 = vmatprep.subr.mxu0 0.0
        %2761 = vmatpush2.msra.mxu0 0.0
        %2762 = vmatprep.subr.mxu0 0.0
        %2763 = vmatpush2.msra.mxu0 0.0
        %2764 = vmatprep.subr.mxu0 0.0
        %2765 = vmatpush2.msra.mxu0 0.0
        %2766 = vmatprep.mubr.f32.mxu0 0.0
        %2767 = vmatmul.mubr.f32.gmra.mxu0 %v2693
        %v2768 = vpop.f32.mrf.mxu0
        %v2769 = vadd.f32 %v2689, %v2768
        %v2770 = vpop.f32.mrf.mxu0
        %2771 = vmatprep.mubr.f32.mxu0 0.0
        %2772 = vmatmul.mubr.f32.gmra.mxu0 %v2696
        %v2773 = vpop.f32.mrf.mxu0
        %v2774 = vadd.f32 %v2690, %v2773
        %v2775 = vpop.f32.mrf.mxu0
        %2776 = vdwg.mxu0
        %v2777 = vxor.u32 %v2769, 2147483648
        %v2778 = vxor.u32 %v2774, 2147483648
        %v2779 = vmul.f32 %v2777, 1.442695
        %v2780 = vpow.pop %v2779
        %v2781 = vmul.f32 %v2778, 1.442695
        %v2782 = vpow.pop %v2781
        %v2783 = vadd.f32 %v2780, 1.0
        %v2784 = vadd.f32 %v2782, 1.0
        %v2785 = vrcp.pop %v2783
        %v2786 = vmul.f32 1.0, %v2785
        %v2787 = vrcp.pop %v2784
        %v2788 = vmul.f32 1.0, %v2787
        %2790 = vset.pattern.permute.xlu0 0
        %2791 = vperm.xlu0 %2790, %v2786
        %v2792 = vpop.permute.xlu0 %2791
        %2795 = vset.pattern.permute.xlu0 0
        %2796 = vperm.xlu0 %2795, %v2788
        %v2797 = vpop.permute.xlu0 %2796
        %v2799 = vmul.f32 %v2599, %v2792
        %v2800 = vmul.f32 %v2600, %v2792
        %v2801 = vmul.f32 %v2601, %v2797
        %v2802 = vmul.f32 %v2602, %v2797
        %v2803 = vld [vmem:[%s9] sm:$0x3]
        %v2804 = vld [vmem:[%s10] sm:$0x3]
        %2806 = vset.pattern.permute.xlu0 0
        %2807 = vperm.xlu0 %2806, %v2804
        %v2808 = vpop.permute.xlu0 %2807
        %v2811 = vsel %vm583, %v2803, 0
        %2813 = vmatprep.subr.mxu0 0.0
        %2814 = vmatpush1.msra.mxu0 0.0
        %2815 = vmatprep.subr.mxu0 0.0
        %2816 = vmatpush1.msra.mxu0 0.0
        %2817 = vmatprep.subr.mxu0 0.0
        %2818 = vmatpush1.msra.mxu0 0.0
        %2819 = vmatprep.subr.mxu0 0.0
        %2820 = vmatpush1.msra.mxu0 0.0
        %2821 = vmatprep.subr.mxu0 0.0
        %2822 = vmatpush1.msra.mxu0 0.0
        %2823 = vmatprep.subr.mxu0 0.0
        %2824 = vmatpush1.msra.mxu0 0.0
        %2825 = vmatprep.subr.mxu0 0.0
        %2826 = vmatpush1.msra.mxu0 0.0
        %2827 = vmatprep.subr.mxu0 0.0
        %2828 = vmatpush1.msra.mxu0 0.0
        %2829 = vmatprep.subr.mxu0 0.0
        %2830 = vmatpush1.msra.mxu0 0.0
        %2831 = vmatprep.subr.mxu0 0.0
        %2832 = vmatpush1.msra.mxu0 0.0
        %2833 = vmatprep.subr.mxu0 0.0
        %2834 = vmatpush1.msra.mxu0 0.0
        %2835 = vmatprep.subr.mxu0 0.0
        %2836 = vmatpush1.msra.mxu0 0.0
        %2837 = vmatprep.subr.mxu0 0.0
        %2838 = vmatpush1.msra.mxu0 0.0
        %2839 = vmatprep.subr.mxu0 0.0
        %2840 = vmatpush1.msra.mxu0 0.0
        %2841 = vmatprep.subr.mxu0 %v2802
        %2842 = vmatpush1.msra.mxu0 %v2801
        %2843 = vmatprep.subr.mxu0 %v2800
        %2844 = vmatpush1.msra.mxu0 %v2799
        %2845 = vmatprep.subr.mxu0 0.0
        %2846 = vmatpush2.msra.mxu0 0.0
        %2847 = vmatprep.subr.mxu0 0.0
        %2848 = vmatpush2.msra.mxu0 0.0
        %2849 = vmatprep.subr.mxu0 0.0
        %2850 = vmatpush2.msra.mxu0 0.0
        %2851 = vmatprep.subr.mxu0 0.0
        %2852 = vmatpush2.msra.mxu0 0.0
        %2853 = vmatprep.subr.mxu0 0.0
        %2854 = vmatpush2.msra.mxu0 0.0
        %2855 = vmatprep.subr.mxu0 0.0
        %2856 = vmatpush2.msra.mxu0 0.0
        %2857 = vmatprep.subr.mxu0 0.0
        %2858 = vmatpush2.msra.mxu0 0.0
        %2859 = vmatprep.subr.mxu0 0.0
        %2860 = vmatpush2.msra.mxu0 0.0
        %2861 = vmatprep.subr.mxu0 0.0
        %2862 = vmatpush2.msra.mxu0 0.0
        %2863 = vmatprep.subr.mxu0 0.0
        %2864 = vmatpush2.msra.mxu0 0.0
        %2865 = vmatprep.subr.mxu0 0.0
        %2866 = vmatpush2.msra.mxu0 0.0
        %2867 = vmatprep.subr.mxu0 0.0
        %2868 = vmatpush2.msra.mxu0 0.0
        %2869 = vmatprep.subr.mxu0 0.0
        %2870 = vmatpush2.msra.mxu0 0.0
        %2871 = vmatprep.subr.mxu0 0.0
        %2872 = vmatpush2.msra.mxu0 0.0
        %2873 = vmatprep.subr.mxu0 0.0
        %2874 = vmatpush2.msra.mxu0 0.0
        %2875 = vmatprep.subr.mxu0 0.0
        %2876 = vmatpush2.msra.mxu0 0.0
        %2877 = vmatprep.mubr.f32.mxu0 0.0
        %2878 = vmatmul.mubr.f32.gmra.mxu0 %v2811
        %v2879 = vpop.f32.mrf.mxu0
        %v2880 = vadd.f32 %v2808, %v2879
        %v2881 = vpop.f32.mrf.mxu0
        %v2882 = vadd.f32 %v2808, %v2881
        %2883 = vdwg.mxu0
        %v2884 = vmax.f32 %v2880, 0.0
        %v2885 = vmax.f32 %v2882, 0.0
        %v2886 = vld [vmem:[%s11] sm:$0x3]
        %2888 = vset.pattern.permute.xlu0 0
        %2889 = vperm.xlu0 %2888, %v2886
        %v2890 = vpop.permute.xlu0 %2889
        %v2892 = vmul.f32 %v2884, %v2890
        %v2893 = vmul.f32 %v2885, %v2890
        %v2894 = vsel %vm2698, %v2892, 0.0
        %v2895 = vrot.slane %v2894, 4
        %v2896 = vadd.f32 %v2894, %v2895
        %v2897 = vrot.slane %v2896, 2
        %v2898 = vadd.f32 %v2896, %v2897
        %v2899 = vrot.slane %v2898, 1
        %v2900 = vadd.f32 %v2898, %v2899
        %v2901 = vsel %vm2698, %v2893, 0.0
        %v2902 = vrot.slane %v2901, 4
        %v2903 = vadd.f32 %v2901, %v2902
        %v2904 = vrot.slane %v2903, 2
        %v2905 = vadd.f32 %v2903, %v2904
        %v2906 = vrot.slane %v2905, 1
        %v2907 = vadd.f32 %v2905, %v2906
        %s2908 = sld [smem:[#allocation3]]
        %v2909 = vstv %s2908
        %v2910 = vadd.f32 %v2900, %v2909
        %v2911 = vadd.f32 %v2907, %v2909
        %v2912 = vxor.u32 %v2910, 2147483648
        %v2913 = vxor.u32 %v2911, 2147483648
        %v2914 = vmul.f32 %v2912, 1.442695
        %v2915 = vpow.pop %v2914
        %v2916 = vmul.f32 %v2913, 1.442695
        %v2917 = vpow.pop %v2916
        %v2918 = vadd.f32 %v2915, 1.0
        %v2919 = vadd.f32 %v2917, 1.0
        %v2920 = vrcp.pop %v2918
        %v2921 = vmul.f32 1.0, %v2920
        %v2922 = vrcp.pop %v2919
        %v2923 = vmul.f32 1.0, %v2922
        %v2924 = vmul.f32 %v2799, %v2921
        %v2925 = vmul.f32 %v2800, %v2923
        %v2926 = vmul.f32 %v2801, %v2921
        %v2927 = vmul.f32 %v2802, %v2923
        %v2928 = vadd.f32 %v2924, %v470
        %v2929 = vadd.f32 %v2925, %v471
        %v2930 = vadd.f32 %v2926, %v472
        %v2931 = vadd.f32 %v2927, %v473
        %2932 = vst [vmem:[%s464] sm:$0xff] %v2928
        %2933 = vst [vmem:[%s464 + $0x8] sm:$0xff] %v2929
        %2934 = vst [vmem:[%s464 + $0x10] sm:$0xff] %v2930
        %2935 = vst [vmem:[%s464 + $0x18] sm:$0xff] %v2931
        %s2936 = sand.u32 %s316, 1
        %s2937 = scalar_lea.sflag [#allocation6], %s2936
        %s2938 = sand.u32 %s316, 1
        %s2939 = smul.addr %s2938, 32
        %s2940 = scalar_lea.vmem [#allocation9], %s2939
        // Predicated region
        $region81: #{tpu_custom_call.1} parent=71 // pred_check
          %p2941 = pneg %p326
        $region82: #{tpu_custom_call.1} parent=71 // pred_check_branch
          %2943 = sbr.rel (%p2941) target = $region84
        $region83: #{tpu_custom_call.1} parent=71 // pred_region
          %s2945 = ssub.s32 512, 512
          %2946 = vsyncadd %s2937, %s2945
          %s2947 = smul.addr %s30, 4
          %s2948 = smul.addr %s2947, 128
          %s2949 = scalar_lea.hbm %s13, %s2948
          %s2950 = sshll.u32 %s2940, 4
          %s2951 = int_to_ptr.vmem [resolvable:$true] %s2950
          %2956 = dma.vmem_to_hbm [thread:$0]  %s2951, 512, %s2949, %s2937, 256, 256, 16
        $region84: #{tpu_custom_call.1} parent=71 // pred_fallthru
          _
      $region72: #{tpu_custom_call.1} parent=5 // pred_fallthru
        _
      %p2957 = scmp.le.s32.totalorder 2, %s25
      // Predicated region
      $region85: #{tpu_custom_call.1} parent=5 // pred_check
        %p2958 = pneg %p2957
      $region86: #{tpu_custom_call.1} parent=5 // pred_check_branch
        %2960 = sbr.rel (%p2958) target = $region88
      $region87: #{tpu_custom_call.1} parent=5 // pred_region
        %s2961 = ssub.s32 %s25, 2
        // Predicated region
        $region89: #{tpu_custom_call.1} parent=87 // pred_check
          %p2962 = pneg %p332
        $region90: #{tpu_custom_call.1} parent=87 // pred_check_branch
          %2964 = sbr.rel (%p2962) target = $region92
        $region91: #{tpu_custom_call.1} parent=87 // pred_region
          %s2965 = sand.u32 %s317, 1
          %s2966 = scalar_lea.sflag [#allocation6], %s2965
          %s2967 = sand.u32 %s317, 1
          %s2968 = smul.addr %s2967, 32
          %s2969 = scalar_lea.vmem [#allocation9], %s2968
          %2970 = dma.done %s2966, 512
        $region92: #{tpu_custom_call.1} parent=87 // pred_fallthru
          _
      $region88: #{tpu_custom_call.1} parent=5 // pred_fallthru
        _
    $region6: #{tpu_custom_call.1} parent=1 // loop_footer
      %s29 = sadd.s32 1, %s25
    $region7: #{tpu_custom_call.1} parent=1 // loop_footer_branch
      %24 = sbr.rel target = $region3
    $region8: #{tpu_custom_call.1} parent=1 // loop_exit
      _
    %2971 = vsyncpa [#allocation5], 1
    %s2972 = scalar_lea.sflag [#allocation5], 1
    %2973 = vsyncpa %s2972, 1
    %2974 = vsyncpa [#allocation8], 1
    %2975 = vsyncpa [#allocation6], 1
    %s2976 = scalar_lea.sflag [#allocation6], 1
    %2977 = vsyncpa %s2976, 1

</llo_original>
